<compile_context>
chip_gen: v6e
topology: v6e:2x2x1
jax: 0.10.0
libtpu: 0.0.40
codegen_flags: <defaults>
</compile_context>

<pallas_src>
import functools

import jax
import jax.numpy as jnp
from jax.experimental import pallas as pl
from jax.experimental.pallas import tpu as pltpu

NEG_SLOPE = 0.01   # nn.LeakyReLU() default negative_slope
TB = 16            # batch tile (sublane axis); 16 keeps bf16 (ow, TB, C) <-> (ow*TB, C) reshapes free


# ---------------------------------------------------------------------------
# In-kernel helpers
# ---------------------------------------------------------------------------
def _conv_row(src, w_ref, bias, r, *, ow, cin, tb):
    """One 3x3 / stride-2 / pad-1 conv output row as a single folded-K MXU matmul.

    src   : ref (2*oh+2, 2*ow+2, tb, cin) bf16   zero-padded input (HBM block or VMEM scratch)
    w_ref : ref (9*cin, cout)             bf16   folded contraction dim, (kh, kw, cin) order
    bias  : (1, cout) f32
    r     : output row index (static or traced)
    returns (ow*tb, cout) f32, bias + LeakyReLU applied.
    """
    chunks = []
    for kh in range(3):
        xrow = src[2 * r + kh]                       # (2*ow+2, tb, cin)
        xr = xrow.reshape(ow + 1, 2, tb, cin)        # split W by column parity (leading-dim reshape)
        chunks.append(xr[0:ow, 0])                   # tap kw=0 -> padded cols 2c
        chunks.append(xr[0:ow, 1])                   # tap kw=1 -> padded cols 2c+1
        chunks.append(xr[1:ow + 1, 0])               # tap kw=2 -> padded cols 2c+2
    lhs = jnp.concatenate(chunks, axis=-1)           # (ow, tb, 9*cin), matches weight row order
    acc = jnp.dot(lhs.reshape(ow * tb, 9 * cin), w_ref[...],
                  preferred_element_type=jnp.float32)
    acc = acc + bias
    return jnp.where(acc >= 0.0, acc, NEG_SLOPE * acc)


def _conv_to_padded_scratch(src, dst, w_ref, b_ref, *, oh, ow, cin, cout, tb):
    """Conv + LeakyReLU; output written into `dst` already in the next layer's
    1-px zero-padded layout (oh+2, ow+2, tb, cout)."""
    # Zero the 1-px halo (interior rows are fully overwritten below).
    zrow = jnp.zeros((ow + 2, tb, cout), dst.dtype)
    dst[0] = zrow
    dst[oh + 1] = zrow
    zcol = jnp.zeros((oh + 2, 1, tb, cout), dst.dtype)
    dst[:, 0:1] = zcol
    dst[:, ow + 1:ow + 2] = zcol

    bias = b_ref[...]

    def row(r, carry):
        acc = _conv_row(src, w_ref, bias, r, ow=ow, cin=cin, tb=tb)
        dst[r + 1, 1:ow + 1] = acc.reshape(ow, tb, cout).astype(dst.dtype)
        return carry

    jax.lax.fori_loop(0, oh, row, 0)


def _conv_fc_epilogue(src, w_ref, b_ref, wfc_ref, bfc_ref, o_ref, *, oh, ow, cin, cout, tb):
    """conv3 + LeakyReLU with the final Linear(feat -> 1) fused; oh == 4 so the loop is unrolled."""
    bias = b_ref[...]
    fc = jnp.zeros((tb, 1), jnp.float32)
    for r in range(oh):
        acc = _conv_row(src, w_ref, bias, r, ow=ow, cin=cin, tb=tb)   # (ow*tb, cout) f32
        v = acc.reshape(ow, tb, cout)
        prod = v * wfc_ref[r]                                         # (ow, 1, cout) bcast over tb
        fc = fc + jnp.sum(jnp.sum(prod, axis=2, keepdims=True), axis=0)
    o_ref[...] = (fc + bfc_ref[...]).astype(o_ref.dtype)


def _disc_fused_kernel(x_ref, w1_ref, b1_ref, w2_ref, b2_ref, w3_ref, b3_ref,
                       wfc_ref, bfc_ref, o_ref, a1_ref, a2_ref, *, tb):
    """Whole discriminator for one batch tile of TB images.

    x_ref  : (H+2, W+2, TB, 3)   bf16  zero-padded input
    a1_ref : (H/2+2, W/2+2, TB, C1) bf16 VMEM scratch (L1 activation, padded)
    a2_ref : (H/4+2, W/4+2, TB, C2) bf16 VMEM scratch (L2 activation, padded)
    o_ref  : (TB, 1) f32
    """
    cin = x_ref.shape[3]
    c1 = a1_ref.shape[3]
    c2 = a2_ref.shape[3]
    c3 = w3_ref.shape[1]
    oh1 = a1_ref.shape[0] - 2
    oh2 = a2_ref.shape[0] - 2
    oh3 = wfc_ref.shape[0]

    _conv_to_padded_scratch(x_ref, a1_ref, w1_ref, b1_ref,
                            oh=oh1, ow=oh1, cin=cin, cout=c1, tb=tb)
    _conv_to_padded_scratch(a1_ref, a2_ref, w2_ref, b2_ref,
                            oh=oh2, ow=oh2, cin=c1, cout=c2, tb=tb)
    _conv_fc_epilogue(a2_ref, w3_ref, b3_ref, wfc_ref, bfc_ref, o_ref,
                      oh=oh3, ow=oh3, cin=c2, cout=c3, tb=tb)


# ---------------------------------------------------------------------------
# pallas_call wrapper
# ---------------------------------------------------------------------------
def _disc_call(xt, kparams, nb):
    (w1, b1), (w2, b2), (w3, b3) = kparams["convs"]
    wfc, bfc = kparams["wfc_q"], kparams["bfc"]
    _, hp, wp, tb, cin = xt.shape
    c1, c2 = w1.shape[1], w2.shape[1]
    oh1, oh2 = (hp - 2) // 2, (hp - 2) // 4
    assert (hp - 2) // 8 == wfc.shape[0] and (wp - 2) // 8 == wfc.shape[1]

    kern = functools.partial(_disc_fused_kernel, tb=tb)
    return pl.pallas_call(
        kern,
        out_shape=jax.ShapeDtypeStruct((nb * tb, 1), jnp.float32),
        grid_spec=pltpu.PrefetchScalarGridSpec(
            num_scalar_prefetch=0,
            grid=(nb,),
            in_specs=[
                # one contiguous DMA per grid step (batch-tile-major layout)
                pl.BlockSpec((None, hp, wp, tb, cin), lambda i: (i, 0, 0, 0, 0)),
                pl.BlockSpec(w1.shape, lambda i: (0, 0)),
                pl.BlockSpec(b1.shape, lambda i: (0, 0)),
                pl.BlockSpec(w2.shape, lambda i: (0, 0)),
                pl.BlockSpec(b2.shape, lambda i: (0, 0)),
                pl.BlockSpec(w3.shape, lambda i: (0, 0)),
                pl.BlockSpec(b3.shape, lambda i: (0, 0)),
                pl.BlockSpec(wfc.shape, lambda i: (0, 0, 0, 0)),
                pl.BlockSpec(bfc.shape, lambda i: (0, 0)),
            ],
            out_specs=pl.BlockSpec((tb, 1), lambda i: (i, 0)),
            scratch_shapes=[
                pltpu.VMEM((oh1 + 2, oh1 + 2, tb, c1), jnp.bfloat16),   # L1 activation (padded)
                pltpu.VMEM((oh2 + 2, oh2 + 2, tb, c2), jnp.bfloat16),   # L2 activation (padded)
            ],
        ),
        compiler_params=pltpu.CompilerParams(
            dimension_semantics=("parallel",),
            vmem_limit_bytes=32 * 1024 * 1024,
        ),
    )(xt, w1, b1, w2, b2, w3, b3, wfc, bfc)


def simple_discriminator_forward(x_nchw, kparams):
    b, cin, h, w = x_nchw.shape
    assert h % 8 == 0 and w % 8 == 0
    bp = ((b + TB - 1) // TB) * TB
    nb = bp // TB
    # Cast to bf16 BEFORE the relayout; batch-tile-major + 1-px spatial halo so every grid step's
    # input DMA is one linear block.
    x = x_nchw.astype(jnp.bfloat16)
    x = jnp.transpose(x, (2, 3, 0, 1))                        # (H, W, B, Cin)
    x = jnp.pad(x, ((1, 1), (1, 1), (0, bp - b), (0, 0)))     # spatial halo + batch pad
    x = x.reshape(h + 2, w + 2, nb, TB, cin)
    x = jnp.transpose(x, (2, 0, 1, 3, 4))                     # (nb, H+2, W+2, TB, Cin)
    out = _disc_call(x, kparams, nb)
    return out[:b]                                            # (B, 1) f32


# ---------------------------------------------------------------------------
# One-time parameter preparation (layout only; no runtime cost)
# ---------------------------------------------------------------------------
def prepare_params(params):
    """HWIO conv weights -> (9*Cin, Cout) bf16 folded taps, biases -> (1, Cout) f32,
    FC weight permuted from NCHW-flatten order to the kernel's (h, w, c) order."""
    convs = []
    for wgt, b in params["convs"]:
        kh, kw, cin, cout = wgt.shape
        convs.append((wgt.reshape(kh * kw * cin, cout).astype(jnp.bfloat16),
                      b.reshape(1, cout).astype(jnp.float32)))
    c3 = params["convs"][-1][0].shape[-1]
    wfc = params["wfc"]                                       # (c3*4*4, 1), NCHW flatten order
    wfc_q = wfc.reshape(c3, 4, 4).transpose(1, 2, 0)[:, :, None, :].astype(jnp.float32)
    bfc = params["bfc"].reshape(1, 1).astype(jnp.float32)
    return {"convs": convs, "wfc_q": wfc_q, "bfc": bfc}


# ---------------------------------------------------------------------------
# Deterministic synthetic parameters (shapes implied by module __init__)
# ---------------------------------------------------------------------------
def init_params(key, num_out):
    ks = jax.random.split(key, 8)
    convs = []
    cin = 3
    i = 0
    for cout in (num_out, 2 * num_out, 4 * num_out):
        fan_in = 3 * 3 * cin
        w = jax.random.normal(ks[i], (3, 3, cin, cout), jnp.float32) * (0.5 / fan_in ** 0.5)
        b = jax.random.normal(ks[i + 1], (cout,), jnp.float32) * 0.05
        convs.append((w, b))
        cin = cout
        i += 2
    feat = 4 * 4 * 4 * num_out
    wfc = jax.random.normal(ks[6], (feat, 1), jnp.float32) * (1.0 / feat ** 0.5)
    bfc = jax.random.normal(ks[7], (1,), jnp.float32) * 0.05
    return {"convs": convs, "wfc": wfc, "bfc": bfc}


# ---------------------------------------------------------------------------
# Pure-JAX f32 reference (correctness check)
# ---------------------------------------------------------------------------
def ref_forward(x_nchw, params):
    y = jnp.transpose(x_nchw, (0, 2, 3, 1))
    for w, b in params["convs"]:
        y = jax.lax.conv_general_dilated(
            y, w, window_strides=(2, 2), padding=((1, 1), (1, 1)),
            dimension_numbers=("NHWC", "HWIO", "NHWC"))
        y = y + b
        y = jnp.where(y >= 0.0, y, NEG_SLOPE * y)
    B = y.shape[0]
    flat = jnp.transpose(y, (0, 3, 1, 2)).reshape(B, -1)      # NCHW .view flatten order
    return flat @ params["wfc"] + params["bfc"]


if __name__ == "__main__":
    num_out = 16                 # small, shape-consistent (module default is 64)
    key = jax.random.PRNGKey(0)
    kx, kp = jax.random.split(key)
    # Spatial must be 32x32 so three stride-2 convs give 4x4, matching Linear(4*4*4*num_out, 1)
    x = jax.random.normal(kx, (2, 3, 32, 32), jnp.float32)
    params = init_params(kp, num_out)
    kparams = prepare_params(params)

    out = jax.jit(simple_discriminator_forward)(x, kparams)
    out = jax.block_until_ready(out)

    ref = ref_forward(x, params)
    assert out.shape == (2, 1), out.shape
    if not jnp.allclose(out, ref, atol=5e-2, rtol=5e-2):
        raise AssertionError(f"mismatch vs reference: {out} vs {ref}")
    print("KERNEL_OK")
</pallas_src>

<mosaic_0001>
module attributes {stable_mosaic.version = 11 : i64} {
  func.func @_disc_fused_kernel(%arg0: i32, %arg1: memref<1x34x34x16x3xbf16, #tpu.memory_space<vmem>>, %arg2: memref<27x16xbf16, #tpu.memory_space<vmem>>, %arg3: memref<1x16xf32, #tpu.memory_space<vmem>>, %arg4: memref<144x32xbf16, #tpu.memory_space<vmem>>, %arg5: memref<1x32xf32, #tpu.memory_space<vmem>>, %arg6: memref<288x64xbf16, #tpu.memory_space<vmem>>, %arg7: memref<1x64xf32, #tpu.memory_space<vmem>>, %arg8: memref<4x4x1x64xf32, #tpu.memory_space<vmem>>, %arg9: memref<1x1xf32, #tpu.memory_space<vmem>>, %arg10: memref<16x1xf32, #tpu.memory_space<vmem>>, %arg11: memref<18x18x16x16xbf16, #tpu.memory_space<vmem>>, %arg12: memref<10x10x16x32xbf16, #tpu.memory_space<vmem>>) attributes {dimension_semantics = [#tpu.dimension_semantics<parallel>], iteration_bounds = array<i64: 1>, scalar_prefetch = 0 : i64, scratch_operands = 2 : i64, tpu.core_type = #tpu.core_type<tc>, window_params = [{transform_indices = @transform_0, window_bounds = array<i64: 1, 34, 34, 16, 3>}, {pipeline_mode = #tpu.pipeline_mode<synchronous>, transform_indices = @transform_1, window_bounds = array<i64: 27, 16>}, {pipeline_mode = #tpu.pipeline_mode<synchronous>, transform_indices = @transform_2, window_bounds = array<i64: 1, 16>}, {pipeline_mode = #tpu.pipeline_mode<synchronous>, transform_indices = @transform_3, window_bounds = array<i64: 144, 32>}, {pipeline_mode = #tpu.pipeline_mode<synchronous>, transform_indices = @transform_4, window_bounds = array<i64: 1, 32>}, {pipeline_mode = #tpu.pipeline_mode<synchronous>, transform_indices = @transform_5, window_bounds = array<i64: 288, 64>}, {pipeline_mode = #tpu.pipeline_mode<synchronous>, transform_indices = @transform_6, window_bounds = array<i64: 1, 64>}, {pipeline_mode = #tpu.pipeline_mode<synchronous>, transform_indices = @transform_7, window_bounds = array<i64: 4, 4, 1, 64>}, {pipeline_mode = #tpu.pipeline_mode<synchronous>, transform_indices = @transform_8, window_bounds = array<i64: 1, 1>}, {transform_indices = @transform_9, window_bounds = array<i64: 16, 1>}]} {
    %cst = arith.constant 0.000000e+00 : bf16
    %0 = vector.broadcast %cst : bf16 to vector<18x16x16xbf16>
    %c0 = arith.constant 0 : index
    %c0_0 = arith.constant 0 : index
    %c0_1 = arith.constant 0 : index
    %c0_2 = arith.constant 0 : index
    %1 = vector.load %arg11[%c0, %c0_0, %c0_1, %c0_2] : memref<18x18x16x16xbf16, #tpu.memory_space<vmem>>, vector<1x18x16x16xbf16>
    %2 = vector.shape_cast %1 : vector<1x18x16x16xbf16> to vector<18x16x16xbf16>
    %3 = vector.shape_cast %0 : vector<18x16x16xbf16> to vector<1x18x16x16xbf16>
    tpu.vector_store %arg11[%c0, %c0_0, %c0_1, %c0_2], %3 {strides = array<i32>} : memref<18x18x16x16xbf16, #tpu.memory_space<vmem>>, vector<1x18x16x16xbf16>,
    %c17 = arith.constant 17 : index
    %c0_3 = arith.constant 0 : index
    %c0_4 = arith.constant 0 : index
    %c0_5 = arith.constant 0 : index
    %4 = vector.load %arg11[%c17, %c0_3, %c0_4, %c0_5] : memref<18x18x16x16xbf16, #tpu.memory_space<vmem>>, vector<1x18x16x16xbf16>
    %5 = vector.shape_cast %4 : vector<1x18x16x16xbf16> to vector<18x16x16xbf16>
    %6 = vector.shape_cast %0 : vector<18x16x16xbf16> to vector<1x18x16x16xbf16>
    tpu.vector_store %arg11[%c17, %c0_3, %c0_4, %c0_5], %6 {strides = array<i32>} : memref<18x18x16x16xbf16, #tpu.memory_space<vmem>>, vector<1x18x16x16xbf16>,
    %cst_6 = arith.constant 0.000000e+00 : bf16
    %7 = vector.broadcast %cst_6 : bf16 to vector<18x1x16x16xbf16>
    %c0_7 = arith.constant 0 : index
    %c0_8 = arith.constant 0 : index
    %c0_9 = arith.constant 0 : index
    %c0_10 = arith.constant 0 : index
    %8 = vector.load %arg11[%c0_7, %c0_8, %c0_9, %c0_10] : memref<18x18x16x16xbf16, #tpu.memory_space<vmem>>, vector<18x1x16x16xbf16>
    tpu.vector_store %arg11[%c0_7, %c0_8, %c0_9, %c0_10], %7 {strides = array<i32>} : memref<18x18x16x16xbf16, #tpu.memory_space<vmem>>, vector<18x1x16x16xbf16>,
    %c0_11 = arith.constant 0 : index
    %c17_12 = arith.constant 17 : index
    %c0_13 = arith.constant 0 : index
    %c0_14 = arith.constant 0 : index
    %9 = vector.load %arg11[%c0_11, %c17_12, %c0_13, %c0_14] : memref<18x18x16x16xbf16, #tpu.memory_space<vmem>>, vector<18x1x16x16xbf16>
    tpu.vector_store %arg11[%c0_11, %c17_12, %c0_13, %c0_14], %7 {strides = array<i32>} : memref<18x18x16x16xbf16, #tpu.memory_space<vmem>>, vector<18x1x16x16xbf16>,
    %c0_15 = arith.constant 0 : index
    %c0_16 = arith.constant 0 : index
    %10 = vector.load %arg3[%c0_15, %c0_16] : memref<1x16xf32, #tpu.memory_space<vmem>>, vector<1x16xf32>
    %c0_i32 = arith.constant 0 : i32
    %c16_i32 = arith.constant 16 : i32
    %11 = arith.addi %c0_i32, %c16_i32 : i32
    %c1_i32 = arith.constant 1 : i32
    scf.for %arg13 = %c0_i32 to %11 step %c1_i32  : i32 {
      %c2_i32 = arith.constant 2 : i32
      %218 = arith.muli %c2_i32, %arg13 : i32
      %c0_i32_131 = arith.constant 0 : i32
      %219 = arith.addi %218, %c0_i32_131 : i32
      %c0_132 = arith.constant 0 : index
      %220 = arith.index_cast %219 : i32 to index
      %c0_133 = arith.constant 0 : index
      %c0_134 = arith.constant 0 : index
      %c0_135 = arith.constant 0 : index
      %221 = vector.load %arg1[%c0_132, %220, %c0_133, %c0_134, %c0_135] : memref<1x34x34x16x3xbf16, #tpu.memory_space<vmem>>, vector<1x1x34x16x3xbf16>
      %222 = vector.shape_cast %221 : vector<1x1x34x16x3xbf16> to vector<34x16x3xbf16>
      %223 = vector.shape_cast %222 : vector<34x16x3xbf16> to vector<17x2x16x3xbf16>
      %224 = vector.extract_strided_slice %223 {offsets = [0, 0, 0, 0], sizes = [16, 1, 16, 3], strides = [1, 1, 1, 1]} : vector<17x2x16x3xbf16> to vector<16x1x16x3xbf16>
      %225 = vector.shape_cast %224 : vector<16x1x16x3xbf16> to vector<16x16x3xbf16>
      %226 = vector.extract_strided_slice %223 {offsets = [0, 1, 0, 0], sizes = [16, 1, 16, 3], strides = [1, 1, 1, 1]} : vector<17x2x16x3xbf16> to vector<16x1x16x3xbf16>
      %227 = vector.shape_cast %226 : vector<16x1x16x3xbf16> to vector<16x16x3xbf16>
      %228 = vector.extract_strided_slice %223 {offsets = [1, 0, 0, 0], sizes = [16, 1, 16, 3], strides = [1, 1, 1, 1]} : vector<17x2x16x3xbf16> to vector<16x1x16x3xbf16>
      %229 = vector.shape_cast %228 : vector<16x1x16x3xbf16> to vector<16x16x3xbf16>
      %c2_i32_136 = arith.constant 2 : i32
      %230 = arith.muli %c2_i32_136, %arg13 : i32
      %c1_i32_137 = arith.constant 1 : i32
      %231 = arith.addi %230, %c1_i32_137 : i32
      %c0_138 = arith.constant 0 : index
      %232 = arith.index_cast %231 : i32 to index
      %c0_139 = arith.constant 0 : index
      %c0_140 = arith.constant 0 : index
      %c0_141 = arith.constant 0 : index
      %233 = vector.load %arg1[%c0_138, %232, %c0_139, %c0_140, %c0_141] : memref<1x34x34x16x3xbf16, #tpu.memory_space<vmem>>, vector<1x1x34x16x3xbf16>
      %234 = vector.shape_cast %233 : vector<1x1x34x16x3xbf16> to vector<34x16x3xbf16>
      %235 = vector.shape_cast %234 : vector<34x16x3xbf16> to vector<17x2x16x3xbf16>
      %236 = vector.extract_strided_slice %235 {offsets = [0, 0, 0, 0], sizes = [16, 1, 16, 3], strides = [1, 1, 1, 1]} : vector<17x2x16x3xbf16> to vector<16x1x16x3xbf16>
      %237 = vector.shape_cast %236 : vector<16x1x16x3xbf16> to vector<16x16x3xbf16>
      %238 = vector.extract_strided_slice %235 {offsets = [0, 1, 0, 0], sizes = [16, 1, 16, 3], strides = [1, 1, 1, 1]} : vector<17x2x16x3xbf16> to vector<16x1x16x3xbf16>
      %239 = vector.shape_cast %238 : vector<16x1x16x3xbf16> to vector<16x16x3xbf16>
      %240 = vector.extract_strided_slice %235 {offsets = [1, 0, 0, 0], sizes = [16, 1, 16, 3], strides = [1, 1, 1, 1]} : vector<17x2x16x3xbf16> to vector<16x1x16x3xbf16>
      %241 = vector.shape_cast %240 : vector<16x1x16x3xbf16> to vector<16x16x3xbf16>
      %c2_i32_142 = arith.constant 2 : i32
      %242 = arith.muli %c2_i32_142, %arg13 : i32
      %c2_i32_143 = arith.constant 2 : i32
      %243 = arith.addi %242, %c2_i32_143 : i32
      %c0_144 = arith.constant 0 : index
      %244 = arith.index_cast %243 : i32 to index
      %c0_145 = arith.constant 0 : index
      %c0_146 = arith.constant 0 : index
      %c0_147 = arith.constant 0 : index
      %245 = vector.load %arg1[%c0_144, %244, %c0_145, %c0_146, %c0_147] : memref<1x34x34x16x3xbf16, #tpu.memory_space<vmem>>, vector<1x1x34x16x3xbf16>
      %246 = vector.shape_cast %245 : vector<1x1x34x16x3xbf16> to vector<34x16x3xbf16>
      %247 = vector.shape_cast %246 : vector<34x16x3xbf16> to vector<17x2x16x3xbf16>
      %248 = vector.extract_strided_slice %247 {offsets = [0, 0, 0, 0], sizes = [16, 1, 16, 3], strides = [1, 1, 1, 1]} : vector<17x2x16x3xbf16> to vector<16x1x16x3xbf16>
      %249 = vector.shape_cast %248 : vector<16x1x16x3xbf16> to vector<16x16x3xbf16>
      %250 = vector.extract_strided_slice %247 {offsets = [0, 1, 0, 0], sizes = [16, 1, 16, 3], strides = [1, 1, 1, 1]} : vector<17x2x16x3xbf16> to vector<16x1x16x3xbf16>
      %251 = vector.shape_cast %250 : vector<16x1x16x3xbf16> to vector<16x16x3xbf16>
      %252 = vector.extract_strided_slice %247 {offsets = [1, 0, 0, 0], sizes = [16, 1, 16, 3], strides = [1, 1, 1, 1]} : vector<17x2x16x3xbf16> to vector<16x1x16x3xbf16>
      %253 = vector.shape_cast %252 : vector<16x1x16x3xbf16> to vector<16x16x3xbf16>
      %254 = tpu.concatenate %225, %227, %229, %237, %239, %241, %249, %251, %253 in 2 : vector<16x16x3xbf16>, vector<16x16x3xbf16>, vector<16x16x3xbf16>, vector<16x16x3xbf16>, vector<16x16x3xbf16>, vector<16x16x3xbf16>, vector<16x16x3xbf16>, vector<16x16x3xbf16>, vector<16x16x3xbf16> -> vector<16x16x27xbf16>
      %255 = vector.shape_cast %254 : vector<16x16x27xbf16> to vector<256x27xbf16>
      %c0_148 = arith.constant 0 : index
      %c0_149 = arith.constant 0 : index
      %256 = vector.load %arg2[%c0_148, %c0_149] : memref<27x16xbf16, #tpu.memory_space<vmem>>, vector<27x16xbf16>
      %cst_150 = arith.constant dense<0.000000e+00> : vector<256x16xf32>
      %257 = tpu.matmul %255, %256, %cst_150 {dimension_numbers = #tpu.dot_dimension_numbers<[1], [0], [0], [1], [0, 0, 1, 1], [], []>} : vector<256x27xbf16>, vector<27x16xbf16>, vector<256x16xf32> -> vector<256x16xf32>
      %258 = vector.broadcast %10 : vector<1x16xf32> to vector<256x16xf32>
      %259 = arith.addf %257, %258 : vector<256x16xf32>
      %cst_151 = arith.constant 0.000000e+00 : f32
      %260 = vector.broadcast %cst_151 : f32 to vector<256x16xf32>
      %261 = arith.cmpf oge, %259, %260 : vector<256x16xf32>
      %cst_152 = arith.constant 0.00999999977 : f32
      %262 = vector.broadcast %cst_152 : f32 to vector<256x16xf32>
      %263 = arith.mulf %262, %259 : vector<256x16xf32>
      %264 = arith.select %261, %259, %263 : vector<256x16xi1>, vector<256x16xf32>
      %265 = vector.shape_cast %264 : vector<256x16xf32> to vector<16x16x16xf32>
      %266 = arith.truncf %265 : vector<16x16x16xf32> to vector<16x16x16xbf16>
      %c1_i32_153 = arith.constant 1 : i32
      %267 = arith.addi %arg13, %c1_i32_153 : i32
      %268 = arith.index_cast %267 : i32 to index
      %c1_154 = arith.constant 1 : index
      %c0_155 = arith.constant 0 : index
      %c0_156 = arith.constant 0 : index
      %269 = vector.load %arg11[%268, %c1_154, %c0_155, %c0_156] : memref<18x18x16x16xbf16, #tpu.memory_space<vmem>>, vector<1x16x16x16xbf16>
      %270 = vector.shape_cast %269 : vector<1x16x16x16xbf16> to vector<16x16x16xbf16>
      %271 = vector.shape_cast %266 : vector<16x16x16xbf16> to vector<1x16x16x16xbf16>
      tpu.vector_store %arg11[%268, %c1_154, %c0_155, %c0_156], %271 {strides = array<i32>} : memref<18x18x16x16xbf16, #tpu.memory_space<vmem>>, vector<1x16x16x16xbf16>,
    }
    %c16_i32_17 = arith.constant 16 : i32
    %cst_18 = arith.constant 0.000000e+00 : bf16
    %12 = vector.broadcast %cst_18 : bf16 to vector<10x16x32xbf16>
    %c0_19 = arith.constant 0 : index
    %c0_20 = arith.constant 0 : index
    %c0_21 = arith.constant 0 : index
    %c0_22 = arith.constant 0 : index
    %13 = vector.load %arg12[%c0_19, %c0_20, %c0_21, %c0_22] : memref<10x10x16x32xbf16, #tpu.memory_space<vmem>>, vector<1x10x16x32xbf16>
    %14 = vector.shape_cast %13 : vector<1x10x16x32xbf16> to vector<10x16x32xbf16>
    %15 = vector.shape_cast %12 : vector<10x16x32xbf16> to vector<1x10x16x32xbf16>
    tpu.vector_store %arg12[%c0_19, %c0_20, %c0_21, %c0_22], %15 {strides = array<i32>} : memref<10x10x16x32xbf16, #tpu.memory_space<vmem>>, vector<1x10x16x32xbf16>,
    %c9 = arith.constant 9 : index
    %c0_23 = arith.constant 0 : index
    %c0_24 = arith.constant 0 : index
    %c0_25 = arith.constant 0 : index
    %16 = vector.load %arg12[%c9, %c0_23, %c0_24, %c0_25] : memref<10x10x16x32xbf16, #tpu.memory_space<vmem>>, vector<1x10x16x32xbf16>
    %17 = vector.shape_cast %16 : vector<1x10x16x32xbf16> to vector<10x16x32xbf16>
    %18 = vector.shape_cast %12 : vector<10x16x32xbf16> to vector<1x10x16x32xbf16>
    tpu.vector_store %arg12[%c9, %c0_23, %c0_24, %c0_25], %18 {strides = array<i32>} : memref<10x10x16x32xbf16, #tpu.memory_space<vmem>>, vector<1x10x16x32xbf16>,
    %cst_26 = arith.constant 0.000000e+00 : bf16
    %19 = vector.broadcast %cst_26 : bf16 to vector<10x1x16x32xbf16>
    %c0_27 = arith.constant 0 : index
    %c0_28 = arith.constant 0 : index
    %c0_29 = arith.constant 0 : index
    %c0_30 = arith.constant 0 : index
    %20 = vector.load %arg12[%c0_27, %c0_28, %c0_29, %c0_30] : memref<10x10x16x32xbf16, #tpu.memory_space<vmem>>, vector<10x1x16x32xbf16>
    tpu.vector_store %arg12[%c0_27, %c0_28, %c0_29, %c0_30], %19 {strides = array<i32>} : memref<10x10x16x32xbf16, #tpu.memory_space<vmem>>, vector<10x1x16x32xbf16>,
    %c0_31 = arith.constant 0 : index
    %c9_32 = arith.constant 9 : index
    %c0_33 = arith.constant 0 : index
    %c0_34 = arith.constant 0 : index
    %21 = vector.load %arg12[%c0_31, %c9_32, %c0_33, %c0_34] : memref<10x10x16x32xbf16, #tpu.memory_space<vmem>>, vector<10x1x16x32xbf16>
    tpu.vector_store %arg12[%c0_31, %c9_32, %c0_33, %c0_34], %19 {strides = array<i32>} : memref<10x10x16x32xbf16, #tpu.memory_space<vmem>>, vector<10x1x16x32xbf16>,
    %c0_35 = arith.constant 0 : index
    %c0_36 = arith.constant 0 : index
    %22 = vector.load %arg5[%c0_35, %c0_36] : memref<1x32xf32, #tpu.memory_space<vmem>>, vector<1x32xf32>
    %c0_i32_37 = arith.constant 0 : i32
    %c8_i32 = arith.constant 8 : i32
    %23 = arith.addi %c0_i32_37, %c8_i32 : i32
    %c1_i32_38 = arith.constant 1 : i32
    scf.for %arg13 = %c0_i32_37 to %23 step %c1_i32_38  : i32 {
      %c2_i32 = arith.constant 2 : i32
      %218 = arith.muli %c2_i32, %arg13 : i32
      %c0_i32_131 = arith.constant 0 : i32
      %219 = arith.addi %218, %c0_i32_131 : i32
      %220 = arith.index_cast %219 : i32 to index
      %c0_132 = arith.constant 0 : index
      %c0_133 = arith.constant 0 : index
      %c0_134 = arith.constant 0 : index
      %221 = vector.load %arg11[%220, %c0_132, %c0_133, %c0_134] : memref<18x18x16x16xbf16, #tpu.memory_space<vmem>>, vector<1x18x16x16xbf16>
      %222 = vector.shape_cast %221 : vector<1x18x16x16xbf16> to vector<18x16x16xbf16>
      %223 = vector.shape_cast %222 : vector<18x16x16xbf16> to vector<9x2x16x16xbf16>
      %224 = vector.extract_strided_slice %223 {offsets = [0, 0, 0, 0], sizes = [8, 1, 16, 16], strides = [1, 1, 1, 1]} : vector<9x2x16x16xbf16> to vector<8x1x16x16xbf16>
      %225 = vector.shape_cast %224 : vector<8x1x16x16xbf16> to vector<8x16x16xbf16>
      %226 = vector.extract_strided_slice %223 {offsets = [0, 1, 0, 0], sizes = [8, 1, 16, 16], strides = [1, 1, 1, 1]} : vector<9x2x16x16xbf16> to vector<8x1x16x16xbf16>
      %227 = vector.shape_cast %226 : vector<8x1x16x16xbf16> to vector<8x16x16xbf16>
      %228 = vector.extract_strided_slice %223 {offsets = [1, 0, 0, 0], sizes = [8, 1, 16, 16], strides = [1, 1, 1, 1]} : vector<9x2x16x16xbf16> to vector<8x1x16x16xbf16>
      %229 = vector.shape_cast %228 : vector<8x1x16x16xbf16> to vector<8x16x16xbf16>
      %c2_i32_135 = arith.constant 2 : i32
      %230 = arith.muli %c2_i32_135, %arg13 : i32
      %c1_i32_136 = arith.constant 1 : i32
      %231 = arith.addi %230, %c1_i32_136 : i32
      %232 = arith.index_cast %231 : i32 to index
      %c0_137 = arith.constant 0 : index
      %c0_138 = arith.constant 0 : index
      %c0_139 = arith.constant 0 : index
      %233 = vector.load %arg11[%232, %c0_137, %c0_138, %c0_139] : memref<18x18x16x16xbf16, #tpu.memory_space<vmem>>, vector<1x18x16x16xbf16>
      %234 = vector.shape_cast %233 : vector<1x18x16x16xbf16> to vector<18x16x16xbf16>
      %235 = vector.shape_cast %234 : vector<18x16x16xbf16> to vector<9x2x16x16xbf16>
      %236 = vector.extract_strided_slice %235 {offsets = [0, 0, 0, 0], sizes = [8, 1, 16, 16], strides = [1, 1, 1, 1]} : vector<9x2x16x16xbf16> to vector<8x1x16x16xbf16>
      %237 = vector.shape_cast %236 : vector<8x1x16x16xbf16> to vector<8x16x16xbf16>
      %238 = vector.extract_strided_slice %235 {offsets = [0, 1, 0, 0], sizes = [8, 1, 16, 16], strides = [1, 1, 1, 1]} : vector<9x2x16x16xbf16> to vector<8x1x16x16xbf16>
      %239 = vector.shape_cast %238 : vector<8x1x16x16xbf16> to vector<8x16x16xbf16>
      %240 = vector.extract_strided_slice %235 {offsets = [1, 0, 0, 0], sizes = [8, 1, 16, 16], strides = [1, 1, 1, 1]} : vector<9x2x16x16xbf16> to vector<8x1x16x16xbf16>
      %241 = vector.shape_cast %240 : vector<8x1x16x16xbf16> to vector<8x16x16xbf16>
      %c2_i32_140 = arith.constant 2 : i32
      %242 = arith.muli %c2_i32_140, %arg13 : i32
      %c2_i32_141 = arith.constant 2 : i32
      %243 = arith.addi %242, %c2_i32_141 : i32
      %244 = arith.index_cast %243 : i32 to index
      %c0_142 = arith.constant 0 : index
      %c0_143 = arith.constant 0 : index
      %c0_144 = arith.constant 0 : index
      %245 = vector.load %arg11[%244, %c0_142, %c0_143, %c0_144] : memref<18x18x16x16xbf16, #tpu.memory_space<vmem>>, vector<1x18x16x16xbf16>
      %246 = vector.shape_cast %245 : vector<1x18x16x16xbf16> to vector<18x16x16xbf16>
      %247 = vector.shape_cast %246 : vector<18x16x16xbf16> to vector<9x2x16x16xbf16>
      %248 = vector.extract_strided_slice %247 {offsets = [0, 0, 0, 0], sizes = [8, 1, 16, 16], strides = [1, 1, 1, 1]} : vector<9x2x16x16xbf16> to vector<8x1x16x16xbf16>
      %249 = vector.shape_cast %248 : vector<8x1x16x16xbf16> to vector<8x16x16xbf16>
      %250 = vector.extract_strided_slice %247 {offsets = [0, 1, 0, 0], sizes = [8, 1, 16, 16], strides = [1, 1, 1, 1]} : vector<9x2x16x16xbf16> to vector<8x1x16x16xbf16>
      %251 = vector.shape_cast %250 : vector<8x1x16x16xbf16> to vector<8x16x16xbf16>
      %252 = vector.extract_strided_slice %247 {offsets = [1, 0, 0, 0], sizes = [8, 1, 16, 16], strides = [1, 1, 1, 1]} : vector<9x2x16x16xbf16> to vector<8x1x16x16xbf16>
      %253 = vector.shape_cast %252 : vector<8x1x16x16xbf16> to vector<8x16x16xbf16>
      %254 = tpu.concatenate %225, %227, %229, %237, %239, %241, %249, %251, %253 in 2 : vector<8x16x16xbf16>, vector<8x16x16xbf16>, vector<8x16x16xbf16>, vector<8x16x16xbf16>, vector<8x16x16xbf16>, vector<8x16x16xbf16>, vector<8x16x16xbf16>, vector<8x16x16xbf16>, vector<8x16x16xbf16> -> vector<8x16x144xbf16>
      %255 = vector.shape_cast %254 : vector<8x16x144xbf16> to vector<128x144xbf16>
      %c0_145 = arith.constant 0 : index
      %c0_146 = arith.constant 0 : index
      %256 = vector.load %arg4[%c0_145, %c0_146] : memref<144x32xbf16, #tpu.memory_space<vmem>>, vector<144x32xbf16>
      %cst_147 = arith.constant dense<0.000000e+00> : vector<128x32xf32>
      %257 = tpu.matmul %255, %256, %cst_147 {dimension_numbers = #tpu.dot_dimension_numbers<[1], [0], [0], [1], [0, 0, 1, 1], [], []>} : vector<128x144xbf16>, vector<144x32xbf16>, vector<128x32xf32> -> vector<128x32xf32>
      %258 = vector.broadcast %22 : vector<1x32xf32> to vector<128x32xf32>
      %259 = arith.addf %257, %258 : vector<128x32xf32>
      %cst_148 = arith.constant 0.000000e+00 : f32
      %260 = vector.broadcast %cst_148 : f32 to vector<128x32xf32>
      %261 = arith.cmpf oge, %259, %260 : vector<128x32xf32>
      %cst_149 = arith.constant 0.00999999977 : f32
      %262 = vector.broadcast %cst_149 : f32 to vector<128x32xf32>
      %263 = arith.mulf %262, %259 : vector<128x32xf32>
      %264 = arith.select %261, %259, %263 : vector<128x32xi1>, vector<128x32xf32>
      %265 = vector.shape_cast %264 : vector<128x32xf32> to vector<8x16x32xf32>
      %266 = arith.truncf %265 : vector<8x16x32xf32> to vector<8x16x32xbf16>
      %c1_i32_150 = arith.constant 1 : i32
      %267 = arith.addi %arg13, %c1_i32_150 : i32
      %268 = arith.index_cast %267 : i32 to index
      %c1_151 = arith.constant 1 : index
      %c0_152 = arith.constant 0 : index
      %c0_153 = arith.constant 0 : index
      %269 = vector.load %arg12[%268, %c1_151, %c0_152, %c0_153] : memref<10x10x16x32xbf16, #tpu.memory_space<vmem>>, vector<1x8x16x32xbf16>
      %270 = vector.shape_cast %269 : vector<1x8x16x32xbf16> to vector<8x16x32xbf16>
      %271 = vector.shape_cast %266 : vector<8x16x32xbf16> to vector<1x8x16x32xbf16>
      tpu.vector_store %arg12[%268, %c1_151, %c0_152, %c0_153], %271 {strides = array<i32>} : memref<10x10x16x32xbf16, #tpu.memory_space<vmem>>, vector<1x8x16x32xbf16>,
    }
    %c8_i32_39 = arith.constant 8 : i32
    %c0_40 = arith.constant 0 : index
    %c0_41 = arith.constant 0 : index
    %24 = vector.load %arg7[%c0_40, %c0_41] : memref<1x64xf32, #tpu.memory_space<vmem>>, vector<1x64xf32>
    %cst_42 = arith.constant 0.000000e+00 : f32
    %25 = vector.broadcast %cst_42 : f32 to vector<16x1xf32>
    %c0_43 = arith.constant 0 : index
    %c0_44 = arith.constant 0 : index
    %c0_45 = arith.constant 0 : index
    %c0_46 = arith.constant 0 : index
    %26 = vector.load %arg12[%c0_43, %c0_44, %c0_45, %c0_46] : memref<10x10x16x32xbf16, #tpu.memory_space<vmem>>, vector<1x10x16x32xbf16>
    %27 = vector.shape_cast %26 : vector<1x10x16x32xbf16> to vector<10x16x32xbf16>
    %28 = vector.shape_cast %27 : vector<10x16x32xbf16> to vector<5x2x16x32xbf16>
    %29 = vector.extract_strided_slice %28 {offsets = [0, 0, 0, 0], sizes = [4, 1, 16, 32], strides = [1, 1, 1, 1]} : vector<5x2x16x32xbf16> to vector<4x1x16x32xbf16>
    %30 = vector.shape_cast %29 : vector<4x1x16x32xbf16> to vector<4x16x32xbf16>
    %31 = vector.extract_strided_slice %28 {offsets = [0, 1, 0, 0], sizes = [4, 1, 16, 32], strides = [1, 1, 1, 1]} : vector<5x2x16x32xbf16> to vector<4x1x16x32xbf16>
    %32 = vector.shape_cast %31 : vector<4x1x16x32xbf16> to vector<4x16x32xbf16>
    %33 = vector.extract_strided_slice %28 {offsets = [1, 0, 0, 0], sizes = [4, 1, 16, 32], strides = [1, 1, 1, 1]} : vector<5x2x16x32xbf16> to vector<4x1x16x32xbf16>
    %34 = vector.shape_cast %33 : vector<4x1x16x32xbf16> to vector<4x16x32xbf16>
    %c1 = arith.constant 1 : index
    %c0_47 = arith.constant 0 : index
    %c0_48 = arith.constant 0 : index
    %c0_49 = arith.constant 0 : index
    %35 = vector.load %arg12[%c1, %c0_47, %c0_48, %c0_49] : memref<10x10x16x32xbf16, #tpu.memory_space<vmem>>, vector<1x10x16x32xbf16>
    %36 = vector.shape_cast %35 : vector<1x10x16x32xbf16> to vector<10x16x32xbf16>
    %37 = vector.shape_cast %36 : vector<10x16x32xbf16> to vector<5x2x16x32xbf16>
    %38 = vector.extract_strided_slice %37 {offsets = [0, 0, 0, 0], sizes = [4, 1, 16, 32], strides = [1, 1, 1, 1]} : vector<5x2x16x32xbf16> to vector<4x1x16x32xbf16>
    %39 = vector.shape_cast %38 : vector<4x1x16x32xbf16> to vector<4x16x32xbf16>
    %40 = vector.extract_strided_slice %37 {offsets = [0, 1, 0, 0], sizes = [4, 1, 16, 32], strides = [1, 1, 1, 1]} : vector<5x2x16x32xbf16> to vector<4x1x16x32xbf16>
    %41 = vector.shape_cast %40 : vector<4x1x16x32xbf16> to vector<4x16x32xbf16>
    %42 = vector.extract_strided_slice %37 {offsets = [1, 0, 0, 0], sizes = [4, 1, 16, 32], strides = [1, 1, 1, 1]} : vector<5x2x16x32xbf16> to vector<4x1x16x32xbf16>
    %43 = vector.shape_cast %42 : vector<4x1x16x32xbf16> to vector<4x16x32xbf16>
    %c2 = arith.constant 2 : index
    %c0_50 = arith.constant 0 : index
    %c0_51 = arith.constant 0 : index
    %c0_52 = arith.constant 0 : index
    %44 = vector.load %arg12[%c2, %c0_50, %c0_51, %c0_52] : memref<10x10x16x32xbf16, #tpu.memory_space<vmem>>, vector<1x10x16x32xbf16>
    %45 = vector.shape_cast %44 : vector<1x10x16x32xbf16> to vector<10x16x32xbf16>
    %46 = vector.shape_cast %45 : vector<10x16x32xbf16> to vector<5x2x16x32xbf16>
    %47 = vector.extract_strided_slice %46 {offsets = [0, 0, 0, 0], sizes = [4, 1, 16, 32], strides = [1, 1, 1, 1]} : vector<5x2x16x32xbf16> to vector<4x1x16x32xbf16>
    %48 = vector.shape_cast %47 : vector<4x1x16x32xbf16> to vector<4x16x32xbf16>
    %49 = vector.extract_strided_slice %46 {offsets = [0, 1, 0, 0], sizes = [4, 1, 16, 32], strides = [1, 1, 1, 1]} : vector<5x2x16x32xbf16> to vector<4x1x16x32xbf16>
    %50 = vector.shape_cast %49 : vector<4x1x16x32xbf16> to vector<4x16x32xbf16>
    %51 = vector.extract_strided_slice %46 {offsets = [1, 0, 0, 0], sizes = [4, 1, 16, 32], strides = [1, 1, 1, 1]} : vector<5x2x16x32xbf16> to vector<4x1x16x32xbf16>
    %52 = vector.shape_cast %51 : vector<4x1x16x32xbf16> to vector<4x16x32xbf16>
    %53 = tpu.concatenate %30, %32, %34, %39, %41, %43, %48, %50, %52 in 2 : vector<4x16x32xbf16>, vector<4x16x32xbf16>, vector<4x16x32xbf16>, vector<4x16x32xbf16>, vector<4x16x32xbf16>, vector<4x16x32xbf16>, vector<4x16x32xbf16>, vector<4x16x32xbf16>, vector<4x16x32xbf16> -> vector<4x16x288xbf16>
    %54 = vector.shape_cast %53 : vector<4x16x288xbf16> to vector<64x288xbf16>
    %c0_53 = arith.constant 0 : index
    %c0_54 = arith.constant 0 : index
    %55 = vector.load %arg6[%c0_53, %c0_54] : memref<288x64xbf16, #tpu.memory_space<vmem>>, vector<288x64xbf16>
    %cst_55 = arith.constant dense<0.000000e+00> : vector<64x64xf32>
    %56 = tpu.matmul %54, %55, %cst_55 {dimension_numbers = #tpu.dot_dimension_numbers<[1], [0], [0], [1], [0, 0, 1, 1], [], []>} : vector<64x288xbf16>, vector<288x64xbf16>, vector<64x64xf32> -> vector<64x64xf32>
    %57 = vector.broadcast %24 : vector<1x64xf32> to vector<64x64xf32>
    %58 = arith.addf %56, %57 : vector<64x64xf32>
    %cst_56 = arith.constant 0.000000e+00 : f32
    %59 = vector.broadcast %cst_56 : f32 to vector<64x64xf32>
    %60 = arith.cmpf oge, %58, %59 : vector<64x64xf32>
    %cst_57 = arith.constant 0.00999999977 : f32
    %61 = vector.broadcast %cst_57 : f32 to vector<64x64xf32>
    %62 = arith.mulf %61, %58 : vector<64x64xf32>
    %63 = arith.select %60, %58, %62 : vector<64x64xi1>, vector<64x64xf32>
    %64 = vector.shape_cast %63 : vector<64x64xf32> to vector<4x16x64xf32>
    %c0_58 = arith.constant 0 : index
    %c0_59 = arith.constant 0 : index
    %c0_60 = arith.constant 0 : index
    %c0_61 = arith.constant 0 : index
    %65 = vector.load %arg8[%c0_58, %c0_59, %c0_60, %c0_61] : memref<4x4x1x64xf32, #tpu.memory_space<vmem>>, vector<1x4x1x64xf32>
    %66 = vector.shape_cast %65 : vector<1x4x1x64xf32> to vector<4x1x64xf32>
    %67 = vector.broadcast %66 : vector<4x1x64xf32> to vector<4x16x64xf32>
    %68 = arith.mulf %64, %67 : vector<4x16x64xf32>
    %cst_62 = arith.constant dense<0.000000e+00> : vector<4x16xf32>
    %69 = vector.multi_reduction <add>, %68, %cst_62 [2] : vector<4x16x64xf32> to vector<4x16xf32>
    %70 = vector.shape_cast %69 : vector<4x16xf32> to vector<4x16x1xf32>
    %cst_63 = arith.constant dense<0.000000e+00> : vector<16x1xf32>
    %71 = vector.multi_reduction <add>, %70, %cst_63 [0] : vector<4x16x1xf32> to vector<16x1xf32>
    %72 = arith.addf %25, %71 : vector<16x1xf32>
    %c2_64 = arith.constant 2 : index
    %c0_65 = arith.constant 0 : index
    %c0_66 = arith.constant 0 : index
    %c0_67 = arith.constant 0 : index
    %73 = vector.load %arg12[%c2_64, %c0_65, %c0_66, %c0_67] : memref<10x10x16x32xbf16, #tpu.memory_space<vmem>>, vector<1x10x16x32xbf16>
    %74 = vector.shape_cast %73 : vector<1x10x16x32xbf16> to vector<10x16x32xbf16>
    %75 = vector.shape_cast %74 : vector<10x16x32xbf16> to vector<5x2x16x32xbf16>
    %76 = vector.extract_strided_slice %75 {offsets = [0, 0, 0, 0], sizes = [4, 1, 16, 32], strides = [1, 1, 1, 1]} : vector<5x2x16x32xbf16> to vector<4x1x16x32xbf16>
    %77 = vector.shape_cast %76 : vector<4x1x16x32xbf16> to vector<4x16x32xbf16>
    %78 = vector.extract_strided_slice %75 {offsets = [0, 1, 0, 0], sizes = [4, 1, 16, 32], strides = [1, 1, 1, 1]} : vector<5x2x16x32xbf16> to vector<4x1x16x32xbf16>
    %79 = vector.shape_cast %78 : vector<4x1x16x32xbf16> to vector<4x16x32xbf16>
    %80 = vector.extract_strided_slice %75 {offsets = [1, 0, 0, 0], sizes = [4, 1, 16, 32], strides = [1, 1, 1, 1]} : vector<5x2x16x32xbf16> to vector<4x1x16x32xbf16>
    %81 = vector.shape_cast %80 : vector<4x1x16x32xbf16> to vector<4x16x32xbf16>
    %c3 = arith.constant 3 : index
    %c0_68 = arith.constant 0 : index
    %c0_69 = arith.constant 0 : index
    %c0_70 = arith.constant 0 : index
    %82 = vector.load %arg12[%c3, %c0_68, %c0_69, %c0_70] : memref<10x10x16x32xbf16, #tpu.memory_space<vmem>>, vector<1x10x16x32xbf16>
    %83 = vector.shape_cast %82 : vector<1x10x16x32xbf16> to vector<10x16x32xbf16>
    %84 = vector.shape_cast %83 : vector<10x16x32xbf16> to vector<5x2x16x32xbf16>
    %85 = vector.extract_strided_slice %84 {offsets = [0, 0, 0, 0], sizes = [4, 1, 16, 32], strides = [1, 1, 1, 1]} : vector<5x2x16x32xbf16> to vector<4x1x16x32xbf16>
    %86 = vector.shape_cast %85 : vector<4x1x16x32xbf16> to vector<4x16x32xbf16>
    %87 = vector.extract_strided_slice %84 {offsets = [0, 1, 0, 0], sizes = [4, 1, 16, 32], strides = [1, 1, 1, 1]} : vector<5x2x16x32xbf16> to vector<4x1x16x32xbf16>
    %88 = vector.shape_cast %87 : vector<4x1x16x32xbf16> to vector<4x16x32xbf16>
    %89 = vector.extract_strided_slice %84 {offsets = [1, 0, 0, 0], sizes = [4, 1, 16, 32], strides = [1, 1, 1, 1]} : vector<5x2x16x32xbf16> to vector<4x1x16x32xbf16>
    %90 = vector.shape_cast %89 : vector<4x1x16x32xbf16> to vector<4x16x32xbf16>
    %c4 = arith.constant 4 : index
    %c0_71 = arith.constant 0 : index
    %c0_72 = arith.constant 0 : index
    %c0_73 = arith.constant 0 : index
    %91 = vector.load %arg12[%c4, %c0_71, %c0_72, %c0_73] : memref<10x10x16x32xbf16, #tpu.memory_space<vmem>>, vector<1x10x16x32xbf16>
    %92 = vector.shape_cast %91 : vector<1x10x16x32xbf16> to vector<10x16x32xbf16>
    %93 = vector.shape_cast %92 : vector<10x16x32xbf16> to vector<5x2x16x32xbf16>
    %94 = vector.extract_strided_slice %93 {offsets = [0, 0, 0, 0], sizes = [4, 1, 16, 32], strides = [1, 1, 1, 1]} : vector<5x2x16x32xbf16> to vector<4x1x16x32xbf16>
    %95 = vector.shape_cast %94 : vector<4x1x16x32xbf16> to vector<4x16x32xbf16>
    %96 = vector.extract_strided_slice %93 {offsets = [0, 1, 0, 0], sizes = [4, 1, 16, 32], strides = [1, 1, 1, 1]} : vector<5x2x16x32xbf16> to vector<4x1x16x32xbf16>
    %97 = vector.shape_cast %96 : vector<4x1x16x32xbf16> to vector<4x16x32xbf16>
    %98 = vector.extract_strided_slice %93 {offsets = [1, 0, 0, 0], sizes = [4, 1, 16, 32], strides = [1, 1, 1, 1]} : vector<5x2x16x32xbf16> to vector<4x1x16x32xbf16>
    %99 = vector.shape_cast %98 : vector<4x1x16x32xbf16> to vector<4x16x32xbf16>
    %100 = tpu.concatenate %77, %79, %81, %86, %88, %90, %95, %97, %99 in 2 : vector<4x16x32xbf16>, vector<4x16x32xbf16>, vector<4x16x32xbf16>, vector<4x16x32xbf16>, vector<4x16x32xbf16>, vector<4x16x32xbf16>, vector<4x16x32xbf16>, vector<4x16x32xbf16>, vector<4x16x32xbf16> -> vector<4x16x288xbf16>
    %101 = vector.shape_cast %100 : vector<4x16x288xbf16> to vector<64x288xbf16>
    %c0_74 = arith.constant 0 : index
    %c0_75 = arith.constant 0 : index
    %102 = vector.load %arg6[%c0_74, %c0_75] : memref<288x64xbf16, #tpu.memory_space<vmem>>, vector<288x64xbf16>
    %cst_76 = arith.constant dense<0.000000e+00> : vector<64x64xf32>
    %103 = tpu.matmul %101, %102, %cst_76 {dimension_numbers = #tpu.dot_dimension_numbers<[1], [0], [0], [1], [0, 0, 1, 1], [], []>} : vector<64x288xbf16>, vector<288x64xbf16>, vector<64x64xf32> -> vector<64x64xf32>
    %104 = vector.broadcast %24 : vector<1x64xf32> to vector<64x64xf32>
    %105 = arith.addf %103, %104 : vector<64x64xf32>
    %cst_77 = arith.constant 0.000000e+00 : f32
    %106 = vector.broadcast %cst_77 : f32 to vector<64x64xf32>
    %107 = arith.cmpf oge, %105, %106 : vector<64x64xf32>
    %cst_78 = arith.constant 0.00999999977 : f32
    %108 = vector.broadcast %cst_78 : f32 to vector<64x64xf32>
    %109 = arith.mulf %108, %105 : vector<64x64xf32>
    %110 = arith.select %107, %105, %109 : vector<64x64xi1>, vector<64x64xf32>
    %111 = vector.shape_cast %110 : vector<64x64xf32> to vector<4x16x64xf32>
    %c1_79 = arith.constant 1 : index
    %c0_80 = arith.constant 0 : index
    %c0_81 = arith.constant 0 : index
    %c0_82 = arith.constant 0 : index
    %112 = vector.load %arg8[%c1_79, %c0_80, %c0_81, %c0_82] : memref<4x4x1x64xf32, #tpu.memory_space<vmem>>, vector<1x4x1x64xf32>
    %113 = vector.shape_cast %112 : vector<1x4x1x64xf32> to vector<4x1x64xf32>
    %114 = vector.broadcast %113 : vector<4x1x64xf32> to vector<4x16x64xf32>
    %115 = arith.mulf %111, %114 : vector<4x16x64xf32>
    %cst_83 = arith.constant dense<0.000000e+00> : vector<4x16xf32>
    %116 = vector.multi_reduction <add>, %115, %cst_83 [2] : vector<4x16x64xf32> to vector<4x16xf32>
    %117 = vector.shape_cast %116 : vector<4x16xf32> to vector<4x16x1xf32>
    %cst_84 = arith.constant dense<0.000000e+00> : vector<16x1xf32>
    %118 = vector.multi_reduction <add>, %117, %cst_84 [0] : vector<4x16x1xf32> to vector<16x1xf32>
    %119 = arith.addf %72, %118 : vector<16x1xf32>
    %c4_85 = arith.constant 4 : index
    %c0_86 = arith.constant 0 : index
    %c0_87 = arith.constant 0 : index
    %c0_88 = arith.constant 0 : index
    %120 = vector.load %arg12[%c4_85, %c0_86, %c0_87, %c0_88] : memref<10x10x16x32xbf16, #tpu.memory_space<vmem>>, vector<1x10x16x32xbf16>
    %121 = vector.shape_cast %120 : vector<1x10x16x32xbf16> to vector<10x16x32xbf16>
    %122 = vector.shape_cast %121 : vector<10x16x32xbf16> to vector<5x2x16x32xbf16>
    %123 = vector.extract_strided_slice %122 {offsets = [0, 0, 0, 0], sizes = [4, 1, 16, 32], strides = [1, 1, 1, 1]} : vector<5x2x16x32xbf16> to vector<4x1x16x32xbf16>
    %124 = vector.shape_cast %123 : vector<4x1x16x32xbf16> to vector<4x16x32xbf16>
    %125 = vector.extract_strided_slice %122 {offsets = [0, 1, 0, 0], sizes = [4, 1, 16, 32], strides = [1, 1, 1, 1]} : vector<5x2x16x32xbf16> to vector<4x1x16x32xbf16>
    %126 = vector.shape_cast %125 : vector<4x1x16x32xbf16> to vector<4x16x32xbf16>
    %127 = vector.extract_strided_slice %122 {offsets = [1, 0, 0, 0], sizes = [4, 1, 16, 32], strides = [1, 1, 1, 1]} : vector<5x2x16x32xbf16> to vector<4x1x16x32xbf16>
    %128 = vector.shape_cast %127 : vector<4x1x16x32xbf16> to vector<4x16x32xbf16>
    %c5 = arith.constant 5 : index
    %c0_89 = arith.constant 0 : index
    %c0_90 = arith.constant 0 : index
    %c0_91 = arith.constant 0 : index
    %129 = vector.load %arg12[%c5, %c0_89, %c0_90, %c0_91] : memref<10x10x16x32xbf16, #tpu.memory_space<vmem>>, vector<1x10x16x32xbf16>
    %130 = vector.shape_cast %129 : vector<1x10x16x32xbf16> to vector<10x16x32xbf16>
    %131 = vector.shape_cast %130 : vector<10x16x32xbf16> to vector<5x2x16x32xbf16>
    %132 = vector.extract_strided_slice %131 {offsets = [0, 0, 0, 0], sizes = [4, 1, 16, 32], strides = [1, 1, 1, 1]} : vector<5x2x16x32xbf16> to vector<4x1x16x32xbf16>
    %133 = vector.shape_cast %132 : vector<4x1x16x32xbf16> to vector<4x16x32xbf16>
    %134 = vector.extract_strided_slice %131 {offsets = [0, 1, 0, 0], sizes = [4, 1, 16, 32], strides = [1, 1, 1, 1]} : vector<5x2x16x32xbf16> to vector<4x1x16x32xbf16>
    %135 = vector.shape_cast %134 : vector<4x1x16x32xbf16> to vector<4x16x32xbf16>
    %136 = vector.extract_strided_slice %131 {offsets = [1, 0, 0, 0], sizes = [4, 1, 16, 32], strides = [1, 1, 1, 1]} : vector<5x2x16x32xbf16> to vector<4x1x16x32xbf16>
    %137 = vector.shape_cast %136 : vector<4x1x16x32xbf16> to vector<4x16x32xbf16>
    %c6 = arith.constant 6 : index
    %c0_92 = arith.constant 0 : index
    %c0_93 = arith.constant 0 : index
    %c0_94 = arith.constant 0 : index
    %138 = vector.load %arg12[%c6, %c0_92, %c0_93, %c0_94] : memref<10x10x16x32xbf16, #tpu.memory_space<vmem>>, vector<1x10x16x32xbf16>
    %139 = vector.shape_cast %138 : vector<1x10x16x32xbf16> to vector<10x16x32xbf16>
    %140 = vector.shape_cast %139 : vector<10x16x32xbf16> to vector<5x2x16x32xbf16>
    %141 = vector.extract_strided_slice %140 {offsets = [0, 0, 0, 0], sizes = [4, 1, 16, 32], strides = [1, 1, 1, 1]} : vector<5x2x16x32xbf16> to vector<4x1x16x32xbf16>
    %142 = vector.shape_cast %141 : vector<4x1x16x32xbf16> to vector<4x16x32xbf16>
    %143 = vector.extract_strided_slice %140 {offsets = [0, 1, 0, 0], sizes = [4, 1, 16, 32], strides = [1, 1, 1, 1]} : vector<5x2x16x32xbf16> to vector<4x1x16x32xbf16>
    %144 = vector.shape_cast %143 : vector<4x1x16x32xbf16> to vector<4x16x32xbf16>
    %145 = vector.extract_strided_slice %140 {offsets = [1, 0, 0, 0], sizes = [4, 1, 16, 32], strides = [1, 1, 1, 1]} : vector<5x2x16x32xbf16> to vector<4x1x16x32xbf16>
    %146 = vector.shape_cast %145 : vector<4x1x16x32xbf16> to vector<4x16x32xbf16>
    %147 = tpu.concatenate %124, %126, %128, %133, %135, %137, %142, %144, %146 in 2 : vector<4x16x32xbf16>, vector<4x16x32xbf16>, vector<4x16x32xbf16>, vector<4x16x32xbf16>, vector<4x16x32xbf16>, vector<4x16x32xbf16>, vector<4x16x32xbf16>, vector<4x16x32xbf16>, vector<4x16x32xbf16> -> vector<4x16x288xbf16>
    %148 = vector.shape_cast %147 : vector<4x16x288xbf16> to vector<64x288xbf16>
    %c0_95 = arith.constant 0 : index
    %c0_96 = arith.constant 0 : index
    %149 = vector.load %arg6[%c0_95, %c0_96] : memref<288x64xbf16, #tpu.memory_space<vmem>>, vector<288x64xbf16>
    %cst_97 = arith.constant dense<0.000000e+00> : vector<64x64xf32>
    %150 = tpu.matmul %148, %149, %cst_97 {dimension_numbers = #tpu.dot_dimension_numbers<[1], [0], [0], [1], [0, 0, 1, 1], [], []>} : vector<64x288xbf16>, vector<288x64xbf16>, vector<64x64xf32> -> vector<64x64xf32>
    %151 = vector.broadcast %24 : vector<1x64xf32> to vector<64x64xf32>
    %152 = arith.addf %150, %151 : vector<64x64xf32>
    %cst_98 = arith.constant 0.000000e+00 : f32
    %153 = vector.broadcast %cst_98 : f32 to vector<64x64xf32>
    %154 = arith.cmpf oge, %152, %153 : vector<64x64xf32>
    %cst_99 = arith.constant 0.00999999977 : f32
    %155 = vector.broadcast %cst_99 : f32 to vector<64x64xf32>
    %156 = arith.mulf %155, %152 : vector<64x64xf32>
    %157 = arith.select %154, %152, %156 : vector<64x64xi1>, vector<64x64xf32>
    %158 = vector.shape_cast %157 : vector<64x64xf32> to vector<4x16x64xf32>
    %c2_100 = arith.constant 2 : index
    %c0_101 = arith.constant 0 : index
    %c0_102 = arith.constant 0 : index
    %c0_103 = arith.constant 0 : index
    %159 = vector.load %arg8[%c2_100, %c0_101, %c0_102, %c0_103] : memref<4x4x1x64xf32, #tpu.memory_space<vmem>>, vector<1x4x1x64xf32>
    %160 = vector.shape_cast %159 : vector<1x4x1x64xf32> to vector<4x1x64xf32>
    %161 = vector.broadcast %160 : vector<4x1x64xf32> to vector<4x16x64xf32>
    %162 = arith.mulf %158, %161 : vector<4x16x64xf32>
    %cst_104 = arith.constant dense<0.000000e+00> : vector<4x16xf32>
    %163 = vector.multi_reduction <add>, %162, %cst_104 [2] : vector<4x16x64xf32> to vector<4x16xf32>
    %164 = vector.shape_cast %163 : vector<4x16xf32> to vector<4x16x1xf32>
    %cst_105 = arith.constant dense<0.000000e+00> : vector<16x1xf32>
    %165 = vector.multi_reduction <add>, %164, %cst_105 [0] : vector<4x16x1xf32> to vector<16x1xf32>
    %166 = arith.addf %119, %165 : vector<16x1xf32>
    %c6_106 = arith.constant 6 : index
    %c0_107 = arith.constant 0 : index
    %c0_108 = arith.constant 0 : index
    %c0_109 = arith.constant 0 : index
    %167 = vector.load %arg12[%c6_106, %c0_107, %c0_108, %c0_109] : memref<10x10x16x32xbf16, #tpu.memory_space<vmem>>, vector<1x10x16x32xbf16>
    %168 = vector.shape_cast %167 : vector<1x10x16x32xbf16> to vector<10x16x32xbf16>
    %169 = vector.shape_cast %168 : vector<10x16x32xbf16> to vector<5x2x16x32xbf16>
    %170 = vector.extract_strided_slice %169 {offsets = [0, 0, 0, 0], sizes = [4, 1, 16, 32], strides = [1, 1, 1, 1]} : vector<5x2x16x32xbf16> to vector<4x1x16x32xbf16>
    %171 = vector.shape_cast %170 : vector<4x1x16x32xbf16> to vector<4x16x32xbf16>
    %172 = vector.extract_strided_slice %169 {offsets = [0, 1, 0, 0], sizes = [4, 1, 16, 32], strides = [1, 1, 1, 1]} : vector<5x2x16x32xbf16> to vector<4x1x16x32xbf16>
    %173 = vector.shape_cast %172 : vector<4x1x16x32xbf16> to vector<4x16x32xbf16>
    %174 = vector.extract_strided_slice %169 {offsets = [1, 0, 0, 0], sizes = [4, 1, 16, 32], strides = [1, 1, 1, 1]} : vector<5x2x16x32xbf16> to vector<4x1x16x32xbf16>
    %175 = vector.shape_cast %174 : vector<4x1x16x32xbf16> to vector<4x16x32xbf16>
    %c7 = arith.constant 7 : index
    %c0_110 = arith.constant 0 : index
    %c0_111 = arith.constant 0 : index
    %c0_112 = arith.constant 0 : index
    %176 = vector.load %arg12[%c7, %c0_110, %c0_111, %c0_112] : memref<10x10x16x32xbf16, #tpu.memory_space<vmem>>, vector<1x10x16x32xbf16>
    %177 = vector.shape_cast %176 : vector<1x10x16x32xbf16> to vector<10x16x32xbf16>
    %178 = vector.shape_cast %177 : vector<10x16x32xbf16> to vector<5x2x16x32xbf16>
    %179 = vector.extract_strided_slice %178 {offsets = [0, 0, 0, 0], sizes = [4, 1, 16, 32], strides = [1, 1, 1, 1]} : vector<5x2x16x32xbf16> to vector<4x1x16x32xbf16>
    %180 = vector.shape_cast %179 : vector<4x1x16x32xbf16> to vector<4x16x32xbf16>
    %181 = vector.extract_strided_slice %178 {offsets = [0, 1, 0, 0], sizes = [4, 1, 16, 32], strides = [1, 1, 1, 1]} : vector<5x2x16x32xbf16> to vector<4x1x16x32xbf16>
    %182 = vector.shape_cast %181 : vector<4x1x16x32xbf16> to vector<4x16x32xbf16>
    %183 = vector.extract_strided_slice %178 {offsets = [1, 0, 0, 0], sizes = [4, 1, 16, 32], strides = [1, 1, 1, 1]} : vector<5x2x16x32xbf16> to vector<4x1x16x32xbf16>
    %184 = vector.shape_cast %183 : vector<4x1x16x32xbf16> to vector<4x16x32xbf16>
    %c8 = arith.constant 8 : index
    %c0_113 = arith.constant 0 : index
    %c0_114 = arith.constant 0 : index
    %c0_115 = arith.constant 0 : index
    %185 = vector.load %arg12[%c8, %c0_113, %c0_114, %c0_115] : memref<10x10x16x32xbf16, #tpu.memory_space<vmem>>, vector<1x10x16x32xbf16>
    %186 = vector.shape_cast %185 : vector<1x10x16x32xbf16> to vector<10x16x32xbf16>
    %187 = vector.shape_cast %186 : vector<10x16x32xbf16> to vector<5x2x16x32xbf16>
    %188 = vector.extract_strided_slice %187 {offsets = [0, 0, 0, 0], sizes = [4, 1, 16, 32], strides = [1, 1, 1, 1]} : vector<5x2x16x32xbf16> to vector<4x1x16x32xbf16>
    %189 = vector.shape_cast %188 : vector<4x1x16x32xbf16> to vector<4x16x32xbf16>
    %190 = vector.extract_strided_slice %187 {offsets = [0, 1, 0, 0], sizes = [4, 1, 16, 32], strides = [1, 1, 1, 1]} : vector<5x2x16x32xbf16> to vector<4x1x16x32xbf16>
    %191 = vector.shape_cast %190 : vector<4x1x16x32xbf16> to vector<4x16x32xbf16>
    %192 = vector.extract_strided_slice %187 {offsets = [1, 0, 0, 0], sizes = [4, 1, 16, 32], strides = [1, 1, 1, 1]} : vector<5x2x16x32xbf16> to vector<4x1x16x32xbf16>
    %193 = vector.shape_cast %192 : vector<4x1x16x32xbf16> to vector<4x16x32xbf16>
    %194 = tpu.concatenate %171, %173, %175, %180, %182, %184, %189, %191, %193 in 2 : vector<4x16x32xbf16>, vector<4x16x32xbf16>, vector<4x16x32xbf16>, vector<4x16x32xbf16>, vector<4x16x32xbf16>, vector<4x16x32xbf16>, vector<4x16x32xbf16>, vector<4x16x32xbf16>, vector<4x16x32xbf16> -> vector<4x16x288xbf16>
    %195 = vector.shape_cast %194 : vector<4x16x288xbf16> to vector<64x288xbf16>
    %c0_116 = arith.constant 0 : index
    %c0_117 = arith.constant 0 : index
    %196 = vector.load %arg6[%c0_116, %c0_117] : memref<288x64xbf16, #tpu.memory_space<vmem>>, vector<288x64xbf16>
    %cst_118 = arith.constant dense<0.000000e+00> : vector<64x64xf32>
    %197 = tpu.matmul %195, %196, %cst_118 {dimension_numbers = #tpu.dot_dimension_numbers<[1], [0], [0], [1], [0, 0, 1, 1], [], []>} : vector<64x288xbf16>, vector<288x64xbf16>, vector<64x64xf32> -> vector<64x64xf32>
    %198 = vector.broadcast %24 : vector<1x64xf32> to vector<64x64xf32>
    %199 = arith.addf %197, %198 : vector<64x64xf32>
    %cst_119 = arith.constant 0.000000e+00 : f32
    %200 = vector.broadcast %cst_119 : f32 to vector<64x64xf32>
    %201 = arith.cmpf oge, %199, %200 : vector<64x64xf32>
    %cst_120 = arith.constant 0.00999999977 : f32
    %202 = vector.broadcast %cst_120 : f32 to vector<64x64xf32>
    %203 = arith.mulf %202, %199 : vector<64x64xf32>
    %204 = arith.select %201, %199, %203 : vector<64x64xi1>, vector<64x64xf32>
    %205 = vector.shape_cast %204 : vector<64x64xf32> to vector<4x16x64xf32>
    %c3_121 = arith.constant 3 : index
    %c0_122 = arith.constant 0 : index
    %c0_123 = arith.constant 0 : index
    %c0_124 = arith.constant 0 : index
    %206 = vector.load %arg8[%c3_121, %c0_122, %c0_123, %c0_124] : memref<4x4x1x64xf32, #tpu.memory_space<vmem>>, vector<1x4x1x64xf32>
    %207 = vector.shape_cast %206 : vector<1x4x1x64xf32> to vector<4x1x64xf32>
    %208 = vector.broadcast %207 : vector<4x1x64xf32> to vector<4x16x64xf32>
    %209 = arith.mulf %205, %208 : vector<4x16x64xf32>
    %cst_125 = arith.constant dense<0.000000e+00> : vector<4x16xf32>
    %210 = vector.multi_reduction <add>, %209, %cst_125 [2] : vector<4x16x64xf32> to vector<4x16xf32>
    %211 = vector.shape_cast %210 : vector<4x16xf32> to vector<4x16x1xf32>
    %cst_126 = arith.constant dense<0.000000e+00> : vector<16x1xf32>
    %212 = vector.multi_reduction <add>, %211, %cst_126 [0] : vector<4x16x1xf32> to vector<16x1xf32>
    %213 = arith.addf %166, %212 : vector<16x1xf32>
    %c0_127 = arith.constant 0 : index
    %c0_128 = arith.constant 0 : index
    %214 = vector.load %arg9[%c0_127, %c0_128] : memref<1x1xf32, #tpu.memory_space<vmem>>, vector<1x1xf32>
    %215 = vector.broadcast %214 : vector<1x1xf32> to vector<16x1xf32>
    %216 = arith.addf %213, %215 : vector<16x1xf32>
    %c0_129 = arith.constant 0 : index
    %c0_130 = arith.constant 0 : index
    %217 = vector.load %arg10[%c0_129, %c0_130] : memref<16x1xf32, #tpu.memory_space<vmem>>, vector<16x1xf32>
    tpu.vector_store %arg10[%c0_129, %c0_130], %216 {strides = array<i32>} : memref<16x1xf32, #tpu.memory_space<vmem>>, vector<16x1xf32>,
    return
  }
  func.func @transform_0(%arg0: i32) -> (i32, i32, i32, i32, i32) {
    %c0_i32 = arith.constant 0 : i32
    %c0_i32_0 = arith.constant 0 : i32
    %c0_i32_1 = arith.constant 0 : i32
    %c0_i32_2 = arith.constant 0 : i32
    %c0_i32_3 = arith.constant 0 : i32
    return %arg0, %c0_i32, %c0_i32_0, %c0_i32_1, %c0_i32_2 : i32, i32, i32, i32, i32
  }
  func.func @transform_1(%arg0: i32) -> (i32, i32) {
    %c0_i32 = arith.constant 0 : i32
    %c0_i32_0 = arith.constant 0 : i32
    %c0_i32_1 = arith.constant 0 : i32
    return %c0_i32, %c0_i32_0 : i32, i32
  }
  func.func @transform_2(%arg0: i32) -> (i32, i32) {
    %c0_i32 = arith.constant 0 : i32
    %c0_i32_0 = arith.constant 0 : i32
    %c0_i32_1 = arith.constant 0 : i32
    return %c0_i32, %c0_i32_0 : i32, i32
  }
  func.func @transform_3(%arg0: i32) -> (i32, i32) {
    %c0_i32 = arith.constant 0 : i32
    %c0_i32_0 = arith.constant 0 : i32
    %c0_i32_1 = arith.constant 0 : i32
    return %c0_i32, %c0_i32_0 : i32, i32
  }
  func.func @transform_4(%arg0: i32) -> (i32, i32) {
    %c0_i32 = arith.constant 0 : i32
    %c0_i32_0 = arith.constant 0 : i32
    %c0_i32_1 = arith.constant 0 : i32
    return %c0_i32, %c0_i32_0 : i32, i32
  }
  func.func @transform_5(%arg0: i32) -> (i32, i32) {
    %c0_i32 = arith.constant 0 : i32
    %c0_i32_0 = arith.constant 0 : i32
    %c0_i32_1 = arith.constant 0 : i32
    return %c0_i32, %c0_i32_0 : i32, i32
  }
  func.func @transform_6(%arg0: i32) -> (i32, i32) {
    %c0_i32 = arith.constant 0 : i32
    %c0_i32_0 = arith.constant 0 : i32
    %c0_i32_1 = arith.constant 0 : i32
    return %c0_i32, %c0_i32_0 : i32, i32
  }
  func.func @transform_7(%arg0: i32) -> (i32, i32, i32, i32) {
    %c0_i32 = arith.constant 0 : i32
    %c0_i32_0 = arith.constant 0 : i32
    %c0_i32_1 = arith.constant 0 : i32
    %c0_i32_2 = arith.constant 0 : i32
    %c0_i32_3 = arith.constant 0 : i32
    return %c0_i32, %c0_i32_0, %c0_i32_1, %c0_i32_2 : i32, i32, i32, i32
  }
  func.func @transform_8(%arg0: i32) -> (i32, i32) {
    %c0_i32 = arith.constant 0 : i32
    %c0_i32_0 = arith.constant 0 : i32
    %c0_i32_1 = arith.constant 0 : i32
    return %c0_i32, %c0_i32_0 : i32, i32
  }
  func.func @transform_9(%arg0: i32) -> (i32, i32) {
    %c0_i32 = arith.constant 0 : i32
    %c0_i32_0 = arith.constant 0 : i32
    return %arg0, %c0_i32 : i32, i32
  }
}

</mosaic_0001>

<llo_original>
// kernel: simple_discriminator_forward.1
$region0: #{simple_discriminator_forward.1}
  #allocation0 [shape = 'u32[]', space=smem, size = 0x4, offset = 0x4, fixed_abs, tag = 'smem constant byte address 0x4 - core index']
  #allocation1 [shape = 'u32[144,128]{1,0:T(1,128)}', space=vmem, size = 0x12000, scoped, tag = 'internal scratch']
  #allocation2 [shape = 'bf16[18,18,16,16]{3,2,1,0:T(8,128)(2,1)}', space=vmem, size = 0x144000, scoped, tag = 'scratch operand']
  #allocation3 [shape = 'bf16[10,10,16,32]{3,2,1,0:T(8,128)(2,1)}', space=vmem, size = 0x64000, scoped, tag = 'scratch operand']
  #allocation4 [shape = 'f32[1,1]{1,0:T(1,128)S(1)}', space=vmem, size = 0x200, scoped, tag = 'scoped memory for simple_discriminator_forward.1']
  %s0 = inlined_call_operand.vmem [shape: bf16[1,34,34,16,3], index: 0, kind: input, shape index: {}]
  %s1 = inlined_call_operand.vmem [shape: bf16[27,16], index: 1, kind: input, shape index: {}]
  %s2 = inlined_call_operand.vmem [shape: f32[1,16], index: 2, kind: input, shape index: {}]
  %s3 = inlined_call_operand.vmem [shape: bf16[144,32], index: 3, kind: input, shape index: {}]
  %s4 = inlined_call_operand.vmem [shape: f32[1,32], index: 4, kind: input, shape index: {}]
  %s5 = inlined_call_operand.vmem [shape: bf16[288,64], index: 5, kind: input, shape index: {}]
  %s6 = inlined_call_operand.vmem [shape: f32[1,64], index: 6, kind: input, shape index: {}]
  %s7 = inlined_call_operand.vmem [shape: f32[4,4,1,64], index: 7, kind: input, shape index: {}]
  %s8 = inlined_call_operand.<no memory space> [shape: f32[1,1], index: 8, kind: input, shape index: {}]
  %s9 = inlined_call_operand.vmem [shape: f32[16,1], index: 9, kind: output, shape index: {}]
  %s10 = sld [smem:[#allocation0]]
  $region60: #{simple_discriminator_forward.1} parent=0
    _
  %s12 = ssub.s32 1, %s10
  %s13 = scalar_select 0, %s12, %s10
  %v14 = vstv %s8
  %15 = vst [vmem:[#allocation4] sm:$0x1] %v14
  // Predicated region
  $region2: #{simple_discriminator_forward.1} parent=0 // pred_check
    _
  $region3: #{simple_discriminator_forward.1} parent=0 // pred_check_branch
    %17 = sbr.rel (0) target = $region5
  $region4: #{simple_discriminator_forward.1} parent=0 // pred_region
    _
  $region5: #{simple_discriminator_forward.1} parent=0 // pred_fallthru
    _
  // Predicated region
  $region6: #{simple_discriminator_forward.1} parent=0 // pred_check
    _
  $region7: #{simple_discriminator_forward.1} parent=0 // pred_check_branch
    %19 = sbr.rel (0) target = $region9
  $region8: #{simple_discriminator_forward.1} parent=0 // pred_region
    _
  $region9: #{simple_discriminator_forward.1} parent=0 // pred_fallthru
    _
  // Predicated region
  $region10: #{simple_discriminator_forward.1} parent=0 // pred_check
    _
  $region11: #{simple_discriminator_forward.1} parent=0 // pred_check_branch
    %21 = sbr.rel (0) target = $region13
  $region12: #{simple_discriminator_forward.1} parent=0 // pred_region
    _
  $region13: #{simple_discriminator_forward.1} parent=0 // pred_fallthru
    _
  // Predicated region
  $region14: #{simple_discriminator_forward.1} parent=0 // pred_check
    _
  $region15: #{simple_discriminator_forward.1} parent=0 // pred_check_branch
    %23 = sbr.rel (0) target = $region17
  $region16: #{simple_discriminator_forward.1} parent=0 // pred_region
    _
  $region17: #{simple_discriminator_forward.1} parent=0 // pred_fallthru
    _
  // Predicated region
  $region18: #{simple_discriminator_forward.1} parent=0 // pred_check
    _
  $region19: #{simple_discriminator_forward.1} parent=0 // pred_check_branch
    %25 = sbr.rel (0) target = $region21
  $region20: #{simple_discriminator_forward.1} parent=0 // pred_region
    _
  $region21: #{simple_discriminator_forward.1} parent=0 // pred_fallthru
    _
  // Predicated region
  $region22: #{simple_discriminator_forward.1} parent=0 // pred_check
    _
  $region23: #{simple_discriminator_forward.1} parent=0 // pred_check_branch
    %27 = sbr.rel (0) target = $region25
  $region24: #{simple_discriminator_forward.1} parent=0 // pred_region
    _
  $region25: #{simple_discriminator_forward.1} parent=0 // pred_fallthru
    _
  // Predicated region
  $region26: #{simple_discriminator_forward.1} parent=0 // pred_check
    _
  $region27: #{simple_discriminator_forward.1} parent=0 // pred_check_branch
    %29 = sbr.rel (0) target = $region29
  $region28: #{simple_discriminator_forward.1} parent=0 // pred_region
    _
  $region29: #{simple_discriminator_forward.1} parent=0 // pred_fallthru
    _
  // Predicated region
  $region30: #{simple_discriminator_forward.1} parent=0 // pred_check
    _
  $region31: #{simple_discriminator_forward.1} parent=0 // pred_check_branch
    %31 = sbr.rel (0) target = $region33
  $region32: #{simple_discriminator_forward.1} parent=0 // pred_region
    _
  $region33: #{simple_discriminator_forward.1} parent=0 // pred_fallthru
    _
  // Predicated region
  $region34: #{simple_discriminator_forward.1} parent=0 // pred_check
    _
  $region35: #{simple_discriminator_forward.1} parent=0 // pred_check_branch
    %33 = sbr.rel (0) target = $region37
  $region36: #{simple_discriminator_forward.1} parent=0 // pred_region
    _
  $region37: #{simple_discriminator_forward.1} parent=0 // pred_fallthru
    _
  %vm35 = vcmask 125952
  %36 = vst.msk [vmem:[#allocation2] sm:$0xf] %vm35, 0
  %37 = vst.msk [vmem:[#allocation2 + $0x4] sm:$0xf] %vm35, 0
  %38 = vst.msk [vmem:[#allocation2 + $0x8] sm:$0xf] %vm35, 0
  %39 = vst.msk [vmem:[#allocation2 + $0xc] sm:$0xf] %vm35, 0
  %40 = vst.msk [vmem:[#allocation2 + $0x10] sm:$0xf] %vm35, 0
  %41 = vst.msk [vmem:[#allocation2 + $0x14] sm:$0xf] %vm35, 0
  %42 = vst.msk [vmem:[#allocation2 + $0x18] sm:$0xf] %vm35, 0
  %43 = vst.msk [vmem:[#allocation2 + $0x1c] sm:$0xf] %vm35, 0
  %44 = vst.msk [vmem:[#allocation2 + $0x20] sm:$0xf] %vm35, 0
  %45 = vst.msk [vmem:[#allocation2 + $0x24] sm:$0xf] %vm35, 0
  %46 = vst.msk [vmem:[#allocation2 + $0x28] sm:$0xf] %vm35, 0
  %47 = vst.msk [vmem:[#allocation2 + $0x2c] sm:$0xf] %vm35, 0
  %48 = vst.msk [vmem:[#allocation2 + $0x30] sm:$0xf] %vm35, 0
  %49 = vst.msk [vmem:[#allocation2 + $0x34] sm:$0xf] %vm35, 0
  %50 = vst.msk [vmem:[#allocation2 + $0x38] sm:$0xf] %vm35, 0
  %51 = vst.msk [vmem:[#allocation2 + $0x3c] sm:$0xf] %vm35, 0
  %52 = vst.msk [vmem:[#allocation2 + $0x40] sm:$0xf] %vm35, 0
  %53 = vst.msk [vmem:[#allocation2 + $0x44] sm:$0xf] %vm35, 0
  %54 = vst.msk [vmem:[#allocation2 + $0x48] sm:$0xf] %vm35, 0
  %55 = vst.msk [vmem:[#allocation2 + $0x4c] sm:$0xf] %vm35, 0
  %56 = vst.msk [vmem:[#allocation2 + $0x50] sm:$0xf] %vm35, 0
  %57 = vst.msk [vmem:[#allocation2 + $0x54] sm:$0xf] %vm35, 0
  %58 = vst.msk [vmem:[#allocation2 + $0x58] sm:$0xf] %vm35, 0
  %59 = vst.msk [vmem:[#allocation2 + $0x5c] sm:$0xf] %vm35, 0
  %60 = vst.msk [vmem:[#allocation2 + $0x60] sm:$0xf] %vm35, 0
  %61 = vst.msk [vmem:[#allocation2 + $0x64] sm:$0xf] %vm35, 0
  %62 = vst.msk [vmem:[#allocation2 + $0x68] sm:$0xf] %vm35, 0
  %63 = vst.msk [vmem:[#allocation2 + $0x6c] sm:$0xf] %vm35, 0
  %64 = vst.msk [vmem:[#allocation2 + $0x70] sm:$0xf] %vm35, 0
  %65 = vst.msk [vmem:[#allocation2 + $0x74] sm:$0xf] %vm35, 0
  %66 = vst.msk [vmem:[#allocation2 + $0x78] sm:$0xf] %vm35, 0
  %67 = vst.msk [vmem:[#allocation2 + $0x7c] sm:$0xf] %vm35, 0
  %68 = vst.msk [vmem:[#allocation2 + $0x80] sm:$0xf] %vm35, 0
  %69 = vst.msk [vmem:[#allocation2 + $0x84] sm:$0xf] %vm35, 0
  %70 = vst.msk [vmem:[#allocation2 + $0x88] sm:$0xf] %vm35, 0
  %71 = vst.msk [vmem:[#allocation2 + $0x8c] sm:$0xf] %vm35, 0
  %s72 = scalar_lea.vmem [#allocation2], 2448
  %73 = vst.msk [vmem:[%s72] sm:$0xf] %vm35, 0
  %74 = vst.msk [vmem:[%s72 + $0x4] sm:$0xf] %vm35, 0
  %75 = vst.msk [vmem:[%s72 + $0x8] sm:$0xf] %vm35, 0
  %76 = vst.msk [vmem:[%s72 + $0xc] sm:$0xf] %vm35, 0
  %77 = vst.msk [vmem:[%s72 + $0x10] sm:$0xf] %vm35, 0
  %78 = vst.msk [vmem:[%s72 + $0x14] sm:$0xf] %vm35, 0
  %79 = vst.msk [vmem:[%s72 + $0x18] sm:$0xf] %vm35, 0
  %80 = vst.msk [vmem:[%s72 + $0x1c] sm:$0xf] %vm35, 0
  %81 = vst.msk [vmem:[%s72 + $0x20] sm:$0xf] %vm35, 0
  %82 = vst.msk [vmem:[%s72 + $0x24] sm:$0xf] %vm35, 0
  %83 = vst.msk [vmem:[%s72 + $0x28] sm:$0xf] %vm35, 0
  %84 = vst.msk [vmem:[%s72 + $0x2c] sm:$0xf] %vm35, 0
  %85 = vst.msk [vmem:[%s72 + $0x30] sm:$0xf] %vm35, 0
  %86 = vst.msk [vmem:[%s72 + $0x34] sm:$0xf] %vm35, 0
  %87 = vst.msk [vmem:[%s72 + $0x38] sm:$0xf] %vm35, 0
  %88 = vst.msk [vmem:[%s72 + $0x3c] sm:$0xf] %vm35, 0
  %89 = vst.msk [vmem:[%s72 + $0x40] sm:$0xf] %vm35, 0
  %90 = vst.msk [vmem:[%s72 + $0x44] sm:$0xf] %vm35, 0
  %91 = vst.msk [vmem:[%s72 + $0x48] sm:$0xf] %vm35, 0
  %92 = vst.msk [vmem:[%s72 + $0x4c] sm:$0xf] %vm35, 0
  %93 = vst.msk [vmem:[%s72 + $0x50] sm:$0xf] %vm35, 0
  %94 = vst.msk [vmem:[%s72 + $0x54] sm:$0xf] %vm35, 0
  %95 = vst.msk [vmem:[%s72 + $0x58] sm:$0xf] %vm35, 0
  %96 = vst.msk [vmem:[%s72 + $0x5c] sm:$0xf] %vm35, 0
  %97 = vst.msk [vmem:[%s72 + $0x60] sm:$0xf] %vm35, 0
  %98 = vst.msk [vmem:[%s72 + $0x64] sm:$0xf] %vm35, 0
  %99 = vst.msk [vmem:[%s72 + $0x68] sm:$0xf] %vm35, 0
  %100 = vst.msk [vmem:[%s72 + $0x6c] sm:$0xf] %vm35, 0
  %101 = vst.msk [vmem:[%s72 + $0x70] sm:$0xf] %vm35, 0
  %102 = vst.msk [vmem:[%s72 + $0x74] sm:$0xf] %vm35, 0
  %103 = vst.msk [vmem:[%s72 + $0x78] sm:$0xf] %vm35, 0
  %104 = vst.msk [vmem:[%s72 + $0x7c] sm:$0xf] %vm35, 0
  %105 = vst.msk [vmem:[%s72 + $0x80] sm:$0xf] %vm35, 0
  %106 = vst.msk [vmem:[%s72 + $0x84] sm:$0xf] %vm35, 0
  %107 = vst.msk [vmem:[%s72 + $0x88] sm:$0xf] %vm35, 0
  %108 = vst.msk [vmem:[%s72 + $0x8c] sm:$0xf] %vm35, 0
  %109 = vst.msk [vmem:[#allocation2] sm:$0xf] %vm35, 0
  %110 = vst.msk [vmem:[#allocation2 + $0x4] sm:$0xf] %vm35, 0
  %111 = vst.msk [vmem:[#allocation2 + $0x90] sm:$0xf] %vm35, 0
  %112 = vst.msk [vmem:[#allocation2 + $0x94] sm:$0xf] %vm35, 0
  %113 = vst.msk [vmem:[#allocation2 + $0x120] sm:$0xf] %vm35, 0
  %114 = vst.msk [vmem:[#allocation2 + $0x124] sm:$0xf] %vm35, 0
  %115 = vst.msk [vmem:[#allocation2 + $0x1b0] sm:$0xf] %vm35, 0
  %116 = vst.msk [vmem:[#allocation2 + $0x1b4] sm:$0xf] %vm35, 0
  %117 = vst.msk [vmem:[#allocation2 + $0x240] sm:$0xf] %vm35, 0
  %118 = vst.msk [vmem:[#allocation2 + $0x244] sm:$0xf] %vm35, 0
  %119 = vst.msk [vmem:[#allocation2 + $0x2d0] sm:$0xf] %vm35, 0
  %120 = vst.msk [vmem:[#allocation2 + $0x2d4] sm:$0xf] %vm35, 0
  %121 = vst.msk [vmem:[#allocation2 + $0x360] sm:$0xf] %vm35, 0
  %122 = vst.msk [vmem:[#allocation2 + $0x364] sm:$0xf] %vm35, 0
  %123 = vst.msk [vmem:[#allocation2 + $0x3f0] sm:$0xf] %vm35, 0
  %124 = vst.msk [vmem:[#allocation2 + $0x3f4] sm:$0xf] %vm35, 0
  %125 = vst.msk [vmem:[#allocation2 + $0x480] sm:$0xf] %vm35, 0
  %126 = vst.msk [vmem:[#allocation2 + $0x484] sm:$0xf] %vm35, 0
  %127 = vst.msk [vmem:[#allocation2 + $0x510] sm:$0xf] %vm35, 0
  %128 = vst.msk [vmem:[#allocation2 + $0x514] sm:$0xf] %vm35, 0
  %129 = vst.msk [vmem:[#allocation2 + $0x5a0] sm:$0xf] %vm35, 0
  %130 = vst.msk [vmem:[#allocation2 + $0x5a4] sm:$0xf] %vm35, 0
  %131 = vst.msk [vmem:[#allocation2 + $0x630] sm:$0xf] %vm35, 0
  %132 = vst.msk [vmem:[#allocation2 + $0x634] sm:$0xf] %vm35, 0
  %133 = vst.msk [vmem:[#allocation2 + $0x6c0] sm:$0xf] %vm35, 0
  %134 = vst.msk [vmem:[#allocation2 + $0x6c4] sm:$0xf] %vm35, 0
  %135 = vst.msk [vmem:[#allocation2 + $0x750] sm:$0xf] %vm35, 0
  %136 = vst.msk [vmem:[#allocation2 + $0x754] sm:$0xf] %vm35, 0
  %137 = vst.msk [vmem:[#allocation2 + $0x7e0] sm:$0xf] %vm35, 0
  %138 = vst.msk [vmem:[#allocation2 + $0x7e4] sm:$0xf] %vm35, 0
  %139 = vst.msk [vmem:[#allocation2 + $0x870] sm:$0xf] %vm35, 0
  %140 = vst.msk [vmem:[#allocation2 + $0x874] sm:$0xf] %vm35, 0
  %141 = vst.msk [vmem:[#allocation2 + $0x900] sm:$0xf] %vm35, 0
  %142 = vst.msk [vmem:[#allocation2 + $0x904] sm:$0xf] %vm35, 0
  %143 = vst.msk [vmem:[#allocation2 + $0x990] sm:$0xf] %vm35, 0
  %144 = vst.msk [vmem:[#allocation2 + $0x994] sm:$0xf] %vm35, 0
  %s145 = scalar_lea.vmem [#allocation2], 136
  %146 = vst.msk [vmem:[%s145] sm:$0xf] %vm35, 0
  %147 = vst.msk [vmem:[%s145 + $0x4] sm:$0xf] %vm35, 0
  %148 = vst.msk [vmem:[%s145 + $0x90] sm:$0xf] %vm35, 0
  %149 = vst.msk [vmem:[%s145 + $0x94] sm:$0xf] %vm35, 0
  %150 = vst.msk [vmem:[%s145 + $0x120] sm:$0xf] %vm35, 0
  %151 = vst.msk [vmem:[%s145 + $0x124] sm:$0xf] %vm35, 0
  %152 = vst.msk [vmem:[%s145 + $0x1b0] sm:$0xf] %vm35, 0
  %153 = vst.msk [vmem:[%s145 + $0x1b4] sm:$0xf] %vm35, 0
  %154 = vst.msk [vmem:[%s145 + $0x240] sm:$0xf] %vm35, 0
  %155 = vst.msk [vmem:[%s145 + $0x244] sm:$0xf] %vm35, 0
  %156 = vst.msk [vmem:[%s145 + $0x2d0] sm:$0xf] %vm35, 0
  %157 = vst.msk [vmem:[%s145 + $0x2d4] sm:$0xf] %vm35, 0
  %158 = vst.msk [vmem:[%s145 + $0x360] sm:$0xf] %vm35, 0
  %159 = vst.msk [vmem:[%s145 + $0x364] sm:$0xf] %vm35, 0
  %160 = vst.msk [vmem:[%s145 + $0x3f0] sm:$0xf] %vm35, 0
  %161 = vst.msk [vmem:[%s145 + $0x3f4] sm:$0xf] %vm35, 0
  %162 = vst.msk [vmem:[%s145 + $0x480] sm:$0xf] %vm35, 0
  %163 = vst.msk [vmem:[%s145 + $0x484] sm:$0xf] %vm35, 0
  %164 = vst.msk [vmem:[%s145 + $0x510] sm:$0xf] %vm35, 0
  %165 = vst.msk [vmem:[%s145 + $0x514] sm:$0xf] %vm35, 0
  %166 = vst.msk [vmem:[%s145 + $0x5a0] sm:$0xf] %vm35, 0
  %167 = vst.msk [vmem:[%s145 + $0x5a4] sm:$0xf] %vm35, 0
  %168 = vst.msk [vmem:[%s145 + $0x630] sm:$0xf] %vm35, 0
  %169 = vst.msk [vmem:[%s145 + $0x634] sm:$0xf] %vm35, 0
  %170 = vst.msk [vmem:[%s145 + $0x6c0] sm:$0xf] %vm35, 0
  %171 = vst.msk [vmem:[%s145 + $0x6c4] sm:$0xf] %vm35, 0
  %172 = vst.msk [vmem:[%s145 + $0x750] sm:$0xf] %vm35, 0
  %173 = vst.msk [vmem:[%s145 + $0x754] sm:$0xf] %vm35, 0
  %174 = vst.msk [vmem:[%s145 + $0x7e0] sm:$0xf] %vm35, 0
  %175 = vst.msk [vmem:[%s145 + $0x7e4] sm:$0xf] %vm35, 0
  %176 = vst.msk [vmem:[%s145 + $0x870] sm:$0xf] %vm35, 0
  %177 = vst.msk [vmem:[%s145 + $0x874] sm:$0xf] %vm35, 0
  %178 = vst.msk [vmem:[%s145 + $0x900] sm:$0xf] %vm35, 0
  %179 = vst.msk [vmem:[%s145 + $0x904] sm:$0xf] %vm35, 0
  %180 = vst.msk [vmem:[%s145 + $0x990] sm:$0xf] %vm35, 0
  %181 = vst.msk [vmem:[%s145 + $0x994] sm:$0xf] %vm35, 0
  %v182 = vld [vmem:[%s2] sm:$0x1]
  loop: start=0, step=1, limit=16
  $region38: #{simple_discriminator_forward.1} parent=0 // loop_pre_header
    _
  $region39: #{simple_discriminator_forward.1} parent=0 // loop_header
    %s184 = sphi 0, %s188
    %p185 = scmp.ge.s32.totalorder %s184, 16
  $region40: #{simple_discriminator_forward.1} parent=0 // loop_header_branch
    %187 = sbr.rel (%p185) target = $region44
  $region41: #{simple_discriminator_forward.1} parent=0 // loop_body
    %s189 = smul.u32 %s184, 2
    %s190 = smul.u32 %s189, 68
    %s191 = smul.addr %s190, 4
    %s192 = scalar_lea.vmem %s0, %s191
    %v193 = vld [vmem:[%s192] sm:$0xf]
    %v194 = vld [vmem:[%s192 + $0x4] sm:$0xf]
    %v195 = vld [vmem:[%s192 + $0x8] sm:$0xf]
    %v196 = vld [vmem:[%s192 + $0xc] sm:$0xf]
    %v197 = vld [vmem:[%s192 + $0x10] sm:$0xf]
    %v198 = vld [vmem:[%s192 + $0x14] sm:$0xf]
    %v199 = vld [vmem:[%s192 + $0x18] sm:$0xf]
    %v200 = vld [vmem:[%s192 + $0x1c] sm:$0xf]
    %v201 = vld [vmem:[%s192 + $0x20] sm:$0xf]
    %v202 = vld [vmem:[%s192 + $0x24] sm:$0xf]
    %v203 = vld [vmem:[%s192 + $0x28] sm:$0xf]
    %v204 = vld [vmem:[%s192 + $0x2c] sm:$0xf]
    %v205 = vld [vmem:[%s192 + $0x30] sm:$0xf]
    %v206 = vld [vmem:[%s192 + $0x34] sm:$0xf]
    %v207 = vld [vmem:[%s192 + $0x38] sm:$0xf]
    %v208 = vld [vmem:[%s192 + $0x3c] sm:$0xf]
    %v209 = vld [vmem:[%s192 + $0x40] sm:$0xf]
    %v210 = vld [vmem:[%s192 + $0x44] sm:$0xf]
    %v211 = vld [vmem:[%s192 + $0x48] sm:$0xf]
    %v212 = vld [vmem:[%s192 + $0x4c] sm:$0xf]
    %v213 = vld [vmem:[%s192 + $0x50] sm:$0xf]
    %v214 = vld [vmem:[%s192 + $0x54] sm:$0xf]
    %v215 = vld [vmem:[%s192 + $0x58] sm:$0xf]
    %v216 = vld [vmem:[%s192 + $0x5c] sm:$0xf]
    %v217 = vld [vmem:[%s192 + $0x60] sm:$0xf]
    %v218 = vld [vmem:[%s192 + $0x64] sm:$0xf]
    %v219 = vld [vmem:[%s192 + $0x68] sm:$0xf]
    %v220 = vld [vmem:[%s192 + $0x6c] sm:$0xf]
    %v221 = vld [vmem:[%s192 + $0x70] sm:$0xf]
    %v222 = vld [vmem:[%s192 + $0x74] sm:$0xf]
    %v223 = vld [vmem:[%s192 + $0x78] sm:$0xf]
    %v224 = vld [vmem:[%s192 + $0x7c] sm:$0xf]
    %v225 = vld [vmem:[%s192 + $0x80] sm:$0xf]
    %v226 = vld [vmem:[%s192 + $0x84] sm:$0xf]
    %v227 = vld [vmem:[%s192 + $0x88] sm:$0xf]
    %v228 = vld [vmem:[%s192 + $0x8c] sm:$0xf]
    %v229 = vld [vmem:[%s192 + $0x90] sm:$0xf]
    %v230 = vld [vmem:[%s192 + $0x94] sm:$0xf]
    %v231 = vld [vmem:[%s192 + $0x98] sm:$0xf]
    %v232 = vld [vmem:[%s192 + $0x9c] sm:$0xf]
    %v233 = vld [vmem:[%s192 + $0xa0] sm:$0xf]
    %v234 = vld [vmem:[%s192 + $0xa4] sm:$0xf]
    %v235 = vld [vmem:[%s192 + $0xa8] sm:$0xf]
    %v236 = vld [vmem:[%s192 + $0xac] sm:$0xf]
    %v237 = vld [vmem:[%s192 + $0xb0] sm:$0xf]
    %v238 = vld [vmem:[%s192 + $0xb4] sm:$0xf]
    %v239 = vld [vmem:[%s192 + $0xb8] sm:$0xf]
    %v240 = vld [vmem:[%s192 + $0xbc] sm:$0xf]
    %v241 = vld [vmem:[%s192 + $0xc0] sm:$0xf]
    %v242 = vld [vmem:[%s192 + $0xc4] sm:$0xf]
    %v243 = vld [vmem:[%s192 + $0xc8] sm:$0xf]
    %v244 = vld [vmem:[%s192 + $0xcc] sm:$0xf]
    %v245 = vld [vmem:[%s192 + $0xd0] sm:$0xf]
    %v246 = vld [vmem:[%s192 + $0xd4] sm:$0xf]
    %v247 = vld [vmem:[%s192 + $0xd8] sm:$0xf]
    %v248 = vld [vmem:[%s192 + $0xdc] sm:$0xf]
    %v249 = vld [vmem:[%s192 + $0xe0] sm:$0xf]
    %v250 = vld [vmem:[%s192 + $0xe4] sm:$0xf]
    %v251 = vld [vmem:[%s192 + $0xe8] sm:$0xf]
    %v252 = vld [vmem:[%s192 + $0xec] sm:$0xf]
    %v253 = vld [vmem:[%s192 + $0xf0] sm:$0xf]
    %v254 = vld [vmem:[%s192 + $0xf4] sm:$0xf]
    %v255 = vld [vmem:[%s192 + $0xf8] sm:$0xf]
    %v256 = vld [vmem:[%s192 + $0xfc] sm:$0xf]
    %v257 = vld [vmem:[%s192 + $0x100] sm:$0xf]
    %v258 = vld [vmem:[%s192 + $0x104] sm:$0xf]
    %s259 = sadd.s32 %s189, 1
    %s260 = smul.u32 %s259, 68
    %s261 = smul.addr %s260, 4
    %s262 = scalar_lea.vmem %s0, %s261
    %v263 = vld [vmem:[%s262] sm:$0xf]
    %v264 = vld [vmem:[%s262 + $0x4] sm:$0xf]
    %v265 = vld [vmem:[%s262 + $0x8] sm:$0xf]
    %v266 = vld [vmem:[%s262 + $0xc] sm:$0xf]
    %v267 = vld [vmem:[%s262 + $0x10] sm:$0xf]
    %v268 = vld [vmem:[%s262 + $0x14] sm:$0xf]
    %v269 = vld [vmem:[%s262 + $0x18] sm:$0xf]
    %v270 = vld [vmem:[%s262 + $0x1c] sm:$0xf]
    %v271 = vld [vmem:[%s262 + $0x20] sm:$0xf]
    %v272 = vld [vmem:[%s262 + $0x24] sm:$0xf]
    %v273 = vld [vmem:[%s262 + $0x28] sm:$0xf]
    %v274 = vld [vmem:[%s262 + $0x2c] sm:$0xf]
    %v275 = vld [vmem:[%s262 + $0x30] sm:$0xf]
    %v276 = vld [vmem:[%s262 + $0x34] sm:$0xf]
    %v277 = vld [vmem:[%s262 + $0x38] sm:$0xf]
    %v278 = vld [vmem:[%s262 + $0x3c] sm:$0xf]
    %v279 = vld [vmem:[%s262 + $0x40] sm:$0xf]
    %v280 = vld [vmem:[%s262 + $0x44] sm:$0xf]
    %v281 = vld [vmem:[%s262 + $0x48] sm:$0xf]
    %v282 = vld [vmem:[%s262 + $0x4c] sm:$0xf]
    %v283 = vld [vmem:[%s262 + $0x50] sm:$0xf]
    %v284 = vld [vmem:[%s262 + $0x54] sm:$0xf]
    %v285 = vld [vmem:[%s262 + $0x58] sm:$0xf]
    %v286 = vld [vmem:[%s262 + $0x5c] sm:$0xf]
    %v287 = vld [vmem:[%s262 + $0x60] sm:$0xf]
    %v288 = vld [vmem:[%s262 + $0x64] sm:$0xf]
    %v289 = vld [vmem:[%s262 + $0x68] sm:$0xf]
    %v290 = vld [vmem:[%s262 + $0x6c] sm:$0xf]
    %v291 = vld [vmem:[%s262 + $0x70] sm:$0xf]
    %v292 = vld [vmem:[%s262 + $0x74] sm:$0xf]
    %v293 = vld [vmem:[%s262 + $0x78] sm:$0xf]
    %v294 = vld [vmem:[%s262 + $0x7c] sm:$0xf]
    %v295 = vld [vmem:[%s262 + $0x80] sm:$0xf]
    %v296 = vld [vmem:[%s262 + $0x84] sm:$0xf]
    %v297 = vld [vmem:[%s262 + $0x88] sm:$0xf]
    %v298 = vld [vmem:[%s262 + $0x8c] sm:$0xf]
    %v299 = vld [vmem:[%s262 + $0x90] sm:$0xf]
    %v300 = vld [vmem:[%s262 + $0x94] sm:$0xf]
    %v301 = vld [vmem:[%s262 + $0x98] sm:$0xf]
    %v302 = vld [vmem:[%s262 + $0x9c] sm:$0xf]
    %v303 = vld [vmem:[%s262 + $0xa0] sm:$0xf]
    %v304 = vld [vmem:[%s262 + $0xa4] sm:$0xf]
    %v305 = vld [vmem:[%s262 + $0xa8] sm:$0xf]
    %v306 = vld [vmem:[%s262 + $0xac] sm:$0xf]
    %v307 = vld [vmem:[%s262 + $0xb0] sm:$0xf]
    %v308 = vld [vmem:[%s262 + $0xb4] sm:$0xf]
    %v309 = vld [vmem:[%s262 + $0xb8] sm:$0xf]
    %v310 = vld [vmem:[%s262 + $0xbc] sm:$0xf]
    %v311 = vld [vmem:[%s262 + $0xc0] sm:$0xf]
    %v312 = vld [vmem:[%s262 + $0xc4] sm:$0xf]
    %v313 = vld [vmem:[%s262 + $0xc8] sm:$0xf]
    %v314 = vld [vmem:[%s262 + $0xcc] sm:$0xf]
    %v315 = vld [vmem:[%s262 + $0xd0] sm:$0xf]
    %v316 = vld [vmem:[%s262 + $0xd4] sm:$0xf]
    %v317 = vld [vmem:[%s262 + $0xd8] sm:$0xf]
    %v318 = vld [vmem:[%s262 + $0xdc] sm:$0xf]
    %v319 = vld [vmem:[%s262 + $0xe0] sm:$0xf]
    %v320 = vld [vmem:[%s262 + $0xe4] sm:$0xf]
    %v321 = vld [vmem:[%s262 + $0xe8] sm:$0xf]
    %v322 = vld [vmem:[%s262 + $0xec] sm:$0xf]
    %v323 = vld [vmem:[%s262 + $0xf0] sm:$0xf]
    %v324 = vld [vmem:[%s262 + $0xf4] sm:$0xf]
    %v325 = vld [vmem:[%s262 + $0xf8] sm:$0xf]
    %v326 = vld [vmem:[%s262 + $0xfc] sm:$0xf]
    %v327 = vld [vmem:[%s262 + $0x100] sm:$0xf]
    %v328 = vld [vmem:[%s262 + $0x104] sm:$0xf]
    %s329 = sadd.s32 %s189, 2
    %s330 = smul.u32 %s329, 68
    %s331 = smul.addr %s330, 4
    %s332 = scalar_lea.vmem %s0, %s331
    %v333 = vld [vmem:[%s332] sm:$0xf]
    %v334 = vld [vmem:[%s332 + $0x4] sm:$0xf]
    %v335 = vld [vmem:[%s332 + $0x8] sm:$0xf]
    %v336 = vld [vmem:[%s332 + $0xc] sm:$0xf]
    %v337 = vld [vmem:[%s332 + $0x10] sm:$0xf]
    %v338 = vld [vmem:[%s332 + $0x14] sm:$0xf]
    %v339 = vld [vmem:[%s332 + $0x18] sm:$0xf]
    %v340 = vld [vmem:[%s332 + $0x1c] sm:$0xf]
    %v341 = vld [vmem:[%s332 + $0x20] sm:$0xf]
    %v342 = vld [vmem:[%s332 + $0x24] sm:$0xf]
    %v343 = vld [vmem:[%s332 + $0x28] sm:$0xf]
    %v344 = vld [vmem:[%s332 + $0x2c] sm:$0xf]
    %v345 = vld [vmem:[%s332 + $0x30] sm:$0xf]
    %v346 = vld [vmem:[%s332 + $0x34] sm:$0xf]
    %v347 = vld [vmem:[%s332 + $0x38] sm:$0xf]
    %v348 = vld [vmem:[%s332 + $0x3c] sm:$0xf]
    %v349 = vld [vmem:[%s332 + $0x40] sm:$0xf]
    %v350 = vld [vmem:[%s332 + $0x44] sm:$0xf]
    %v351 = vld [vmem:[%s332 + $0x48] sm:$0xf]
    %v352 = vld [vmem:[%s332 + $0x4c] sm:$0xf]
    %v353 = vld [vmem:[%s332 + $0x50] sm:$0xf]
    %v354 = vld [vmem:[%s332 + $0x54] sm:$0xf]
    %v355 = vld [vmem:[%s332 + $0x58] sm:$0xf]
    %v356 = vld [vmem:[%s332 + $0x5c] sm:$0xf]
    %v357 = vld [vmem:[%s332 + $0x60] sm:$0xf]
    %v358 = vld [vmem:[%s332 + $0x64] sm:$0xf]
    %v359 = vld [vmem:[%s332 + $0x68] sm:$0xf]
    %v360 = vld [vmem:[%s332 + $0x6c] sm:$0xf]
    %v361 = vld [vmem:[%s332 + $0x70] sm:$0xf]
    %v362 = vld [vmem:[%s332 + $0x74] sm:$0xf]
    %v363 = vld [vmem:[%s332 + $0x78] sm:$0xf]
    %v364 = vld [vmem:[%s332 + $0x7c] sm:$0xf]
    %v365 = vld [vmem:[%s332 + $0x80] sm:$0xf]
    %v366 = vld [vmem:[%s332 + $0x84] sm:$0xf]
    %v367 = vld [vmem:[%s332 + $0x88] sm:$0xf]
    %v368 = vld [vmem:[%s332 + $0x8c] sm:$0xf]
    %v369 = vld [vmem:[%s332 + $0x90] sm:$0xf]
    %v370 = vld [vmem:[%s332 + $0x94] sm:$0xf]
    %v371 = vld [vmem:[%s332 + $0x98] sm:$0xf]
    %v372 = vld [vmem:[%s332 + $0x9c] sm:$0xf]
    %v373 = vld [vmem:[%s332 + $0xa0] sm:$0xf]
    %v374 = vld [vmem:[%s332 + $0xa4] sm:$0xf]
    %v375 = vld [vmem:[%s332 + $0xa8] sm:$0xf]
    %v376 = vld [vmem:[%s332 + $0xac] sm:$0xf]
    %v377 = vld [vmem:[%s332 + $0xb0] sm:$0xf]
    %v378 = vld [vmem:[%s332 + $0xb4] sm:$0xf]
    %v379 = vld [vmem:[%s332 + $0xb8] sm:$0xf]
    %v380 = vld [vmem:[%s332 + $0xbc] sm:$0xf]
    %v381 = vld [vmem:[%s332 + $0xc0] sm:$0xf]
    %v382 = vld [vmem:[%s332 + $0xc4] sm:$0xf]
    %v383 = vld [vmem:[%s332 + $0xc8] sm:$0xf]
    %v384 = vld [vmem:[%s332 + $0xcc] sm:$0xf]
    %v385 = vld [vmem:[%s332 + $0xd0] sm:$0xf]
    %v386 = vld [vmem:[%s332 + $0xd4] sm:$0xf]
    %v387 = vld [vmem:[%s332 + $0xd8] sm:$0xf]
    %v388 = vld [vmem:[%s332 + $0xdc] sm:$0xf]
    %v389 = vld [vmem:[%s332 + $0xe0] sm:$0xf]
    %v390 = vld [vmem:[%s332 + $0xe4] sm:$0xf]
    %v391 = vld [vmem:[%s332 + $0xe8] sm:$0xf]
    %v392 = vld [vmem:[%s332 + $0xec] sm:$0xf]
    %v393 = vld [vmem:[%s332 + $0xf0] sm:$0xf]
    %v394 = vld [vmem:[%s332 + $0xf4] sm:$0xf]
    %v395 = vld [vmem:[%s332 + $0xf8] sm:$0xf]
    %v396 = vld [vmem:[%s332 + $0xfc] sm:$0xf]
    %v397 = vld [vmem:[%s332 + $0x100] sm:$0xf]
    %v398 = vld [vmem:[%s332 + $0x104] sm:$0xf]
    %v431 = vunpack.c.l.b16 %v193
    %v432 = vunpack.c.l.b16 %v194
    %v433 = vunpack.c.l.b16 %v197
    %v434 = vunpack.c.l.b16 %v198
    %v435 = vunpack.c.l.b16 %v201
    %v436 = vunpack.c.l.b16 %v202
    %v437 = vunpack.c.l.b16 %v205
    %v438 = vunpack.c.l.b16 %v206
    %v439 = vunpack.c.l.b16 %v209
    %v440 = vunpack.c.l.b16 %v210
    %v441 = vunpack.c.l.b16 %v213
    %v442 = vunpack.c.l.b16 %v214
    %v443 = vunpack.c.l.b16 %v217
    %v444 = vunpack.c.l.b16 %v218
    %v445 = vunpack.c.l.b16 %v221
    %v446 = vunpack.c.l.b16 %v222
    %v447 = vunpack.c.l.b16 %v225
    %v448 = vunpack.c.l.b16 %v226
    %v449 = vunpack.c.l.b16 %v229
    %v450 = vunpack.c.l.b16 %v230
    %v451 = vunpack.c.l.b16 %v233
    %v452 = vunpack.c.l.b16 %v234
    %v453 = vunpack.c.l.b16 %v237
    %v454 = vunpack.c.l.b16 %v238
    %v455 = vunpack.c.l.b16 %v241
    %v456 = vunpack.c.l.b16 %v242
    %v457 = vunpack.c.l.b16 %v245
    %v458 = vunpack.c.l.b16 %v246
    %v459 = vunpack.c.l.b16 %v249
    %v460 = vunpack.c.l.b16 %v250
    %v461 = vunpack.c.l.b16 %v253
    %v462 = vunpack.c.l.b16 %v254
    %v463 = vpack.c.b16 %v432, %v431
    %v464 = vpack.c.b16 %v434, %v433
    %v465 = vpack.c.b16 %v436, %v435
    %v466 = vpack.c.b16 %v438, %v437
    %v467 = vpack.c.b16 %v440, %v439
    %v468 = vpack.c.b16 %v442, %v441
    %v469 = vpack.c.b16 %v444, %v443
    %v470 = vpack.c.b16 %v446, %v445
    %v471 = vpack.c.b16 %v448, %v447
    %v472 = vpack.c.b16 %v450, %v449
    %v473 = vpack.c.b16 %v452, %v451
    %v474 = vpack.c.b16 %v454, %v453
    %v475 = vpack.c.b16 %v456, %v455
    %v476 = vpack.c.b16 %v458, %v457
    %v477 = vpack.c.b16 %v460, %v459
    %v478 = vpack.c.b16 %v462, %v461
    %v511 = vunpack.c.l.b16 %v195
    %v512 = vunpack.c.l.b16 %v196
    %v513 = vunpack.c.l.b16 %v199
    %v514 = vunpack.c.l.b16 %v200
    %v515 = vunpack.c.l.b16 %v203
    %v516 = vunpack.c.l.b16 %v204
    %v517 = vunpack.c.l.b16 %v207
    %v518 = vunpack.c.l.b16 %v208
    %v519 = vunpack.c.l.b16 %v211
    %v520 = vunpack.c.l.b16 %v212
    %v521 = vunpack.c.l.b16 %v215
    %v522 = vunpack.c.l.b16 %v216
    %v523 = vunpack.c.l.b16 %v219
    %v524 = vunpack.c.l.b16 %v220
    %v525 = vunpack.c.l.b16 %v223
    %v526 = vunpack.c.l.b16 %v224
    %v527 = vunpack.c.l.b16 %v227
    %v528 = vunpack.c.l.b16 %v228
    %v529 = vunpack.c.l.b16 %v231
    %v530 = vunpack.c.l.b16 %v232
    %v531 = vunpack.c.l.b16 %v235
    %v532 = vunpack.c.l.b16 %v236
    %v533 = vunpack.c.l.b16 %v239
    %v534 = vunpack.c.l.b16 %v240
    %v535 = vunpack.c.l.b16 %v243
    %v536 = vunpack.c.l.b16 %v244
    %v537 = vunpack.c.l.b16 %v247
    %v538 = vunpack.c.l.b16 %v248
    %v539 = vunpack.c.l.b16 %v251
    %v540 = vunpack.c.l.b16 %v252
    %v541 = vunpack.c.l.b16 %v255
    %v542 = vunpack.c.l.b16 %v256
    %v543 = vpack.c.b16 %v512, %v511
    %v544 = vpack.c.b16 %v514, %v513
    %v545 = vpack.c.b16 %v516, %v515
    %v546 = vpack.c.b16 %v518, %v517
    %v547 = vpack.c.b16 %v520, %v519
    %v548 = vpack.c.b16 %v522, %v521
    %v549 = vpack.c.b16 %v524, %v523
    %v550 = vpack.c.b16 %v526, %v525
    %v551 = vpack.c.b16 %v528, %v527
    %v552 = vpack.c.b16 %v530, %v529
    %v553 = vpack.c.b16 %v532, %v531
    %v554 = vpack.c.b16 %v534, %v533
    %v555 = vpack.c.b16 %v536, %v535
    %v556 = vpack.c.b16 %v538, %v537
    %v557 = vpack.c.b16 %v540, %v539
    %v558 = vpack.c.b16 %v542, %v541
    %559 = vrot.lane.b32.xlu0 %v543, 3
    %v560 = vpop.permute.xlu0 %559
    %561 = vrot.lane.b32.xlu0 %v544, 3
    %v562 = vpop.permute.xlu0 %561
    %563 = vrot.lane.b32.xlu0 %v545, 3
    %v564 = vpop.permute.xlu0 %563
    %565 = vrot.lane.b32.xlu0 %v546, 3
    %v566 = vpop.permute.xlu0 %565
    %567 = vrot.lane.b32.xlu0 %v547, 3
    %v568 = vpop.permute.xlu0 %567
    %569 = vrot.lane.b32.xlu0 %v548, 3
    %v570 = vpop.permute.xlu0 %569
    %571 = vrot.lane.b32.xlu0 %v549, 3
    %v572 = vpop.permute.xlu0 %571
    %573 = vrot.lane.b32.xlu0 %v550, 3
    %v574 = vpop.permute.xlu0 %573
    %575 = vrot.lane.b32.xlu0 %v551, 3
    %v576 = vpop.permute.xlu0 %575
    %577 = vrot.lane.b32.xlu0 %v552, 3
    %v578 = vpop.permute.xlu0 %577
    %579 = vrot.lane.b32.xlu0 %v553, 3
    %v580 = vpop.permute.xlu0 %579
    %581 = vrot.lane.b32.xlu0 %v554, 3
    %v582 = vpop.permute.xlu0 %581
    %583 = vrot.lane.b32.xlu0 %v555, 3
    %v584 = vpop.permute.xlu0 %583
    %585 = vrot.lane.b32.xlu0 %v556, 3
    %v586 = vpop.permute.xlu0 %585
    %587 = vrot.lane.b32.xlu0 %v557, 3
    %v588 = vpop.permute.xlu0 %587
    %589 = vrot.lane.b32.xlu0 %v558, 3
    %v590 = vpop.permute.xlu0 %589
    %v593 = vunpack.c.l.b16 %v257
    %v594 = vunpack.c.l.b16 %v258
    %v595 = vpack.c.b16 %v594, %v593
    %596 = vrot.lane.b32.xlu0 %v464, 6
    %v597 = vpop.permute.xlu0 %596
    %598 = vrot.lane.b32.xlu0 %v465, 6
    %v599 = vpop.permute.xlu0 %598
    %600 = vrot.lane.b32.xlu0 %v466, 6
    %v601 = vpop.permute.xlu0 %600
    %602 = vrot.lane.b32.xlu0 %v467, 6
    %v603 = vpop.permute.xlu0 %602
    %604 = vrot.lane.b32.xlu0 %v468, 6
    %v605 = vpop.permute.xlu0 %604
    %606 = vrot.lane.b32.xlu0 %v469, 6
    %v607 = vpop.permute.xlu0 %606
    %608 = vrot.lane.b32.xlu0 %v470, 6
    %v609 = vpop.permute.xlu0 %608
    %610 = vrot.lane.b32.xlu0 %v471, 6
    %v611 = vpop.permute.xlu0 %610
    %612 = vrot.lane.b32.xlu0 %v472, 6
    %v613 = vpop.permute.xlu0 %612
    %614 = vrot.lane.b32.xlu0 %v473, 6
    %v615 = vpop.permute.xlu0 %614
    %616 = vrot.lane.b32.xlu0 %v474, 6
    %v617 = vpop.permute.xlu0 %616
    %618 = vrot.lane.b32.xlu0 %v475, 6
    %v619 = vpop.permute.xlu0 %618
    %620 = vrot.lane.b32.xlu0 %v476, 6
    %v621 = vpop.permute.xlu0 %620
    %622 = vrot.lane.b32.xlu0 %v477, 6
    %v623 = vpop.permute.xlu0 %622
    %624 = vrot.lane.b32.xlu0 %v478, 6
    %v625 = vpop.permute.xlu0 %624
    %626 = vrot.lane.b32.xlu0 %v595, 6
    %v627 = vpop.permute.xlu0 %626
    %v660 = vunpack.c.l.b16 %v263
    %v661 = vunpack.c.l.b16 %v264
    %v662 = vunpack.c.l.b16 %v267
    %v663 = vunpack.c.l.b16 %v268
    %v664 = vunpack.c.l.b16 %v271
    %v665 = vunpack.c.l.b16 %v272
    %v666 = vunpack.c.l.b16 %v275
    %v667 = vunpack.c.l.b16 %v276
    %v668 = vunpack.c.l.b16 %v279
    %v669 = vunpack.c.l.b16 %v280
    %v670 = vunpack.c.l.b16 %v283
    %v671 = vunpack.c.l.b16 %v284
    %v672 = vunpack.c.l.b16 %v287
    %v673 = vunpack.c.l.b16 %v288
    %v674 = vunpack.c.l.b16 %v291
    %v675 = vunpack.c.l.b16 %v292
    %v676 = vunpack.c.l.b16 %v295
    %v677 = vunpack.c.l.b16 %v296
    %v678 = vunpack.c.l.b16 %v299
    %v679 = vunpack.c.l.b16 %v300
    %v680 = vunpack.c.l.b16 %v303
    %v681 = vunpack.c.l.b16 %v304
    %v682 = vunpack.c.l.b16 %v307
    %v683 = vunpack.c.l.b16 %v308
    %v684 = vunpack.c.l.b16 %v311
    %v685 = vunpack.c.l.b16 %v312
    %v686 = vunpack.c.l.b16 %v315
    %v687 = vunpack.c.l.b16 %v316
    %v688 = vunpack.c.l.b16 %v319
    %v689 = vunpack.c.l.b16 %v320
    %v690 = vunpack.c.l.b16 %v323
    %v691 = vunpack.c.l.b16 %v324
    %v692 = vpack.c.b16 %v661, %v660
    %v693 = vpack.c.b16 %v663, %v662
    %v694 = vpack.c.b16 %v665, %v664
    %v695 = vpack.c.b16 %v667, %v666
    %v696 = vpack.c.b16 %v669, %v668
    %v697 = vpack.c.b16 %v671, %v670
    %v698 = vpack.c.b16 %v673, %v672
    %v699 = vpack.c.b16 %v675, %v674
    %v700 = vpack.c.b16 %v677, %v676
    %v701 = vpack.c.b16 %v679, %v678
    %v702 = vpack.c.b16 %v681, %v680
    %v703 = vpack.c.b16 %v683, %v682
    %v704 = vpack.c.b16 %v685, %v684
    %v705 = vpack.c.b16 %v687, %v686
    %v706 = vpack.c.b16 %v689, %v688
    %v707 = vpack.c.b16 %v691, %v690
    %708 = vrot.lane.b32.xlu0 %v692, 9
    %v709 = vpop.permute.xlu0 %708
    %710 = vrot.lane.b32.xlu0 %v693, 9
    %v711 = vpop.permute.xlu0 %710
    %712 = vrot.lane.b32.xlu0 %v694, 9
    %v713 = vpop.permute.xlu0 %712
    %714 = vrot.lane.b32.xlu0 %v695, 9
    %v715 = vpop.permute.xlu0 %714
    %716 = vrot.lane.b32.xlu0 %v696, 9
    %v717 = vpop.permute.xlu0 %716
    %718 = vrot.lane.b32.xlu0 %v697, 9
    %v719 = vpop.permute.xlu0 %718
    %720 = vrot.lane.b32.xlu0 %v698, 9
    %v721 = vpop.permute.xlu0 %720
    %722 = vrot.lane.b32.xlu0 %v699, 9
    %v723 = vpop.permute.xlu0 %722
    %724 = vrot.lane.b32.xlu0 %v700, 9
    %v725 = vpop.permute.xlu0 %724
    %726 = vrot.lane.b32.xlu0 %v701, 9
    %v727 = vpop.permute.xlu0 %726
    %728 = vrot.lane.b32.xlu0 %v702, 9
    %v729 = vpop.permute.xlu0 %728
    %730 = vrot.lane.b32.xlu0 %v703, 9
    %v731 = vpop.permute.xlu0 %730
    %732 = vrot.lane.b32.xlu0 %v704, 9
    %v733 = vpop.permute.xlu0 %732
    %734 = vrot.lane.b32.xlu0 %v705, 9
    %v735 = vpop.permute.xlu0 %734
    %736 = vrot.lane.b32.xlu0 %v706, 9
    %v737 = vpop.permute.xlu0 %736
    %738 = vrot.lane.b32.xlu0 %v707, 9
    %v739 = vpop.permute.xlu0 %738
    %v772 = vunpack.c.l.b16 %v265
    %v773 = vunpack.c.l.b16 %v266
    %v774 = vunpack.c.l.b16 %v269
    %v775 = vunpack.c.l.b16 %v270
    %v776 = vunpack.c.l.b16 %v273
    %v777 = vunpack.c.l.b16 %v274
    %v778 = vunpack.c.l.b16 %v277
    %v779 = vunpack.c.l.b16 %v278
    %v780 = vunpack.c.l.b16 %v281
    %v781 = vunpack.c.l.b16 %v282
    %v782 = vunpack.c.l.b16 %v285
    %v783 = vunpack.c.l.b16 %v286
    %v784 = vunpack.c.l.b16 %v289
    %v785 = vunpack.c.l.b16 %v290
    %v786 = vunpack.c.l.b16 %v293
    %v787 = vunpack.c.l.b16 %v294
    %v788 = vunpack.c.l.b16 %v297
    %v789 = vunpack.c.l.b16 %v298
    %v790 = vunpack.c.l.b16 %v301
    %v791 = vunpack.c.l.b16 %v302
    %v792 = vunpack.c.l.b16 %v305
    %v793 = vunpack.c.l.b16 %v306
    %v794 = vunpack.c.l.b16 %v309
    %v795 = vunpack.c.l.b16 %v310
    %v796 = vunpack.c.l.b16 %v313
    %v797 = vunpack.c.l.b16 %v314
    %v798 = vunpack.c.l.b16 %v317
    %v799 = vunpack.c.l.b16 %v318
    %v800 = vunpack.c.l.b16 %v321
    %v801 = vunpack.c.l.b16 %v322
    %v802 = vunpack.c.l.b16 %v325
    %v803 = vunpack.c.l.b16 %v326
    %v804 = vpack.c.b16 %v773, %v772
    %v805 = vpack.c.b16 %v775, %v774
    %v806 = vpack.c.b16 %v777, %v776
    %v807 = vpack.c.b16 %v779, %v778
    %v808 = vpack.c.b16 %v781, %v780
    %v809 = vpack.c.b16 %v783, %v782
    %v810 = vpack.c.b16 %v785, %v784
    %v811 = vpack.c.b16 %v787, %v786
    %v812 = vpack.c.b16 %v789, %v788
    %v813 = vpack.c.b16 %v791, %v790
    %v814 = vpack.c.b16 %v793, %v792
    %v815 = vpack.c.b16 %v795, %v794
    %v816 = vpack.c.b16 %v797, %v796
    %v817 = vpack.c.b16 %v799, %v798
    %v818 = vpack.c.b16 %v801, %v800
    %v819 = vpack.c.b16 %v803, %v802
    %820 = vrot.lane.b32.xlu0 %v804, 12
    %v821 = vpop.permute.xlu0 %820
    %822 = vrot.lane.b32.xlu0 %v805, 12
    %v823 = vpop.permute.xlu0 %822
    %824 = vrot.lane.b32.xlu0 %v806, 12
    %v825 = vpop.permute.xlu0 %824
    %826 = vrot.lane.b32.xlu0 %v807, 12
    %v827 = vpop.permute.xlu0 %826
    %828 = vrot.lane.b32.xlu0 %v808, 12
    %v829 = vpop.permute.xlu0 %828
    %830 = vrot.lane.b32.xlu0 %v809, 12
    %v831 = vpop.permute.xlu0 %830
    %832 = vrot.lane.b32.xlu0 %v810, 12
    %v833 = vpop.permute.xlu0 %832
    %834 = vrot.lane.b32.xlu0 %v811, 12
    %v835 = vpop.permute.xlu0 %834
    %836 = vrot.lane.b32.xlu0 %v812, 12
    %v837 = vpop.permute.xlu0 %836
    %838 = vrot.lane.b32.xlu0 %v813, 12
    %v839 = vpop.permute.xlu0 %838
    %840 = vrot.lane.b32.xlu0 %v814, 12
    %v841 = vpop.permute.xlu0 %840
    %842 = vrot.lane.b32.xlu0 %v815, 12
    %v843 = vpop.permute.xlu0 %842
    %844 = vrot.lane.b32.xlu0 %v816, 12
    %v845 = vpop.permute.xlu0 %844
    %846 = vrot.lane.b32.xlu0 %v817, 12
    %v847 = vpop.permute.xlu0 %846
    %848 = vrot.lane.b32.xlu0 %v818, 12
    %v849 = vpop.permute.xlu0 %848
    %850 = vrot.lane.b32.xlu0 %v819, 12
    %v851 = vpop.permute.xlu0 %850
    %v854 = vunpack.c.l.b16 %v327
    %v855 = vunpack.c.l.b16 %v328
    %v856 = vpack.c.b16 %v855, %v854
    %857 = vrot.lane.b32.xlu0 %v693, 15
    %v858 = vpop.permute.xlu0 %857
    %859 = vrot.lane.b32.xlu0 %v694, 15
    %v860 = vpop.permute.xlu0 %859
    %861 = vrot.lane.b32.xlu0 %v695, 15
    %v862 = vpop.permute.xlu0 %861
    %863 = vrot.lane.b32.xlu0 %v696, 15
    %v864 = vpop.permute.xlu0 %863
    %865 = vrot.lane.b32.xlu0 %v697, 15
    %v866 = vpop.permute.xlu0 %865
    %867 = vrot.lane.b32.xlu0 %v698, 15
    %v868 = vpop.permute.xlu0 %867
    %869 = vrot.lane.b32.xlu0 %v699, 15
    %v870 = vpop.permute.xlu0 %869
    %871 = vrot.lane.b32.xlu0 %v700, 15
    %v872 = vpop.permute.xlu0 %871
    %873 = vrot.lane.b32.xlu0 %v701, 15
    %v874 = vpop.permute.xlu0 %873
    %875 = vrot.lane.b32.xlu0 %v702, 15
    %v876 = vpop.permute.xlu0 %875
    %877 = vrot.lane.b32.xlu0 %v703, 15
    %v878 = vpop.permute.xlu0 %877
    %879 = vrot.lane.b32.xlu0 %v704, 15
    %v880 = vpop.permute.xlu0 %879
    %881 = vrot.lane.b32.xlu0 %v705, 15
    %v882 = vpop.permute.xlu0 %881
    %883 = vrot.lane.b32.xlu0 %v706, 15
    %v884 = vpop.permute.xlu0 %883
    %885 = vrot.lane.b32.xlu0 %v707, 15
    %v886 = vpop.permute.xlu0 %885
    %887 = vrot.lane.b32.xlu0 %v856, 15
    %v888 = vpop.permute.xlu0 %887
    %v921 = vunpack.c.l.b16 %v333
    %v922 = vunpack.c.l.b16 %v334
    %v923 = vunpack.c.l.b16 %v337
    %v924 = vunpack.c.l.b16 %v338
    %v925 = vunpack.c.l.b16 %v341
    %v926 = vunpack.c.l.b16 %v342
    %v927 = vunpack.c.l.b16 %v345
    %v928 = vunpack.c.l.b16 %v346
    %v929 = vunpack.c.l.b16 %v349
    %v930 = vunpack.c.l.b16 %v350
    %v931 = vunpack.c.l.b16 %v353
    %v932 = vunpack.c.l.b16 %v354
    %v933 = vunpack.c.l.b16 %v357
    %v934 = vunpack.c.l.b16 %v358
    %v935 = vunpack.c.l.b16 %v361
    %v936 = vunpack.c.l.b16 %v362
    %v937 = vunpack.c.l.b16 %v365
    %v938 = vunpack.c.l.b16 %v366
    %v939 = vunpack.c.l.b16 %v369
    %v940 = vunpack.c.l.b16 %v370
    %v941 = vunpack.c.l.b16 %v373
    %v942 = vunpack.c.l.b16 %v374
    %v943 = vunpack.c.l.b16 %v377
    %v944 = vunpack.c.l.b16 %v378
    %v945 = vunpack.c.l.b16 %v381
    %v946 = vunpack.c.l.b16 %v382
    %v947 = vunpack.c.l.b16 %v385
    %v948 = vunpack.c.l.b16 %v386
    %v949 = vunpack.c.l.b16 %v389
    %v950 = vunpack.c.l.b16 %v390
    %v951 = vunpack.c.l.b16 %v393
    %v952 = vunpack.c.l.b16 %v394
    %v953 = vpack.c.b16 %v922, %v921
    %v954 = vpack.c.b16 %v924, %v923
    %v955 = vpack.c.b16 %v926, %v925
    %v956 = vpack.c.b16 %v928, %v927
    %v957 = vpack.c.b16 %v930, %v929
    %v958 = vpack.c.b16 %v932, %v931
    %v959 = vpack.c.b16 %v934, %v933
    %v960 = vpack.c.b16 %v936, %v935
    %v961 = vpack.c.b16 %v938, %v937
    %v962 = vpack.c.b16 %v940, %v939
    %v963 = vpack.c.b16 %v942, %v941
    %v964 = vpack.c.b16 %v944, %v943
    %v965 = vpack.c.b16 %v946, %v945
    %v966 = vpack.c.b16 %v948, %v947
    %v967 = vpack.c.b16 %v950, %v949
    %v968 = vpack.c.b16 %v952, %v951
    %969 = vrot.lane.b32.xlu0 %v953, 18
    %v970 = vpop.permute.xlu0 %969
    %971 = vrot.lane.b32.xlu0 %v954, 18
    %v972 = vpop.permute.xlu0 %971
    %973 = vrot.lane.b32.xlu0 %v955, 18
    %v974 = vpop.permute.xlu0 %973
    %975 = vrot.lane.b32.xlu0 %v956, 18
    %v976 = vpop.permute.xlu0 %975
    %977 = vrot.lane.b32.xlu0 %v957, 18
    %v978 = vpop.permute.xlu0 %977
    %979 = vrot.lane.b32.xlu0 %v958, 18
    %v980 = vpop.permute.xlu0 %979
    %981 = vrot.lane.b32.xlu0 %v959, 18
    %v982 = vpop.permute.xlu0 %981
    %983 = vrot.lane.b32.xlu0 %v960, 18
    %v984 = vpop.permute.xlu0 %983
    %985 = vrot.lane.b32.xlu0 %v961, 18
    %v986 = vpop.permute.xlu0 %985
    %987 = vrot.lane.b32.xlu0 %v962, 18
    %v988 = vpop.permute.xlu0 %987
    %989 = vrot.lane.b32.xlu0 %v963, 18
    %v990 = vpop.permute.xlu0 %989
    %991 = vrot.lane.b32.xlu0 %v964, 18
    %v992 = vpop.permute.xlu0 %991
    %993 = vrot.lane.b32.xlu0 %v965, 18
    %v994 = vpop.permute.xlu0 %993
    %995 = vrot.lane.b32.xlu0 %v966, 18
    %v996 = vpop.permute.xlu0 %995
    %997 = vrot.lane.b32.xlu0 %v967, 18
    %v998 = vpop.permute.xlu0 %997
    %999 = vrot.lane.b32.xlu0 %v968, 18
    %v1000 = vpop.permute.xlu0 %999
    %v1033 = vunpack.c.l.b16 %v335
    %v1034 = vunpack.c.l.b16 %v336
    %v1035 = vunpack.c.l.b16 %v339
    %v1036 = vunpack.c.l.b16 %v340
    %v1037 = vunpack.c.l.b16 %v343
    %v1038 = vunpack.c.l.b16 %v344
    %v1039 = vunpack.c.l.b16 %v347
    %v1040 = vunpack.c.l.b16 %v348
    %v1041 = vunpack.c.l.b16 %v351
    %v1042 = vunpack.c.l.b16 %v352
    %v1043 = vunpack.c.l.b16 %v355
    %v1044 = vunpack.c.l.b16 %v356
    %v1045 = vunpack.c.l.b16 %v359
    %v1046 = vunpack.c.l.b16 %v360
    %v1047 = vunpack.c.l.b16 %v363
    %v1048 = vunpack.c.l.b16 %v364
    %v1049 = vunpack.c.l.b16 %v367
    %v1050 = vunpack.c.l.b16 %v368
    %v1051 = vunpack.c.l.b16 %v371
    %v1052 = vunpack.c.l.b16 %v372
    %v1053 = vunpack.c.l.b16 %v375
    %v1054 = vunpack.c.l.b16 %v376
    %v1055 = vunpack.c.l.b16 %v379
    %v1056 = vunpack.c.l.b16 %v380
    %v1057 = vunpack.c.l.b16 %v383
    %v1058 = vunpack.c.l.b16 %v384
    %v1059 = vunpack.c.l.b16 %v387
    %v1060 = vunpack.c.l.b16 %v388
    %v1061 = vunpack.c.l.b16 %v391
    %v1062 = vunpack.c.l.b16 %v392
    %v1063 = vunpack.c.l.b16 %v395
    %v1064 = vunpack.c.l.b16 %v396
    %v1065 = vpack.c.b16 %v1034, %v1033
    %v1066 = vpack.c.b16 %v1036, %v1035
    %v1067 = vpack.c.b16 %v1038, %v1037
    %v1068 = vpack.c.b16 %v1040, %v1039
    %v1069 = vpack.c.b16 %v1042, %v1041
    %v1070 = vpack.c.b16 %v1044, %v1043
    %v1071 = vpack.c.b16 %v1046, %v1045
    %v1072 = vpack.c.b16 %v1048, %v1047
    %v1073 = vpack.c.b16 %v1050, %v1049
    %v1074 = vpack.c.b16 %v1052, %v1051
    %v1075 = vpack.c.b16 %v1054, %v1053
    %v1076 = vpack.c.b16 %v1056, %v1055
    %v1077 = vpack.c.b16 %v1058, %v1057
    %v1078 = vpack.c.b16 %v1060, %v1059
    %v1079 = vpack.c.b16 %v1062, %v1061
    %v1080 = vpack.c.b16 %v1064, %v1063
    %1081 = vrot.lane.b32.xlu0 %v1065, 21
    %v1082 = vpop.permute.xlu0 %1081
    %1083 = vrot.lane.b32.xlu0 %v1066, 21
    %v1084 = vpop.permute.xlu0 %1083
    %1085 = vrot.lane.b32.xlu0 %v1067, 21
    %v1086 = vpop.permute.xlu0 %1085
    %1087 = vrot.lane.b32.xlu0 %v1068, 21
    %v1088 = vpop.permute.xlu0 %1087
    %1089 = vrot.lane.b32.xlu0 %v1069, 21
    %v1090 = vpop.permute.xlu0 %1089
    %1091 = vrot.lane.b32.xlu0 %v1070, 21
    %v1092 = vpop.permute.xlu0 %1091
    %1093 = vrot.lane.b32.xlu0 %v1071, 21
    %v1094 = vpop.permute.xlu0 %1093
    %1095 = vrot.lane.b32.xlu0 %v1072, 21
    %v1096 = vpop.permute.xlu0 %1095
    %1097 = vrot.lane.b32.xlu0 %v1073, 21
    %v1098 = vpop.permute.xlu0 %1097
    %1099 = vrot.lane.b32.xlu0 %v1074, 21
    %v1100 = vpop.permute.xlu0 %1099
    %1101 = vrot.lane.b32.xlu0 %v1075, 21
    %v1102 = vpop.permute.xlu0 %1101
    %1103 = vrot.lane.b32.xlu0 %v1076, 21
    %v1104 = vpop.permute.xlu0 %1103
    %1105 = vrot.lane.b32.xlu0 %v1077, 21
    %v1106 = vpop.permute.xlu0 %1105
    %1107 = vrot.lane.b32.xlu0 %v1078, 21
    %v1108 = vpop.permute.xlu0 %1107
    %1109 = vrot.lane.b32.xlu0 %v1079, 21
    %v1110 = vpop.permute.xlu0 %1109
    %1111 = vrot.lane.b32.xlu0 %v1080, 21
    %v1112 = vpop.permute.xlu0 %1111
    %v1115 = vunpack.c.l.b16 %v397
    %v1116 = vunpack.c.l.b16 %v398
    %v1117 = vpack.c.b16 %v1116, %v1115
    %1118 = vrot.lane.b32.xlu0 %v954, 24
    %v1119 = vpop.permute.xlu0 %1118
    %1120 = vrot.lane.b32.xlu0 %v955, 24
    %v1121 = vpop.permute.xlu0 %1120
    %1122 = vrot.lane.b32.xlu0 %v956, 24
    %v1123 = vpop.permute.xlu0 %1122
    %1124 = vrot.lane.b32.xlu0 %v957, 24
    %v1125 = vpop.permute.xlu0 %1124
    %1126 = vrot.lane.b32.xlu0 %v958, 24
    %v1127 = vpop.permute.xlu0 %1126
    %1128 = vrot.lane.b32.xlu0 %v959, 24
    %v1129 = vpop.permute.xlu0 %1128
    %1130 = vrot.lane.b32.xlu0 %v960, 24
    %v1131 = vpop.permute.xlu0 %1130
    %1132 = vrot.lane.b32.xlu0 %v961, 24
    %v1133 = vpop.permute.xlu0 %1132
    %1134 = vrot.lane.b32.xlu0 %v962, 24
    %v1135 = vpop.permute.xlu0 %1134
    %1136 = vrot.lane.b32.xlu0 %v963, 24
    %v1137 = vpop.permute.xlu0 %1136
    %1138 = vrot.lane.b32.xlu0 %v964, 24
    %v1139 = vpop.permute.xlu0 %1138
    %1140 = vrot.lane.b32.xlu0 %v965, 24
    %v1141 = vpop.permute.xlu0 %1140
    %1142 = vrot.lane.b32.xlu0 %v966, 24
    %v1143 = vpop.permute.xlu0 %1142
    %1144 = vrot.lane.b32.xlu0 %v967, 24
    %v1145 = vpop.permute.xlu0 %1144
    %1146 = vrot.lane.b32.xlu0 %v968, 24
    %v1147 = vpop.permute.xlu0 %1146
    %1148 = vrot.lane.b32.xlu0 %v1117, 24
    %v1149 = vpop.permute.xlu0 %1148
    %vm1150 = vcmask 23552
    %v1153 = vsel %vm1150, %v463, %v560
    %v1156 = vsel %vm1150, %v464, %v562
    %v1159 = vsel %vm1150, %v465, %v564
    %v1162 = vsel %vm1150, %v466, %v566
    %v1165 = vsel %vm1150, %v467, %v568
    %v1168 = vsel %vm1150, %v468, %v570
    %v1171 = vsel %vm1150, %v469, %v572
    %v1174 = vsel %vm1150, %v470, %v574
    %v1177 = vsel %vm1150, %v471, %v576
    %v1180 = vsel %vm1150, %v472, %v578
    %v1183 = vsel %vm1150, %v473, %v580
    %v1186 = vsel %vm1150, %v474, %v582
    %v1189 = vsel %vm1150, %v475, %v584
    %v1192 = vsel %vm1150, %v476, %v586
    %v1195 = vsel %vm1150, %v477, %v588
    %v1198 = vsel %vm1150, %v478, %v590
    %vm1199 = vcmask 48128
    %v1201 = vsel %vm1199, %v1153, %v597
    %v1203 = vsel %vm1199, %v1156, %v599
    %v1205 = vsel %vm1199, %v1159, %v601
    %v1207 = vsel %vm1199, %v1162, %v603
    %v1209 = vsel %vm1199, %v1165, %v605
    %v1211 = vsel %vm1199, %v1168, %v607
    %v1213 = vsel %vm1199, %v1171, %v609
    %v1215 = vsel %vm1199, %v1174, %v611
    %v1217 = vsel %vm1199, %v1177, %v613
    %v1219 = vsel %vm1199, %v1180, %v615
    %v1221 = vsel %vm1199, %v1183, %v617
    %v1223 = vsel %vm1199, %v1186, %v619
    %v1225 = vsel %vm1199, %v1189, %v621
    %v1227 = vsel %vm1199, %v1192, %v623
    %v1229 = vsel %vm1199, %v1195, %v625
    %v1231 = vsel %vm1199, %v1198, %v627
    %vm1232 = vcmask 72704
    %v1234 = vsel %vm1232, %v1201, %v709
    %v1236 = vsel %vm1232, %v1203, %v711
    %v1238 = vsel %vm1232, %v1205, %v713
    %v1240 = vsel %vm1232, %v1207, %v715
    %v1242 = vsel %vm1232, %v1209, %v717
    %v1244 = vsel %vm1232, %v1211, %v719
    %v1246 = vsel %vm1232, %v1213, %v721
    %v1248 = vsel %vm1232, %v1215, %v723
    %v1250 = vsel %vm1232, %v1217, %v725
    %v1252 = vsel %vm1232, %v1219, %v727
    %v1254 = vsel %vm1232, %v1221, %v729
    %v1256 = vsel %vm1232, %v1223, %v731
    %v1258 = vsel %vm1232, %v1225, %v733
    %v1260 = vsel %vm1232, %v1227, %v735
    %v1262 = vsel %vm1232, %v1229, %v737
    %v1264 = vsel %vm1232, %v1231, %v739
    %vm1265 = vcmask 97280
    %v1267 = vsel %vm1265, %v1234, %v821
    %v1269 = vsel %vm1265, %v1236, %v823
    %v1271 = vsel %vm1265, %v1238, %v825
    %v1273 = vsel %vm1265, %v1240, %v827
    %v1275 = vsel %vm1265, %v1242, %v829
    %v1277 = vsel %vm1265, %v1244, %v831
    %v1279 = vsel %vm1265, %v1246, %v833
    %v1281 = vsel %vm1265, %v1248, %v835
    %v1283 = vsel %vm1265, %v1250, %v837
    %v1285 = vsel %vm1265, %v1252, %v839
    %v1287 = vsel %vm1265, %v1254, %v841
    %v1289 = vsel %vm1265, %v1256, %v843
    %v1291 = vsel %vm1265, %v1258, %v845
    %v1293 = vsel %vm1265, %v1260, %v847
    %v1295 = vsel %vm1265, %v1262, %v849
    %v1297 = vsel %vm1265, %v1264, %v851
    %vm1298 = vcmask 121856
    %v1300 = vsel %vm1298, %v1267, %v858
    %v1302 = vsel %vm1298, %v1269, %v860
    %v1304 = vsel %vm1298, %v1271, %v862
    %v1306 = vsel %vm1298, %v1273, %v864
    %v1308 = vsel %vm1298, %v1275, %v866
    %v1310 = vsel %vm1298, %v1277, %v868
    %v1312 = vsel %vm1298, %v1279, %v870
    %v1314 = vsel %vm1298, %v1281, %v872
    %v1316 = vsel %vm1298, %v1283, %v874
    %v1318 = vsel %vm1298, %v1285, %v876
    %v1320 = vsel %vm1298, %v1287, %v878
    %v1322 = vsel %vm1298, %v1289, %v880
    %v1324 = vsel %vm1298, %v1291, %v882
    %v1326 = vsel %vm1298, %v1293, %v884
    %v1328 = vsel %vm1298, %v1295, %v886
    %v1330 = vsel %vm1298, %v1297, %v888
    %vm1331 = vcmask 146432
    %v1333 = vsel %vm1331, %v1300, %v970
    %v1335 = vsel %vm1331, %v1302, %v972
    %v1337 = vsel %vm1331, %v1304, %v974
    %v1339 = vsel %vm1331, %v1306, %v976
    %v1341 = vsel %vm1331, %v1308, %v978
    %v1343 = vsel %vm1331, %v1310, %v980
    %v1345 = vsel %vm1331, %v1312, %v982
    %v1347 = vsel %vm1331, %v1314, %v984
    %v1349 = vsel %vm1331, %v1316, %v986
    %v1351 = vsel %vm1331, %v1318, %v988
    %v1353 = vsel %vm1331, %v1320, %v990
    %v1355 = vsel %vm1331, %v1322, %v992
    %v1357 = vsel %vm1331, %v1324, %v994
    %v1359 = vsel %vm1331, %v1326, %v996
    %v1361 = vsel %vm1331, %v1328, %v998
    %v1363 = vsel %vm1331, %v1330, %v1000
    %vm1364 = vcmask 171008
    %v1366 = vsel %vm1364, %v1333, %v1082
    %v1368 = vsel %vm1364, %v1335, %v1084
    %v1370 = vsel %vm1364, %v1337, %v1086
    %v1372 = vsel %vm1364, %v1339, %v1088
    %v1374 = vsel %vm1364, %v1341, %v1090
    %v1376 = vsel %vm1364, %v1343, %v1092
    %v1378 = vsel %vm1364, %v1345, %v1094
    %v1380 = vsel %vm1364, %v1347, %v1096
    %v1382 = vsel %vm1364, %v1349, %v1098
    %v1384 = vsel %vm1364, %v1351, %v1100
    %v1386 = vsel %vm1364, %v1353, %v1102
    %v1388 = vsel %vm1364, %v1355, %v1104
    %v1390 = vsel %vm1364, %v1357, %v1106
    %v1392 = vsel %vm1364, %v1359, %v1108
    %v1394 = vsel %vm1364, %v1361, %v1110
    %v1396 = vsel %vm1364, %v1363, %v1112
    %vm1397 = vcmask 195584
    %v1399 = vsel %vm1397, %v1366, %v1119
    %v1401 = vsel %vm1397, %v1368, %v1121
    %v1403 = vsel %vm1397, %v1370, %v1123
    %v1405 = vsel %vm1397, %v1372, %v1125
    %v1407 = vsel %vm1397, %v1374, %v1127
    %v1409 = vsel %vm1397, %v1376, %v1129
    %v1411 = vsel %vm1397, %v1378, %v1131
    %v1413 = vsel %vm1397, %v1380, %v1133
    %v1415 = vsel %vm1397, %v1382, %v1135
    %v1417 = vsel %vm1397, %v1384, %v1137
    %v1419 = vsel %vm1397, %v1386, %v1139
    %v1421 = vsel %vm1397, %v1388, %v1141
    %v1423 = vsel %vm1397, %v1390, %v1143
    %v1425 = vsel %vm1397, %v1392, %v1145
    %v1427 = vsel %vm1397, %v1394, %v1147
    %v1429 = vsel %vm1397, %v1396, %v1149
    %v1430 = vld [vmem:[%s1] sm:$0xf]
    %v1431 = vld [vmem:[%s1 + $0x4] sm:$0xf]
    %v1432 = vld [vmem:[%s1 + $0x8] sm:$0xf]
    %v1433 = vld [vmem:[%s1 + $0xc] sm:$0x3]
    %v1435 = vlaneseq
    %v1436 = vshrl.u32 %v1435, 7
    %v1437 = vsub.s32 0, %v1436
    %v1438 = vrot.slane %v182, %v1437
    %v1444 = vunpack.c.l.b16 %v1430
    %v1445 = vunpack.c.l.b16 %v1431
    %v1446 = vunpack.c.l.b16 %v1432
    %v1447 = vunpack.c.l.b16 %v1433
    %v1448 = vpack.c.b16 %v1445, %v1444
    %v1449 = vpack.c.b16 %v1447, %v1446
    %vm1451 = vcmask 220160
    %v1452 = vsel %vm1451, %v1399, 0
    %v1454 = vsel %vm1451, %v1401, 0
    %v1456 = vsel %vm1451, %v1403, 0
    %v1458 = vsel %vm1451, %v1405, 0
    %v1460 = vsel %vm1451, %v1407, 0
    %v1462 = vsel %vm1451, %v1409, 0
    %v1464 = vsel %vm1451, %v1411, 0
    %v1466 = vsel %vm1451, %v1413, 0
    %v1468 = vsel %vm1451, %v1415, 0
    %v1470 = vsel %vm1451, %v1417, 0
    %v1472 = vsel %vm1451, %v1419, 0
    %v1474 = vsel %vm1451, %v1421, 0
    %v1476 = vsel %vm1451, %v1423, 0
    %v1478 = vsel %vm1451, %v1425, 0
    %v1480 = vsel %vm1451, %v1427, 0
    %v1482 = vsel %vm1451, %v1429, 0
    %vm1484 = vcmask 1044480
    %vm1485 = vcmask 1045504
    %v1486 = vsel %vm1484, 4294967295, 65535
    %v1487 = vsel %vm1485, %v1486, 0
    %v1489 = vand.u32 %v1449, %v1487
    %1491 = vmatprep.subr.bf16.mxu0 0
    %1492 = vmatpush1.bf16.msra.mxu0 0
    %1493 = vmatprep.subr.bf16.mxu0 0
    %1494 = vmatpush1.bf16.msra.mxu0 0
    %1495 = vmatprep.subr.bf16.mxu0 0
    %1496 = vmatpush1.bf16.msra.mxu0 0
    %1497 = vmatprep.subr.bf16.mxu0 0
    %1498 = vmatpush1.bf16.msra.mxu0 0
    %1499 = vmatprep.subr.bf16.mxu0 0
    %1500 = vmatpush1.bf16.msra.mxu0 0
    %1501 = vmatprep.subr.bf16.mxu0 0
    %1502 = vmatpush1.bf16.msra.mxu0 0
    %1503 = vmatprep.subr.bf16.mxu0 0
    %1504 = vmatpush1.bf16.msra.mxu0 %v1489
    %1505 = vmatprep.subr.bf16.mxu0 0
    %1506 = vmatpush1.bf16.msra.mxu0 %v1448
    %1507 = vmatprep.subr.bf16.mxu0 0
    %1508 = vmatpush2.bf16.msra.mxu0 0
    %1509 = vmatprep.subr.bf16.mxu0 0
    %1510 = vmatpush2.bf16.msra.mxu0 0
    %1511 = vmatprep.subr.bf16.mxu0 0
    %1512 = vmatpush2.bf16.msra.mxu0 0
    %1513 = vmatprep.subr.bf16.mxu0 0
    %1514 = vmatpush2.bf16.msra.mxu0 0
    %1515 = vmatprep.subr.bf16.mxu0 0
    %1516 = vmatpush2.bf16.msra.mxu0 0
    %1517 = vmatprep.subr.bf16.mxu0 0
    %1518 = vmatpush2.bf16.msra.mxu0 0
    %1519 = vmatprep.subr.bf16.mxu0 0
    %1520 = vmatpush2.bf16.msra.mxu0 0
    %1521 = vmatprep.subr.bf16.mxu0 0
    %1522 = vmatpush2.bf16.msra.mxu0 0
    %1523 = vmatprep.mubr.bf16.mxu0 0
    %1524 = vmatmul.mubr.bf16.gmra.mxu0 %v1452
    %v1525 = vpop.f32.mrf.mxu0
    %v1526 = vadd.f32 %v1438, %v1525
    %v1527 = vpop.f32.mrf.mxu0
    %v1528 = vpop.f32.mrf.mxu0
    %v1529 = vadd.f32 %v1438, %v1528
    %v1530 = vpop.f32.mrf.mxu0
    %1531 = vmatprep.mubr.bf16.mxu0 0
    %1532 = vmatmul.mubr.bf16.gmra.mxu0 %v1454
    %v1533 = vpop.f32.mrf.mxu0
    %v1534 = vadd.f32 %v1438, %v1533
    %v1535 = vpop.f32.mrf.mxu0
    %v1536 = vpop.f32.mrf.mxu0
    %v1537 = vadd.f32 %v1438, %v1536
    %v1538 = vpop.f32.mrf.mxu0
    %1539 = vmatprep.mubr.bf16.mxu0 0
    %1540 = vmatmul.mubr.bf16.gmra.mxu0 %v1456
    %v1541 = vpop.f32.mrf.mxu0
    %v1542 = vadd.f32 %v1438, %v1541
    %v1543 = vpop.f32.mrf.mxu0
    %v1544 = vpop.f32.mrf.mxu0
    %v1545 = vadd.f32 %v1438, %v1544
    %v1546 = vpop.f32.mrf.mxu0
    %1547 = vmatprep.mubr.bf16.mxu0 0
    %1548 = vmatmul.mubr.bf16.gmra.mxu0 %v1458
    %v1549 = vpop.f32.mrf.mxu0
    %v1550 = vadd.f32 %v1438, %v1549
    %v1551 = vpop.f32.mrf.mxu0
    %v1552 = vpop.f32.mrf.mxu0
    %v1553 = vadd.f32 %v1438, %v1552
    %v1554 = vpop.f32.mrf.mxu0
    %1555 = vmatprep.mubr.bf16.mxu0 0
    %1556 = vmatmul.mubr.bf16.gmra.mxu0 %v1460
    %v1557 = vpop.f32.mrf.mxu0
    %v1558 = vadd.f32 %v1438, %v1557
    %v1559 = vpop.f32.mrf.mxu0
    %v1560 = vpop.f32.mrf.mxu0
    %v1561 = vadd.f32 %v1438, %v1560
    %v1562 = vpop.f32.mrf.mxu0
    %1563 = vmatprep.mubr.bf16.mxu0 0
    %1564 = vmatmul.mubr.bf16.gmra.mxu0 %v1462
    %v1565 = vpop.f32.mrf.mxu0
    %v1566 = vadd.f32 %v1438, %v1565
    %v1567 = vpop.f32.mrf.mxu0
    %v1568 = vpop.f32.mrf.mxu0
    %v1569 = vadd.f32 %v1438, %v1568
    %v1570 = vpop.f32.mrf.mxu0
    %1571 = vmatprep.mubr.bf16.mxu0 0
    %1572 = vmatmul.mubr.bf16.gmra.mxu0 %v1464
    %v1573 = vpop.f32.mrf.mxu0
    %v1574 = vadd.f32 %v1438, %v1573
    %v1575 = vpop.f32.mrf.mxu0
    %v1576 = vpop.f32.mrf.mxu0
    %v1577 = vadd.f32 %v1438, %v1576
    %v1578 = vpop.f32.mrf.mxu0
    %1579 = vmatprep.mubr.bf16.mxu0 0
    %1580 = vmatmul.mubr.bf16.gmra.mxu0 %v1466
    %v1581 = vpop.f32.mrf.mxu0
    %v1582 = vadd.f32 %v1438, %v1581
    %v1583 = vpop.f32.mrf.mxu0
    %v1584 = vpop.f32.mrf.mxu0
    %v1585 = vadd.f32 %v1438, %v1584
    %v1586 = vpop.f32.mrf.mxu0
    %1587 = vmatprep.mubr.bf16.mxu0 0
    %1588 = vmatmul.mubr.bf16.gmra.mxu0 %v1468
    %v1589 = vpop.f32.mrf.mxu0
    %v1590 = vadd.f32 %v1438, %v1589
    %v1591 = vpop.f32.mrf.mxu0
    %v1592 = vpop.f32.mrf.mxu0
    %v1593 = vadd.f32 %v1438, %v1592
    %v1594 = vpop.f32.mrf.mxu0
    %1595 = vmatprep.mubr.bf16.mxu0 0
    %1596 = vmatmul.mubr.bf16.gmra.mxu0 %v1470
    %v1597 = vpop.f32.mrf.mxu0
    %v1598 = vadd.f32 %v1438, %v1597
    %v1599 = vpop.f32.mrf.mxu0
    %v1600 = vpop.f32.mrf.mxu0
    %v1601 = vadd.f32 %v1438, %v1600
    %v1602 = vpop.f32.mrf.mxu0
    %1603 = vmatprep.mubr.bf16.mxu0 0
    %1604 = vmatmul.mubr.bf16.gmra.mxu0 %v1472
    %v1605 = vpop.f32.mrf.mxu0
    %v1606 = vadd.f32 %v1438, %v1605
    %v1607 = vpop.f32.mrf.mxu0
    %v1608 = vpop.f32.mrf.mxu0
    %v1609 = vadd.f32 %v1438, %v1608
    %v1610 = vpop.f32.mrf.mxu0
    %1611 = vmatprep.mubr.bf16.mxu0 0
    %1612 = vmatmul.mubr.bf16.gmra.mxu0 %v1474
    %v1613 = vpop.f32.mrf.mxu0
    %v1614 = vadd.f32 %v1438, %v1613
    %v1615 = vpop.f32.mrf.mxu0
    %v1616 = vpop.f32.mrf.mxu0
    %v1617 = vadd.f32 %v1438, %v1616
    %v1618 = vpop.f32.mrf.mxu0
    %1619 = vmatprep.mubr.bf16.mxu0 0
    %1620 = vmatmul.mubr.bf16.gmra.mxu0 %v1476
    %v1621 = vpop.f32.mrf.mxu0
    %v1622 = vadd.f32 %v1438, %v1621
    %v1623 = vpop.f32.mrf.mxu0
    %v1624 = vpop.f32.mrf.mxu0
    %v1625 = vadd.f32 %v1438, %v1624
    %v1626 = vpop.f32.mrf.mxu0
    %1627 = vmatprep.mubr.bf16.mxu0 0
    %1628 = vmatmul.mubr.bf16.gmra.mxu0 %v1478
    %v1629 = vpop.f32.mrf.mxu0
    %v1630 = vadd.f32 %v1438, %v1629
    %v1631 = vpop.f32.mrf.mxu0
    %v1632 = vpop.f32.mrf.mxu0
    %v1633 = vadd.f32 %v1438, %v1632
    %v1634 = vpop.f32.mrf.mxu0
    %1635 = vmatprep.mubr.bf16.mxu0 0
    %1636 = vmatmul.mubr.bf16.gmra.mxu0 %v1480
    %v1637 = vpop.f32.mrf.mxu0
    %v1638 = vadd.f32 %v1438, %v1637
    %v1639 = vpop.f32.mrf.mxu0
    %v1640 = vpop.f32.mrf.mxu0
    %v1641 = vadd.f32 %v1438, %v1640
    %v1642 = vpop.f32.mrf.mxu0
    %1643 = vmatprep.mubr.bf16.mxu0 0
    %1644 = vmatmul.mubr.bf16.gmra.mxu0 %v1482
    %v1645 = vpop.f32.mrf.mxu0
    %v1646 = vadd.f32 %v1438, %v1645
    %v1647 = vpop.f32.mrf.mxu0
    %v1648 = vpop.f32.mrf.mxu0
    %v1649 = vadd.f32 %v1438, %v1648
    %v1650 = vpop.f32.mrf.mxu0
    %1651 = vdwg.mxu0
    %vm1652 = vcmp.ge.f32.partialorder %v1526, 0.0
    %vm1653 = vcmp.ge.f32.partialorder %v1529, 0.0
    %vm1654 = vcmp.ge.f32.partialorder %v1534, 0.0
    %vm1655 = vcmp.ge.f32.partialorder %v1537, 0.0
    %vm1656 = vcmp.ge.f32.partialorder %v1542, 0.0
    %vm1657 = vcmp.ge.f32.partialorder %v1545, 0.0
    %vm1658 = vcmp.ge.f32.partialorder %v1550, 0.0
    %vm1659 = vcmp.ge.f32.partialorder %v1553, 0.0
    %vm1660 = vcmp.ge.f32.partialorder %v1558, 0.0
    %vm1661 = vcmp.ge.f32.partialorder %v1561, 0.0
    %vm1662 = vcmp.ge.f32.partialorder %v1566, 0.0
    %vm1663 = vcmp.ge.f32.partialorder %v1569, 0.0
    %vm1664 = vcmp.ge.f32.partialorder %v1574, 0.0
    %vm1665 = vcmp.ge.f32.partialorder %v1577, 0.0
    %vm1666 = vcmp.ge.f32.partialorder %v1582, 0.0
    %vm1667 = vcmp.ge.f32.partialorder %v1585, 0.0
    %vm1668 = vcmp.ge.f32.partialorder %v1590, 0.0
    %vm1669 = vcmp.ge.f32.partialorder %v1593, 0.0
    %vm1670 = vcmp.ge.f32.partialorder %v1598, 0.0
    %vm1671 = vcmp.ge.f32.partialorder %v1601, 0.0
    %vm1672 = vcmp.ge.f32.partialorder %v1606, 0.0
    %vm1673 = vcmp.ge.f32.partialorder %v1609, 0.0
    %vm1674 = vcmp.ge.f32.partialorder %v1614, 0.0
    %vm1675 = vcmp.ge.f32.partialorder %v1617, 0.0
    %vm1676 = vcmp.ge.f32.partialorder %v1622, 0.0
    %vm1677 = vcmp.ge.f32.partialorder %v1625, 0.0
    %vm1678 = vcmp.ge.f32.partialorder %v1630, 0.0
    %vm1679 = vcmp.ge.f32.partialorder %v1633, 0.0
    %vm1680 = vcmp.ge.f32.partialorder %v1638, 0.0
    %vm1681 = vcmp.ge.f32.partialorder %v1641, 0.0
    %vm1682 = vcmp.ge.f32.partialorder %v1646, 0.0
    %vm1683 = vcmp.ge.f32.partialorder %v1649, 0.0
    %v1684 = vmul.f32 %v1526, 0.01
    %v1685 = vmul.f32 %v1529, 0.01
    %v1686 = vmul.f32 %v1534, 0.01
    %v1687 = vmul.f32 %v1537, 0.01
    %v1688 = vmul.f32 %v1542, 0.01
    %v1689 = vmul.f32 %v1545, 0.01
    %v1690 = vmul.f32 %v1550, 0.01
    %v1691 = vmul.f32 %v1553, 0.01
    %v1692 = vmul.f32 %v1558, 0.01
    %v1693 = vmul.f32 %v1561, 0.01
    %v1694 = vmul.f32 %v1566, 0.01
    %v1695 = vmul.f32 %v1569, 0.01
    %v1696 = vmul.f32 %v1574, 0.01
    %v1697 = vmul.f32 %v1577, 0.01
    %v1698 = vmul.f32 %v1582, 0.01
    %v1699 = vmul.f32 %v1585, 0.01
    %v1700 = vmul.f32 %v1590, 0.01
    %v1701 = vmul.f32 %v1593, 0.01
    %v1702 = vmul.f32 %v1598, 0.01
    %v1703 = vmul.f32 %v1601, 0.01
    %v1704 = vmul.f32 %v1606, 0.01
    %v1705 = vmul.f32 %v1609, 0.01
    %v1706 = vmul.f32 %v1614, 0.01
    %v1707 = vmul.f32 %v1617, 0.01
    %v1708 = vmul.f32 %v1622, 0.01
    %v1709 = vmul.f32 %v1625, 0.01
    %v1710 = vmul.f32 %v1630, 0.01
    %v1711 = vmul.f32 %v1633, 0.01
    %v1712 = vmul.f32 %v1638, 0.01
    %v1713 = vmul.f32 %v1641, 0.01
    %v1714 = vmul.f32 %v1646, 0.01
    %v1715 = vmul.f32 %v1649, 0.01
    %v1716 = vsel %vm1652, %v1526, %v1684
    %v1717 = vsel %vm1653, %v1529, %v1685
    %v1718 = vsel %vm1654, %v1534, %v1686
    %v1719 = vsel %vm1655, %v1537, %v1687
    %v1720 = vsel %vm1656, %v1542, %v1688
    %v1721 = vsel %vm1657, %v1545, %v1689
    %v1722 = vsel %vm1658, %v1550, %v1690
    %v1723 = vsel %vm1659, %v1553, %v1691
    %v1724 = vsel %vm1660, %v1558, %v1692
    %v1725 = vsel %vm1661, %v1561, %v1693
    %v1726 = vsel %vm1662, %v1566, %v1694
    %v1727 = vsel %vm1663, %v1569, %v1695
    %v1728 = vsel %vm1664, %v1574, %v1696
    %v1729 = vsel %vm1665, %v1577, %v1697
    %v1730 = vsel %vm1666, %v1582, %v1698
    %v1731 = vsel %vm1667, %v1585, %v1699
    %v1732 = vsel %vm1668, %v1590, %v1700
    %v1733 = vsel %vm1669, %v1593, %v1701
    %v1734 = vsel %vm1670, %v1598, %v1702
    %v1735 = vsel %vm1671, %v1601, %v1703
    %v1736 = vsel %vm1672, %v1606, %v1704
    %v1737 = vsel %vm1673, %v1609, %v1705
    %v1738 = vsel %vm1674, %v1614, %v1706
    %v1739 = vsel %vm1675, %v1617, %v1707
    %v1740 = vsel %vm1676, %v1622, %v1708
    %v1741 = vsel %vm1677, %v1625, %v1709
    %v1742 = vsel %vm1678, %v1630, %v1710
    %v1743 = vsel %vm1679, %v1633, %v1711
    %v1744 = vsel %vm1680, %v1638, %v1712
    %v1745 = vsel %vm1681, %v1641, %v1713
    %v1746 = vsel %vm1682, %v1646, %v1714
    %v1747 = vsel %vm1683, %v1649, %v1715
    %v1748 = vpack.c.bf16 %v1717, %v1716
    %v1749 = vpack.c.bf16 %v1719, %v1718
    %v1750 = vpack.c.bf16 %v1721, %v1720
    %v1751 = vpack.c.bf16 %v1723, %v1722
    %v1752 = vpack.c.bf16 %v1725, %v1724
    %v1753 = vpack.c.bf16 %v1727, %v1726
    %v1754 = vpack.c.bf16 %v1729, %v1728
    %v1755 = vpack.c.bf16 %v1731, %v1730
    %v1756 = vpack.c.bf16 %v1733, %v1732
    %v1757 = vpack.c.bf16 %v1735, %v1734
    %v1758 = vpack.c.bf16 %v1737, %v1736
    %v1759 = vpack.c.bf16 %v1739, %v1738
    %v1760 = vpack.c.bf16 %v1741, %v1740
    %v1761 = vpack.c.bf16 %v1743, %v1742
    %v1762 = vpack.c.bf16 %v1745, %v1744
    %v1763 = vpack.c.bf16 %v1747, %v1746
    %s1764 = sadd.s32 %s184, 1
    %v1781 = vunpack.c.l.b16 %v1748
    %v1782 = vunpack.c.h.b16 %v1748
    %v1783 = vunpack.c.l.b16 %v1749
    %v1784 = vunpack.c.h.b16 %v1749
    %v1785 = vunpack.c.l.b16 %v1750
    %v1786 = vunpack.c.h.b16 %v1750
    %v1787 = vunpack.c.l.b16 %v1751
    %v1788 = vunpack.c.h.b16 %v1751
    %v1789 = vunpack.c.l.b16 %v1752
    %v1790 = vunpack.c.h.b16 %v1752
    %v1791 = vunpack.c.l.b16 %v1753
    %v1792 = vunpack.c.h.b16 %v1753
    %v1793 = vunpack.c.l.b16 %v1754
    %v1794 = vunpack.c.h.b16 %v1754
    %v1795 = vunpack.c.l.b16 %v1755
    %v1796 = vunpack.c.h.b16 %v1755
    %v1797 = vunpack.c.l.b16 %v1756
    %v1798 = vunpack.c.h.b16 %v1756
    %v1799 = vunpack.c.l.b16 %v1757
    %v1800 = vunpack.c.h.b16 %v1757
    %v1801 = vunpack.c.l.b16 %v1758
    %v1802 = vunpack.c.h.b16 %v1758
    %v1803 = vunpack.c.l.b16 %v1759
    %v1804 = vunpack.c.h.b16 %v1759
    %v1805 = vunpack.c.l.b16 %v1760
    %v1806 = vunpack.c.h.b16 %v1760
    %v1807 = vunpack.c.l.b16 %v1761
    %v1808 = vunpack.c.h.b16 %v1761
    %v1809 = vunpack.c.l.b16 %v1762
    %v1810 = vunpack.c.h.b16 %v1762
    %v1811 = vunpack.c.l.b16 %v1763
    %v1812 = vunpack.c.h.b16 %v1763
    %v1813 = vpack.c.b16 %v1781, %v1781
    %v1814 = vpack.c.b16 %v1782, %v1782
    %v1815 = vpack.c.b16 %v1783, %v1783
    %v1816 = vpack.c.b16 %v1784, %v1784
    %v1817 = vpack.c.b16 %v1785, %v1785
    %v1818 = vpack.c.b16 %v1786, %v1786
    %v1819 = vpack.c.b16 %v1787, %v1787
    %v1820 = vpack.c.b16 %v1788, %v1788
    %v1821 = vpack.c.b16 %v1789, %v1789
    %v1822 = vpack.c.b16 %v1790, %v1790
    %v1823 = vpack.c.b16 %v1791, %v1791
    %v1824 = vpack.c.b16 %v1792, %v1792
    %v1825 = vpack.c.b16 %v1793, %v1793
    %v1826 = vpack.c.b16 %v1794, %v1794
    %v1827 = vpack.c.b16 %v1795, %v1795
    %v1828 = vpack.c.b16 %v1796, %v1796
    %v1829 = vpack.c.b16 %v1797, %v1797
    %v1830 = vpack.c.b16 %v1798, %v1798
    %v1831 = vpack.c.b16 %v1799, %v1799
    %v1832 = vpack.c.b16 %v1800, %v1800
    %v1833 = vpack.c.b16 %v1801, %v1801
    %v1834 = vpack.c.b16 %v1802, %v1802
    %v1835 = vpack.c.b16 %v1803, %v1803
    %v1836 = vpack.c.b16 %v1804, %v1804
    %v1837 = vpack.c.b16 %v1805, %v1805
    %v1838 = vpack.c.b16 %v1806, %v1806
    %v1839 = vpack.c.b16 %v1807, %v1807
    %v1840 = vpack.c.b16 %v1808, %v1808
    %v1841 = vpack.c.b16 %v1809, %v1809
    %v1842 = vpack.c.b16 %v1810, %v1810
    %v1843 = vpack.c.b16 %v1811, %v1811
    %v1844 = vpack.c.b16 %v1812, %v1812
    %s1877 = smul.u32 %s1764, 36
    %s1878 = sadd.s32 2, %s1877
    %s1879 = smul.addr %s1878, 4
    %s1880 = scalar_lea.vmem [#allocation2], %s1879
    %1881 = vst.msk [vmem:[%s1880] sm:$0xf] %vm35, %v1813
    %1882 = vst.msk [vmem:[%s1880 + $0x4] sm:$0xf] %vm35, %v1814
    %1883 = vst.msk [vmem:[%s1880 + $0x8] sm:$0xf] %vm35, %v1815
    %1884 = vst.msk [vmem:[%s1880 + $0xc] sm:$0xf] %vm35, %v1816
    %1885 = vst.msk [vmem:[%s1880 + $0x10] sm:$0xf] %vm35, %v1817
    %1886 = vst.msk [vmem:[%s1880 + $0x14] sm:$0xf] %vm35, %v1818
    %1887 = vst.msk [vmem:[%s1880 + $0x18] sm:$0xf] %vm35, %v1819
    %1888 = vst.msk [vmem:[%s1880 + $0x1c] sm:$0xf] %vm35, %v1820
    %1889 = vst.msk [vmem:[%s1880 + $0x20] sm:$0xf] %vm35, %v1821
    %1890 = vst.msk [vmem:[%s1880 + $0x24] sm:$0xf] %vm35, %v1822
    %1891 = vst.msk [vmem:[%s1880 + $0x28] sm:$0xf] %vm35, %v1823
    %1892 = vst.msk [vmem:[%s1880 + $0x2c] sm:$0xf] %vm35, %v1824
    %1893 = vst.msk [vmem:[%s1880 + $0x30] sm:$0xf] %vm35, %v1825
    %1894 = vst.msk [vmem:[%s1880 + $0x34] sm:$0xf] %vm35, %v1826
    %1895 = vst.msk [vmem:[%s1880 + $0x38] sm:$0xf] %vm35, %v1827
    %1896 = vst.msk [vmem:[%s1880 + $0x3c] sm:$0xf] %vm35, %v1828
    %1897 = vst.msk [vmem:[%s1880 + $0x40] sm:$0xf] %vm35, %v1829
    %1898 = vst.msk [vmem:[%s1880 + $0x44] sm:$0xf] %vm35, %v1830
    %1899 = vst.msk [vmem:[%s1880 + $0x48] sm:$0xf] %vm35, %v1831
    %1900 = vst.msk [vmem:[%s1880 + $0x4c] sm:$0xf] %vm35, %v1832
    %1901 = vst.msk [vmem:[%s1880 + $0x50] sm:$0xf] %vm35, %v1833
    %1902 = vst.msk [vmem:[%s1880 + $0x54] sm:$0xf] %vm35, %v1834
    %1903 = vst.msk [vmem:[%s1880 + $0x58] sm:$0xf] %vm35, %v1835
    %1904 = vst.msk [vmem:[%s1880 + $0x5c] sm:$0xf] %vm35, %v1836
    %1905 = vst.msk [vmem:[%s1880 + $0x60] sm:$0xf] %vm35, %v1837
    %1906 = vst.msk [vmem:[%s1880 + $0x64] sm:$0xf] %vm35, %v1838
    %1907 = vst.msk [vmem:[%s1880 + $0x68] sm:$0xf] %vm35, %v1839
    %1908 = vst.msk [vmem:[%s1880 + $0x6c] sm:$0xf] %vm35, %v1840
    %1909 = vst.msk [vmem:[%s1880 + $0x70] sm:$0xf] %vm35, %v1841
    %1910 = vst.msk [vmem:[%s1880 + $0x74] sm:$0xf] %vm35, %v1842
    %1911 = vst.msk [vmem:[%s1880 + $0x78] sm:$0xf] %vm35, %v1843
    %1912 = vst.msk [vmem:[%s1880 + $0x7c] sm:$0xf] %vm35, %v1844
  $region42: #{simple_discriminator_forward.1} parent=0 // loop_footer
    %s188 = sadd.s32 1, %s184
  $region43: #{simple_discriminator_forward.1} parent=0 // loop_footer_branch
    %183 = sbr.rel target = $region39
  $region44: #{simple_discriminator_forward.1} parent=0 // loop_exit
    _
  %vm1913 = vcmask 257024
  %1914 = vst.msk [vmem:[#allocation3] sm:$0xf] %vm1913, 0
  %1915 = vst.msk [vmem:[#allocation3 + $0x4] sm:$0xf] %vm1913, 0
  %1916 = vst.msk [vmem:[#allocation3 + $0x8] sm:$0xf] %vm1913, 0
  %1917 = vst.msk [vmem:[#allocation3 + $0xc] sm:$0xf] %vm1913, 0
  %1918 = vst.msk [vmem:[#allocation3 + $0x10] sm:$0xf] %vm1913, 0
  %1919 = vst.msk [vmem:[#allocation3 + $0x14] sm:$0xf] %vm1913, 0
  %1920 = vst.msk [vmem:[#allocation3 + $0x18] sm:$0xf] %vm1913, 0
  %1921 = vst.msk [vmem:[#allocation3 + $0x1c] sm:$0xf] %vm1913, 0
  %1922 = vst.msk [vmem:[#allocation3 + $0x20] sm:$0xf] %vm1913, 0
  %1923 = vst.msk [vmem:[#allocation3 + $0x24] sm:$0xf] %vm1913, 0
  %1924 = vst.msk [vmem:[#allocation3 + $0x28] sm:$0xf] %vm1913, 0
  %1925 = vst.msk [vmem:[#allocation3 + $0x2c] sm:$0xf] %vm1913, 0
  %1926 = vst.msk [vmem:[#allocation3 + $0x30] sm:$0xf] %vm1913, 0
  %1927 = vst.msk [vmem:[#allocation3 + $0x34] sm:$0xf] %vm1913, 0
  %1928 = vst.msk [vmem:[#allocation3 + $0x38] sm:$0xf] %vm1913, 0
  %1929 = vst.msk [vmem:[#allocation3 + $0x3c] sm:$0xf] %vm1913, 0
  %1930 = vst.msk [vmem:[#allocation3 + $0x40] sm:$0xf] %vm1913, 0
  %1931 = vst.msk [vmem:[#allocation3 + $0x44] sm:$0xf] %vm1913, 0
  %1932 = vst.msk [vmem:[#allocation3 + $0x48] sm:$0xf] %vm1913, 0
  %1933 = vst.msk [vmem:[#allocation3 + $0x4c] sm:$0xf] %vm1913, 0
  %s1934 = scalar_lea.vmem [#allocation3], 720
  %1935 = vst.msk [vmem:[%s1934] sm:$0xf] %vm1913, 0
  %1936 = vst.msk [vmem:[%s1934 + $0x4] sm:$0xf] %vm1913, 0
  %1937 = vst.msk [vmem:[%s1934 + $0x8] sm:$0xf] %vm1913, 0
  %1938 = vst.msk [vmem:[%s1934 + $0xc] sm:$0xf] %vm1913, 0
  %1939 = vst.msk [vmem:[%s1934 + $0x10] sm:$0xf] %vm1913, 0
  %1940 = vst.msk [vmem:[%s1934 + $0x14] sm:$0xf] %vm1913, 0
  %1941 = vst.msk [vmem:[%s1934 + $0x18] sm:$0xf] %vm1913, 0
  %1942 = vst.msk [vmem:[%s1934 + $0x1c] sm:$0xf] %vm1913, 0
  %1943 = vst.msk [vmem:[%s1934 + $0x20] sm:$0xf] %vm1913, 0
  %1944 = vst.msk [vmem:[%s1934 + $0x24] sm:$0xf] %vm1913, 0
  %1945 = vst.msk [vmem:[%s1934 + $0x28] sm:$0xf] %vm1913, 0
  %1946 = vst.msk [vmem:[%s1934 + $0x2c] sm:$0xf] %vm1913, 0
  %1947 = vst.msk [vmem:[%s1934 + $0x30] sm:$0xf] %vm1913, 0
  %1948 = vst.msk [vmem:[%s1934 + $0x34] sm:$0xf] %vm1913, 0
  %1949 = vst.msk [vmem:[%s1934 + $0x38] sm:$0xf] %vm1913, 0
  %1950 = vst.msk [vmem:[%s1934 + $0x3c] sm:$0xf] %vm1913, 0
  %1951 = vst.msk [vmem:[%s1934 + $0x40] sm:$0xf] %vm1913, 0
  %1952 = vst.msk [vmem:[%s1934 + $0x44] sm:$0xf] %vm1913, 0
  %1953 = vst.msk [vmem:[%s1934 + $0x48] sm:$0xf] %vm1913, 0
  %1954 = vst.msk [vmem:[%s1934 + $0x4c] sm:$0xf] %vm1913, 0
  %1955 = vst.msk [vmem:[#allocation3] sm:$0xf] %vm1913, 0
  %1956 = vst.msk [vmem:[#allocation3 + $0x4] sm:$0xf] %vm1913, 0
  %1957 = vst.msk [vmem:[#allocation3 + $0x50] sm:$0xf] %vm1913, 0
  %1958 = vst.msk [vmem:[#allocation3 + $0x54] sm:$0xf] %vm1913, 0
  %1959 = vst.msk [vmem:[#allocation3 + $0xa0] sm:$0xf] %vm1913, 0
  %1960 = vst.msk [vmem:[#allocation3 + $0xa4] sm:$0xf] %vm1913, 0
  %1961 = vst.msk [vmem:[#allocation3 + $0xf0] sm:$0xf] %vm1913, 0
  %1962 = vst.msk [vmem:[#allocation3 + $0xf4] sm:$0xf] %vm1913, 0
  %1963 = vst.msk [vmem:[#allocation3 + $0x140] sm:$0xf] %vm1913, 0
  %1964 = vst.msk [vmem:[#allocation3 + $0x144] sm:$0xf] %vm1913, 0
  %1965 = vst.msk [vmem:[#allocation3 + $0x190] sm:$0xf] %vm1913, 0
  %1966 = vst.msk [vmem:[#allocation3 + $0x194] sm:$0xf] %vm1913, 0
  %1967 = vst.msk [vmem:[#allocation3 + $0x1e0] sm:$0xf] %vm1913, 0
  %1968 = vst.msk [vmem:[#allocation3 + $0x1e4] sm:$0xf] %vm1913, 0
  %1969 = vst.msk [vmem:[#allocation3 + $0x230] sm:$0xf] %vm1913, 0
  %1970 = vst.msk [vmem:[#allocation3 + $0x234] sm:$0xf] %vm1913, 0
  %1971 = vst.msk [vmem:[#allocation3 + $0x280] sm:$0xf] %vm1913, 0
  %1972 = vst.msk [vmem:[#allocation3 + $0x284] sm:$0xf] %vm1913, 0
  %1973 = vst.msk [vmem:[#allocation3 + $0x2d0] sm:$0xf] %vm1913, 0
  %1974 = vst.msk [vmem:[#allocation3 + $0x2d4] sm:$0xf] %vm1913, 0
  %s1975 = scalar_lea.vmem [#allocation3], 72
  %1976 = vst.msk [vmem:[%s1975] sm:$0xf] %vm1913, 0
  %1977 = vst.msk [vmem:[%s1975 + $0x4] sm:$0xf] %vm1913, 0
  %1978 = vst.msk [vmem:[%s1975 + $0x50] sm:$0xf] %vm1913, 0
  %1979 = vst.msk [vmem:[%s1975 + $0x54] sm:$0xf] %vm1913, 0
  %1980 = vst.msk [vmem:[%s1975 + $0xa0] sm:$0xf] %vm1913, 0
  %1981 = vst.msk [vmem:[%s1975 + $0xa4] sm:$0xf] %vm1913, 0
  %1982 = vst.msk [vmem:[%s1975 + $0xf0] sm:$0xf] %vm1913, 0
  %1983 = vst.msk [vmem:[%s1975 + $0xf4] sm:$0xf] %vm1913, 0
  %1984 = vst.msk [vmem:[%s1975 + $0x140] sm:$0xf] %vm1913, 0
  %1985 = vst.msk [vmem:[%s1975 + $0x144] sm:$0xf] %vm1913, 0
  %1986 = vst.msk [vmem:[%s1975 + $0x190] sm:$0xf] %vm1913, 0
  %1987 = vst.msk [vmem:[%s1975 + $0x194] sm:$0xf] %vm1913, 0
  %1988 = vst.msk [vmem:[%s1975 + $0x1e0] sm:$0xf] %vm1913, 0
  %1989 = vst.msk [vmem:[%s1975 + $0x1e4] sm:$0xf] %vm1913, 0
  %1990 = vst.msk [vmem:[%s1975 + $0x230] sm:$0xf] %vm1913, 0
  %1991 = vst.msk [vmem:[%s1975 + $0x234] sm:$0xf] %vm1913, 0
  %1992 = vst.msk [vmem:[%s1975 + $0x280] sm:$0xf] %vm1913, 0
  %1993 = vst.msk [vmem:[%s1975 + $0x284] sm:$0xf] %vm1913, 0
  %1994 = vst.msk [vmem:[%s1975 + $0x2d0] sm:$0xf] %vm1913, 0
  %1995 = vst.msk [vmem:[%s1975 + $0x2d4] sm:$0xf] %vm1913, 0
  %v1996 = vld [vmem:[%s4] sm:$0x1]
  loop: start=0, step=1, limit=8
  $region45: #{simple_discriminator_forward.1} parent=0 // loop_pre_header
    _
  $region46: #{simple_discriminator_forward.1} parent=0 // loop_header
    %s1998 = sphi 0, %s2002
    %p1999 = scmp.ge.s32.totalorder %s1998, 8
  $region47: #{simple_discriminator_forward.1} parent=0 // loop_header_branch
    %2001 = sbr.rel (%p1999) target = $region51
  $region48: #{simple_discriminator_forward.1} parent=0 // loop_body
    %s2003 = smul.u32 %s1998, 2
    %s2004 = smul.u32 %s2003, 36
    %s2005 = smul.addr %s2004, 4
    %s2006 = scalar_lea.vmem [#allocation2], %s2005
    %v2007 = vld [vmem:[%s2006] sm:$0xf]
    %v2008 = vld [vmem:[%s2006 + $0x4] sm:$0xf]
    %v2009 = vld [vmem:[%s2006 + $0x8] sm:$0xf]
    %v2010 = vld [vmem:[%s2006 + $0xc] sm:$0xf]
    %v2011 = vld [vmem:[%s2006 + $0x10] sm:$0xf]
    %v2012 = vld [vmem:[%s2006 + $0x14] sm:$0xf]
    %v2013 = vld [vmem:[%s2006 + $0x18] sm:$0xf]
    %v2014 = vld [vmem:[%s2006 + $0x1c] sm:$0xf]
    %v2015 = vld [vmem:[%s2006 + $0x20] sm:$0xf]
    %v2016 = vld [vmem:[%s2006 + $0x24] sm:$0xf]
    %v2017 = vld [vmem:[%s2006 + $0x28] sm:$0xf]
    %v2018 = vld [vmem:[%s2006 + $0x2c] sm:$0xf]
    %v2019 = vld [vmem:[%s2006 + $0x30] sm:$0xf]
    %v2020 = vld [vmem:[%s2006 + $0x34] sm:$0xf]
    %v2021 = vld [vmem:[%s2006 + $0x38] sm:$0xf]
    %v2022 = vld [vmem:[%s2006 + $0x3c] sm:$0xf]
    %v2023 = vld [vmem:[%s2006 + $0x40] sm:$0xf]
    %v2024 = vld [vmem:[%s2006 + $0x44] sm:$0xf]
    %v2025 = vld [vmem:[%s2006 + $0x48] sm:$0xf]
    %v2026 = vld [vmem:[%s2006 + $0x4c] sm:$0xf]
    %v2027 = vld [vmem:[%s2006 + $0x50] sm:$0xf]
    %v2028 = vld [vmem:[%s2006 + $0x54] sm:$0xf]
    %v2029 = vld [vmem:[%s2006 + $0x58] sm:$0xf]
    %v2030 = vld [vmem:[%s2006 + $0x5c] sm:$0xf]
    %v2031 = vld [vmem:[%s2006 + $0x60] sm:$0xf]
    %v2032 = vld [vmem:[%s2006 + $0x64] sm:$0xf]
    %v2033 = vld [vmem:[%s2006 + $0x68] sm:$0xf]
    %v2034 = vld [vmem:[%s2006 + $0x6c] sm:$0xf]
    %v2035 = vld [vmem:[%s2006 + $0x70] sm:$0xf]
    %v2036 = vld [vmem:[%s2006 + $0x74] sm:$0xf]
    %v2037 = vld [vmem:[%s2006 + $0x78] sm:$0xf]
    %v2038 = vld [vmem:[%s2006 + $0x7c] sm:$0xf]
    %v2039 = vld [vmem:[%s2006 + $0x80] sm:$0xf]
    %v2040 = vld [vmem:[%s2006 + $0x84] sm:$0xf]
    %s2041 = sadd.s32 %s2003, 1
    %s2042 = smul.u32 %s2041, 36
    %s2043 = smul.addr %s2042, 4
    %s2044 = scalar_lea.vmem [#allocation2], %s2043
    %v2045 = vld [vmem:[%s2044] sm:$0xf]
    %v2046 = vld [vmem:[%s2044 + $0x4] sm:$0xf]
    %v2047 = vld [vmem:[%s2044 + $0x8] sm:$0xf]
    %v2048 = vld [vmem:[%s2044 + $0xc] sm:$0xf]
    %v2049 = vld [vmem:[%s2044 + $0x10] sm:$0xf]
    %v2050 = vld [vmem:[%s2044 + $0x14] sm:$0xf]
    %v2051 = vld [vmem:[%s2044 + $0x18] sm:$0xf]
    %v2052 = vld [vmem:[%s2044 + $0x1c] sm:$0xf]
    %v2053 = vld [vmem:[%s2044 + $0x20] sm:$0xf]
    %v2054 = vld [vmem:[%s2044 + $0x24] sm:$0xf]
    %v2055 = vld [vmem:[%s2044 + $0x28] sm:$0xf]
    %v2056 = vld [vmem:[%s2044 + $0x2c] sm:$0xf]
    %v2057 = vld [vmem:[%s2044 + $0x30] sm:$0xf]
    %v2058 = vld [vmem:[%s2044 + $0x34] sm:$0xf]
    %v2059 = vld [vmem:[%s2044 + $0x38] sm:$0xf]
    %v2060 = vld [vmem:[%s2044 + $0x3c] sm:$0xf]
    %v2061 = vld [vmem:[%s2044 + $0x40] sm:$0xf]
    %v2062 = vld [vmem:[%s2044 + $0x44] sm:$0xf]
    %v2063 = vld [vmem:[%s2044 + $0x48] sm:$0xf]
    %v2064 = vld [vmem:[%s2044 + $0x4c] sm:$0xf]
    %v2065 = vld [vmem:[%s2044 + $0x50] sm:$0xf]
    %v2066 = vld [vmem:[%s2044 + $0x54] sm:$0xf]
    %v2067 = vld [vmem:[%s2044 + $0x58] sm:$0xf]
    %v2068 = vld [vmem:[%s2044 + $0x5c] sm:$0xf]
    %v2069 = vld [vmem:[%s2044 + $0x60] sm:$0xf]
    %v2070 = vld [vmem:[%s2044 + $0x64] sm:$0xf]
    %v2071 = vld [vmem:[%s2044 + $0x68] sm:$0xf]
    %v2072 = vld [vmem:[%s2044 + $0x6c] sm:$0xf]
    %v2073 = vld [vmem:[%s2044 + $0x70] sm:$0xf]
    %v2074 = vld [vmem:[%s2044 + $0x74] sm:$0xf]
    %v2075 = vld [vmem:[%s2044 + $0x78] sm:$0xf]
    %v2076 = vld [vmem:[%s2044 + $0x7c] sm:$0xf]
    %v2077 = vld [vmem:[%s2044 + $0x80] sm:$0xf]
    %v2078 = vld [vmem:[%s2044 + $0x84] sm:$0xf]
    %s2079 = sadd.s32 %s2003, 2
    %s2080 = smul.u32 %s2079, 36
    %s2081 = smul.addr %s2080, 4
    %s2082 = scalar_lea.vmem [#allocation2], %s2081
    %v2083 = vld [vmem:[%s2082] sm:$0xf]
    %v2084 = vld [vmem:[%s2082 + $0x4] sm:$0xf]
    %v2085 = vld [vmem:[%s2082 + $0x8] sm:$0xf]
    %v2086 = vld [vmem:[%s2082 + $0xc] sm:$0xf]
    %v2087 = vld [vmem:[%s2082 + $0x10] sm:$0xf]
    %v2088 = vld [vmem:[%s2082 + $0x14] sm:$0xf]
    %v2089 = vld [vmem:[%s2082 + $0x18] sm:$0xf]
    %v2090 = vld [vmem:[%s2082 + $0x1c] sm:$0xf]
    %v2091 = vld [vmem:[%s2082 + $0x20] sm:$0xf]
    %v2092 = vld [vmem:[%s2082 + $0x24] sm:$0xf]
    %v2093 = vld [vmem:[%s2082 + $0x28] sm:$0xf]
    %v2094 = vld [vmem:[%s2082 + $0x2c] sm:$0xf]
    %v2095 = vld [vmem:[%s2082 + $0x30] sm:$0xf]
    %v2096 = vld [vmem:[%s2082 + $0x34] sm:$0xf]
    %v2097 = vld [vmem:[%s2082 + $0x38] sm:$0xf]
    %v2098 = vld [vmem:[%s2082 + $0x3c] sm:$0xf]
    %v2099 = vld [vmem:[%s2082 + $0x40] sm:$0xf]
    %v2100 = vld [vmem:[%s2082 + $0x44] sm:$0xf]
    %v2101 = vld [vmem:[%s2082 + $0x48] sm:$0xf]
    %v2102 = vld [vmem:[%s2082 + $0x4c] sm:$0xf]
    %v2103 = vld [vmem:[%s2082 + $0x50] sm:$0xf]
    %v2104 = vld [vmem:[%s2082 + $0x54] sm:$0xf]
    %v2105 = vld [vmem:[%s2082 + $0x58] sm:$0xf]
    %v2106 = vld [vmem:[%s2082 + $0x5c] sm:$0xf]
    %v2107 = vld [vmem:[%s2082 + $0x60] sm:$0xf]
    %v2108 = vld [vmem:[%s2082 + $0x64] sm:$0xf]
    %v2109 = vld [vmem:[%s2082 + $0x68] sm:$0xf]
    %v2110 = vld [vmem:[%s2082 + $0x6c] sm:$0xf]
    %v2111 = vld [vmem:[%s2082 + $0x70] sm:$0xf]
    %v2112 = vld [vmem:[%s2082 + $0x74] sm:$0xf]
    %v2113 = vld [vmem:[%s2082 + $0x78] sm:$0xf]
    %v2114 = vld [vmem:[%s2082 + $0x7c] sm:$0xf]
    %v2115 = vld [vmem:[%s2082 + $0x80] sm:$0xf]
    %v2116 = vld [vmem:[%s2082 + $0x84] sm:$0xf]
    %v2133 = vunpack.c.l.b16 %v2007
    %v2134 = vunpack.c.l.b16 %v2008
    %v2135 = vunpack.c.l.b16 %v2011
    %v2136 = vunpack.c.l.b16 %v2012
    %v2137 = vunpack.c.l.b16 %v2015
    %v2138 = vunpack.c.l.b16 %v2016
    %v2139 = vunpack.c.l.b16 %v2019
    %v2140 = vunpack.c.l.b16 %v2020
    %v2141 = vunpack.c.l.b16 %v2023
    %v2142 = vunpack.c.l.b16 %v2024
    %v2143 = vunpack.c.l.b16 %v2027
    %v2144 = vunpack.c.l.b16 %v2028
    %v2145 = vunpack.c.l.b16 %v2031
    %v2146 = vunpack.c.l.b16 %v2032
    %v2147 = vunpack.c.l.b16 %v2035
    %v2148 = vunpack.c.l.b16 %v2036
    %v2149 = vpack.c.b16 %v2134, %v2133
    %v2150 = vpack.c.b16 %v2136, %v2135
    %v2151 = vpack.c.b16 %v2138, %v2137
    %v2152 = vpack.c.b16 %v2140, %v2139
    %v2153 = vpack.c.b16 %v2142, %v2141
    %v2154 = vpack.c.b16 %v2144, %v2143
    %v2155 = vpack.c.b16 %v2146, %v2145
    %v2156 = vpack.c.b16 %v2148, %v2147
    %v2173 = vunpack.c.l.b16 %v2009
    %v2174 = vunpack.c.l.b16 %v2010
    %v2175 = vunpack.c.l.b16 %v2013
    %v2176 = vunpack.c.l.b16 %v2014
    %v2177 = vunpack.c.l.b16 %v2017
    %v2178 = vunpack.c.l.b16 %v2018
    %v2179 = vunpack.c.l.b16 %v2021
    %v2180 = vunpack.c.l.b16 %v2022
    %v2181 = vunpack.c.l.b16 %v2025
    %v2182 = vunpack.c.l.b16 %v2026
    %v2183 = vunpack.c.l.b16 %v2029
    %v2184 = vunpack.c.l.b16 %v2030
    %v2185 = vunpack.c.l.b16 %v2033
    %v2186 = vunpack.c.l.b16 %v2034
    %v2187 = vunpack.c.l.b16 %v2037
    %v2188 = vunpack.c.l.b16 %v2038
    %v2189 = vpack.c.b16 %v2174, %v2173
    %v2190 = vpack.c.b16 %v2176, %v2175
    %v2191 = vpack.c.b16 %v2178, %v2177
    %v2192 = vpack.c.b16 %v2180, %v2179
    %v2193 = vpack.c.b16 %v2182, %v2181
    %v2194 = vpack.c.b16 %v2184, %v2183
    %v2195 = vpack.c.b16 %v2186, %v2185
    %v2196 = vpack.c.b16 %v2188, %v2187
    %2197 = vrot.lane.b32.xlu0 %v2189, 16
    %v2198 = vpop.permute.xlu0 %2197
    %2199 = vrot.lane.b32.xlu0 %v2190, 16
    %v2200 = vpop.permute.xlu0 %2199
    %2201 = vrot.lane.b32.xlu0 %v2191, 16
    %v2202 = vpop.permute.xlu0 %2201
    %2203 = vrot.lane.b32.xlu0 %v2192, 16
    %v2204 = vpop.permute.xlu0 %2203
    %2205 = vrot.lane.b32.xlu0 %v2193, 16
    %v2206 = vpop.permute.xlu0 %2205
    %2207 = vrot.lane.b32.xlu0 %v2194, 16
    %v2208 = vpop.permute.xlu0 %2207
    %2209 = vrot.lane.b32.xlu0 %v2195, 16
    %v2210 = vpop.permute.xlu0 %2209
    %2211 = vrot.lane.b32.xlu0 %v2196, 16
    %v2212 = vpop.permute.xlu0 %2211
    %v2215 = vunpack.c.l.b16 %v2039
    %v2216 = vunpack.c.l.b16 %v2040
    %v2217 = vpack.c.b16 %v2216, %v2215
    %2218 = vrot.lane.b32.xlu0 %v2150, 32
    %v2219 = vpop.permute.xlu0 %2218
    %2220 = vrot.lane.b32.xlu0 %v2151, 32
    %v2221 = vpop.permute.xlu0 %2220
    %2222 = vrot.lane.b32.xlu0 %v2152, 32
    %v2223 = vpop.permute.xlu0 %2222
    %2224 = vrot.lane.b32.xlu0 %v2153, 32
    %v2225 = vpop.permute.xlu0 %2224
    %2226 = vrot.lane.b32.xlu0 %v2154, 32
    %v2227 = vpop.permute.xlu0 %2226
    %2228 = vrot.lane.b32.xlu0 %v2155, 32
    %v2229 = vpop.permute.xlu0 %2228
    %2230 = vrot.lane.b32.xlu0 %v2156, 32
    %v2231 = vpop.permute.xlu0 %2230
    %2232 = vrot.lane.b32.xlu0 %v2217, 32
    %v2233 = vpop.permute.xlu0 %2232
    %v2250 = vunpack.c.l.b16 %v2045
    %v2251 = vunpack.c.l.b16 %v2046
    %v2252 = vunpack.c.l.b16 %v2049
    %v2253 = vunpack.c.l.b16 %v2050
    %v2254 = vunpack.c.l.b16 %v2053
    %v2255 = vunpack.c.l.b16 %v2054
    %v2256 = vunpack.c.l.b16 %v2057
    %v2257 = vunpack.c.l.b16 %v2058
    %v2258 = vunpack.c.l.b16 %v2061
    %v2259 = vunpack.c.l.b16 %v2062
    %v2260 = vunpack.c.l.b16 %v2065
    %v2261 = vunpack.c.l.b16 %v2066
    %v2262 = vunpack.c.l.b16 %v2069
    %v2263 = vunpack.c.l.b16 %v2070
    %v2264 = vunpack.c.l.b16 %v2073
    %v2265 = vunpack.c.l.b16 %v2074
    %v2266 = vpack.c.b16 %v2251, %v2250
    %v2267 = vpack.c.b16 %v2253, %v2252
    %v2268 = vpack.c.b16 %v2255, %v2254
    %v2269 = vpack.c.b16 %v2257, %v2256
    %v2270 = vpack.c.b16 %v2259, %v2258
    %v2271 = vpack.c.b16 %v2261, %v2260
    %v2272 = vpack.c.b16 %v2263, %v2262
    %v2273 = vpack.c.b16 %v2265, %v2264
    %2274 = vrot.lane.b32.xlu0 %v2266, 48
    %v2275 = vpop.permute.xlu0 %2274
    %2276 = vrot.lane.b32.xlu0 %v2267, 48
    %v2277 = vpop.permute.xlu0 %2276
    %2278 = vrot.lane.b32.xlu0 %v2268, 48
    %v2279 = vpop.permute.xlu0 %2278
    %2280 = vrot.lane.b32.xlu0 %v2269, 48
    %v2281 = vpop.permute.xlu0 %2280
    %2282 = vrot.lane.b32.xlu0 %v2270, 48
    %v2283 = vpop.permute.xlu0 %2282
    %2284 = vrot.lane.b32.xlu0 %v2271, 48
    %v2285 = vpop.permute.xlu0 %2284
    %2286 = vrot.lane.b32.xlu0 %v2272, 48
    %v2287 = vpop.permute.xlu0 %2286
    %2288 = vrot.lane.b32.xlu0 %v2273, 48
    %v2289 = vpop.permute.xlu0 %2288
    %v2306 = vunpack.c.l.b16 %v2047
    %v2307 = vunpack.c.l.b16 %v2048
    %v2308 = vunpack.c.l.b16 %v2051
    %v2309 = vunpack.c.l.b16 %v2052
    %v2310 = vunpack.c.l.b16 %v2055
    %v2311 = vunpack.c.l.b16 %v2056
    %v2312 = vunpack.c.l.b16 %v2059
    %v2313 = vunpack.c.l.b16 %v2060
    %v2314 = vunpack.c.l.b16 %v2063
    %v2315 = vunpack.c.l.b16 %v2064
    %v2316 = vunpack.c.l.b16 %v2067
    %v2317 = vunpack.c.l.b16 %v2068
    %v2318 = vunpack.c.l.b16 %v2071
    %v2319 = vunpack.c.l.b16 %v2072
    %v2320 = vunpack.c.l.b16 %v2075
    %v2321 = vunpack.c.l.b16 %v2076
    %v2322 = vpack.c.b16 %v2307, %v2306
    %v2323 = vpack.c.b16 %v2309, %v2308
    %v2324 = vpack.c.b16 %v2311, %v2310
    %v2325 = vpack.c.b16 %v2313, %v2312
    %v2326 = vpack.c.b16 %v2315, %v2314
    %v2327 = vpack.c.b16 %v2317, %v2316
    %v2328 = vpack.c.b16 %v2319, %v2318
    %v2329 = vpack.c.b16 %v2321, %v2320
    %2330 = vrot.lane.b32.xlu0 %v2322, 64
    %v2331 = vpop.permute.xlu0 %2330
    %2332 = vrot.lane.b32.xlu0 %v2323, 64
    %v2333 = vpop.permute.xlu0 %2332
    %2334 = vrot.lane.b32.xlu0 %v2324, 64
    %v2335 = vpop.permute.xlu0 %2334
    %2336 = vrot.lane.b32.xlu0 %v2325, 64
    %v2337 = vpop.permute.xlu0 %2336
    %2338 = vrot.lane.b32.xlu0 %v2326, 64
    %v2339 = vpop.permute.xlu0 %2338
    %2340 = vrot.lane.b32.xlu0 %v2327, 64
    %v2341 = vpop.permute.xlu0 %2340
    %2342 = vrot.lane.b32.xlu0 %v2328, 64
    %v2343 = vpop.permute.xlu0 %2342
    %2344 = vrot.lane.b32.xlu0 %v2329, 64
    %v2345 = vpop.permute.xlu0 %2344
    %v2348 = vunpack.c.l.b16 %v2077
    %v2349 = vunpack.c.l.b16 %v2078
    %v2350 = vpack.c.b16 %v2349, %v2348
    %2351 = vrot.lane.b32.xlu0 %v2267, 80
    %v2352 = vpop.permute.xlu0 %2351
    %2353 = vrot.lane.b32.xlu0 %v2268, 80
    %v2354 = vpop.permute.xlu0 %2353
    %2355 = vrot.lane.b32.xlu0 %v2269, 80
    %v2356 = vpop.permute.xlu0 %2355
    %2357 = vrot.lane.b32.xlu0 %v2270, 80
    %v2358 = vpop.permute.xlu0 %2357
    %2359 = vrot.lane.b32.xlu0 %v2271, 80
    %v2360 = vpop.permute.xlu0 %2359
    %2361 = vrot.lane.b32.xlu0 %v2272, 80
    %v2362 = vpop.permute.xlu0 %2361
    %2363 = vrot.lane.b32.xlu0 %v2273, 80
    %v2364 = vpop.permute.xlu0 %2363
    %2365 = vrot.lane.b32.xlu0 %v2350, 80
    %v2366 = vpop.permute.xlu0 %2365
    %v2383 = vunpack.c.l.b16 %v2083
    %v2384 = vunpack.c.l.b16 %v2084
    %v2385 = vunpack.c.l.b16 %v2087
    %v2386 = vunpack.c.l.b16 %v2088
    %v2387 = vunpack.c.l.b16 %v2091
    %v2388 = vunpack.c.l.b16 %v2092
    %v2389 = vunpack.c.l.b16 %v2095
    %v2390 = vunpack.c.l.b16 %v2096
    %v2391 = vunpack.c.l.b16 %v2099
    %v2392 = vunpack.c.l.b16 %v2100
    %v2393 = vunpack.c.l.b16 %v2103
    %v2394 = vunpack.c.l.b16 %v2104
    %v2395 = vunpack.c.l.b16 %v2107
    %v2396 = vunpack.c.l.b16 %v2108
    %v2397 = vunpack.c.l.b16 %v2111
    %v2398 = vunpack.c.l.b16 %v2112
    %v2399 = vpack.c.b16 %v2384, %v2383
    %v2400 = vpack.c.b16 %v2386, %v2385
    %v2401 = vpack.c.b16 %v2388, %v2387
    %v2402 = vpack.c.b16 %v2390, %v2389
    %v2403 = vpack.c.b16 %v2392, %v2391
    %v2404 = vpack.c.b16 %v2394, %v2393
    %v2405 = vpack.c.b16 %v2396, %v2395
    %v2406 = vpack.c.b16 %v2398, %v2397
    %2407 = vrot.lane.b32.xlu0 %v2399, 96
    %v2408 = vpop.permute.xlu0 %2407
    %2409 = vrot.lane.b32.xlu0 %v2400, 96
    %v2410 = vpop.permute.xlu0 %2409
    %2411 = vrot.lane.b32.xlu0 %v2401, 96
    %v2412 = vpop.permute.xlu0 %2411
    %2413 = vrot.lane.b32.xlu0 %v2402, 96
    %v2414 = vpop.permute.xlu0 %2413
    %2415 = vrot.lane.b32.xlu0 %v2403, 96
    %v2416 = vpop.permute.xlu0 %2415
    %2417 = vrot.lane.b32.xlu0 %v2404, 96
    %v2418 = vpop.permute.xlu0 %2417
    %2419 = vrot.lane.b32.xlu0 %v2405, 96
    %v2420 = vpop.permute.xlu0 %2419
    %2421 = vrot.lane.b32.xlu0 %v2406, 96
    %v2422 = vpop.permute.xlu0 %2421
    %v2439 = vunpack.c.l.b16 %v2085
    %v2440 = vunpack.c.l.b16 %v2086
    %v2441 = vunpack.c.l.b16 %v2089
    %v2442 = vunpack.c.l.b16 %v2090
    %v2443 = vunpack.c.l.b16 %v2093
    %v2444 = vunpack.c.l.b16 %v2094
    %v2445 = vunpack.c.l.b16 %v2097
    %v2446 = vunpack.c.l.b16 %v2098
    %v2447 = vunpack.c.l.b16 %v2101
    %v2448 = vunpack.c.l.b16 %v2102
    %v2449 = vunpack.c.l.b16 %v2105
    %v2450 = vunpack.c.l.b16 %v2106
    %v2451 = vunpack.c.l.b16 %v2109
    %v2452 = vunpack.c.l.b16 %v2110
    %v2453 = vunpack.c.l.b16 %v2113
    %v2454 = vunpack.c.l.b16 %v2114
    %v2455 = vpack.c.b16 %v2440, %v2439
    %v2456 = vpack.c.b16 %v2442, %v2441
    %v2457 = vpack.c.b16 %v2444, %v2443
    %v2458 = vpack.c.b16 %v2446, %v2445
    %v2459 = vpack.c.b16 %v2448, %v2447
    %v2460 = vpack.c.b16 %v2450, %v2449
    %v2461 = vpack.c.b16 %v2452, %v2451
    %v2462 = vpack.c.b16 %v2454, %v2453
    %2463 = vrot.lane.b32.xlu0 %v2455, 112
    %v2464 = vpop.permute.xlu0 %2463
    %2465 = vrot.lane.b32.xlu0 %v2456, 112
    %v2466 = vpop.permute.xlu0 %2465
    %2467 = vrot.lane.b32.xlu0 %v2457, 112
    %v2468 = vpop.permute.xlu0 %2467
    %2469 = vrot.lane.b32.xlu0 %v2458, 112
    %v2470 = vpop.permute.xlu0 %2469
    %2471 = vrot.lane.b32.xlu0 %v2459, 112
    %v2472 = vpop.permute.xlu0 %2471
    %2473 = vrot.lane.b32.xlu0 %v2460, 112
    %v2474 = vpop.permute.xlu0 %2473
    %2475 = vrot.lane.b32.xlu0 %v2461, 112
    %v2476 = vpop.permute.xlu0 %2475
    %2477 = vrot.lane.b32.xlu0 %v2462, 112
    %v2478 = vpop.permute.xlu0 %2477
    %v2481 = vunpack.c.l.b16 %v2115
    %v2482 = vunpack.c.l.b16 %v2116
    %v2483 = vpack.c.b16 %v2482, %v2481
    %vm2484 = vcmask 130048
    %v2487 = vsel %vm2484, %v2149, %v2198
    %v2490 = vsel %vm2484, %v2150, %v2200
    %v2493 = vsel %vm2484, %v2151, %v2202
    %v2496 = vsel %vm2484, %v2152, %v2204
    %v2499 = vsel %vm2484, %v2153, %v2206
    %v2502 = vsel %vm2484, %v2154, %v2208
    %v2505 = vsel %vm2484, %v2155, %v2210
    %v2508 = vsel %vm2484, %v2156, %v2212
    %vm2509 = vcmask 261120
    %v2511 = vsel %vm2509, %v2487, %v2219
    %v2513 = vsel %vm2509, %v2490, %v2221
    %v2515 = vsel %vm2509, %v2493, %v2223
    %v2517 = vsel %vm2509, %v2496, %v2225
    %v2519 = vsel %vm2509, %v2499, %v2227
    %v2521 = vsel %vm2509, %v2502, %v2229
    %v2523 = vsel %vm2509, %v2505, %v2231
    %v2525 = vsel %vm2509, %v2508, %v2233
    %vm2526 = vcmask 392192
    %v2528 = vsel %vm2526, %v2511, %v2275
    %v2530 = vsel %vm2526, %v2513, %v2277
    %v2532 = vsel %vm2526, %v2515, %v2279
    %v2534 = vsel %vm2526, %v2517, %v2281
    %v2536 = vsel %vm2526, %v2519, %v2283
    %v2538 = vsel %vm2526, %v2521, %v2285
    %v2540 = vsel %vm2526, %v2523, %v2287
    %v2542 = vsel %vm2526, %v2525, %v2289
    %vm2543 = vcmask 523264
    %v2545 = vsel %vm2543, %v2528, %v2331
    %v2547 = vsel %vm2543, %v2530, %v2333
    %v2549 = vsel %vm2543, %v2532, %v2335
    %v2551 = vsel %vm2543, %v2534, %v2337
    %v2553 = vsel %vm2543, %v2536, %v2339
    %v2555 = vsel %vm2543, %v2538, %v2341
    %v2557 = vsel %vm2543, %v2540, %v2343
    %v2559 = vsel %vm2543, %v2542, %v2345
    %vm2560 = vcmask 654336
    %v2562 = vsel %vm2560, %v2545, %v2352
    %v2564 = vsel %vm2560, %v2547, %v2354
    %v2566 = vsel %vm2560, %v2549, %v2356
    %v2568 = vsel %vm2560, %v2551, %v2358
    %v2570 = vsel %vm2560, %v2553, %v2360
    %v2572 = vsel %vm2560, %v2555, %v2362
    %v2574 = vsel %vm2560, %v2557, %v2364
    %v2576 = vsel %vm2560, %v2559, %v2366
    %vm2577 = vcmask 785408
    %v2579 = vsel %vm2577, %v2562, %v2408
    %v2581 = vsel %vm2577, %v2564, %v2410
    %v2583 = vsel %vm2577, %v2566, %v2412
    %v2585 = vsel %vm2577, %v2568, %v2414
    %v2587 = vsel %vm2577, %v2570, %v2416
    %v2589 = vsel %vm2577, %v2572, %v2418
    %v2591 = vsel %vm2577, %v2574, %v2420
    %v2593 = vsel %vm2577, %v2576, %v2422
    %vm2594 = vcmask 916480
    %v2596 = vsel %vm2594, %v2579, %v2464
    %v2599 = vsel %vm2594, %v2581, %v2466
    %v2602 = vsel %vm2594, %v2583, %v2468
    %v2605 = vsel %vm2594, %v2585, %v2470
    %v2608 = vsel %vm2594, %v2587, %v2472
    %v2611 = vsel %vm2594, %v2589, %v2474
    %v2614 = vsel %vm2594, %v2591, %v2476
    %v2617 = vsel %vm2594, %v2593, %v2478
    %v2619 = vld [vmem:[%s3] sm:$0xf]
    %v2620 = vld [vmem:[%s3 + $0x4] sm:$0xf]
    %v2621 = vld [vmem:[%s3 + $0x8] sm:$0xf]
    %v2622 = vld [vmem:[%s3 + $0xc] sm:$0xf]
    %v2623 = vld [vmem:[%s3 + $0x10] sm:$0xf]
    %v2624 = vld [vmem:[%s3 + $0x14] sm:$0xf]
    %v2625 = vld [vmem:[%s3 + $0x18] sm:$0xf]
    %v2626 = vld [vmem:[%s3 + $0x1c] sm:$0xf]
    %v2627 = vld [vmem:[%s3 + $0x20] sm:$0xf]
    %v2628 = vld [vmem:[%s3 + $0x24] sm:$0xf]
    %v2629 = vld [vmem:[%s3 + $0x28] sm:$0xf]
    %v2630 = vld [vmem:[%s3 + $0x2c] sm:$0xf]
    %v2631 = vld [vmem:[%s3 + $0x30] sm:$0xf]
    %v2632 = vld [vmem:[%s3 + $0x34] sm:$0xf]
    %v2633 = vld [vmem:[%s3 + $0x38] sm:$0xf]
    %v2634 = vld [vmem:[%s3 + $0x3c] sm:$0xf]
    %v2635 = vld [vmem:[%s3 + $0x40] sm:$0xf]
    %v2636 = vld [vmem:[%s3 + $0x44] sm:$0xf]
    %v2638 = vlaneseq
    %v2639 = vshrl.u32 %v2638, 7
    %v2640 = vsub.s32 0, %v2639
    %v2641 = vrot.slane %v1996, %v2640
    %v2661 = vunpack.c.l.b16 %v2619
    %v2662 = vunpack.c.l.b16 %v2620
    %v2663 = vunpack.c.l.b16 %v2621
    %v2664 = vunpack.c.l.b16 %v2622
    %v2665 = vunpack.c.l.b16 %v2623
    %v2666 = vunpack.c.l.b16 %v2624
    %v2667 = vunpack.c.l.b16 %v2625
    %v2668 = vunpack.c.l.b16 %v2626
    %v2669 = vunpack.c.l.b16 %v2627
    %v2670 = vunpack.c.l.b16 %v2628
    %v2671 = vunpack.c.l.b16 %v2629
    %v2672 = vunpack.c.l.b16 %v2630
    %v2673 = vunpack.c.l.b16 %v2631
    %v2674 = vunpack.c.l.b16 %v2632
    %v2675 = vunpack.c.l.b16 %v2633
    %v2676 = vunpack.c.l.b16 %v2634
    %v2677 = vunpack.c.l.b16 %v2635
    %v2678 = vunpack.c.l.b16 %v2636
    %v2679 = vpack.c.b16 %v2662, %v2661
    %v2680 = vpack.c.b16 %v2664, %v2663
    %v2681 = vpack.c.b16 %v2666, %v2665
    %v2682 = vpack.c.b16 %v2668, %v2667
    %v2683 = vpack.c.b16 %v2670, %v2669
    %v2684 = vpack.c.b16 %v2672, %v2671
    %v2685 = vpack.c.b16 %v2674, %v2673
    %v2686 = vpack.c.b16 %v2676, %v2675
    %v2687 = vpack.c.b16 %v2678, %v2677
    %v2698 = vsel %vm2484, %v2400, 0
    %v2701 = vsel %vm2484, %v2401, 0
    %v2704 = vsel %vm2484, %v2402, 0
    %v2707 = vsel %vm2484, %v2403, 0
    %v2710 = vsel %vm2484, %v2404, 0
    %v2713 = vsel %vm2484, %v2405, 0
    %v2716 = vsel %vm2484, %v2406, 0
    %v2719 = vsel %vm2484, %v2483, 0
    %2721 = vmatprep.subr.bf16.mxu0 0
    %2722 = vmatpush1.bf16.msra.mxu0 %v2686
    %2723 = vmatprep.subr.bf16.mxu0 0
    %2724 = vmatpush1.bf16.msra.mxu0 %v2685
    %2725 = vmatprep.subr.bf16.mxu0 0
    %2726 = vmatpush1.bf16.msra.mxu0 %v2684
    %2727 = vmatprep.subr.bf16.mxu0 0
    %2728 = vmatpush1.bf16.msra.mxu0 %v2683
    %2729 = vmatprep.subr.bf16.mxu0 0
    %2730 = vmatpush1.bf16.msra.mxu0 %v2682
    %2731 = vmatprep.subr.bf16.mxu0 0
    %2732 = vmatpush1.bf16.msra.mxu0 %v2681
    %2733 = vmatprep.subr.bf16.mxu0 0
    %2734 = vmatpush1.bf16.msra.mxu0 %v2680
    %2735 = vmatprep.subr.bf16.mxu0 0
    %2736 = vmatpush1.bf16.msra.mxu0 %v2679
    %2737 = vmatprep.subr.bf16.mxu0 0
    %2738 = vmatpush2.bf16.msra.mxu0 0
    %2739 = vmatprep.subr.bf16.mxu0 0
    %2740 = vmatpush2.bf16.msra.mxu0 0
    %2741 = vmatprep.subr.bf16.mxu0 0
    %2742 = vmatpush2.bf16.msra.mxu0 0
    %2743 = vmatprep.subr.bf16.mxu0 0
    %2744 = vmatpush2.bf16.msra.mxu0 0
    %2745 = vmatprep.subr.bf16.mxu0 0
    %2746 = vmatpush2.bf16.msra.mxu0 0
    %2747 = vmatprep.subr.bf16.mxu0 0
    %2748 = vmatpush2.bf16.msra.mxu0 0
    %2749 = vmatprep.subr.bf16.mxu0 0
    %2750 = vmatpush2.bf16.msra.mxu0 0
    %2751 = vmatprep.subr.bf16.mxu0 0
    %2752 = vmatpush2.bf16.msra.mxu0 %v2687
    %2753 = vmatprep.mubr.bf16.mxu0 %v2698
    %2754 = vmatmul.mubr.bf16.gmra.mxu0 %v2596
    %v2755 = vpop.f32.mrf.mxu0
    %v2756 = vadd.f32 %v2641, %v2755
    %v2757 = vpop.f32.mrf.mxu0
    %v2758 = vpop.f32.mrf.mxu0
    %v2759 = vadd.f32 %v2641, %v2758
    %v2760 = vpop.f32.mrf.mxu0
    %2761 = vmatprep.mubr.bf16.mxu0 %v2701
    %2762 = vmatmul.mubr.bf16.gmra.mxu0 %v2599
    %v2763 = vpop.f32.mrf.mxu0
    %v2764 = vadd.f32 %v2641, %v2763
    %v2765 = vpop.f32.mrf.mxu0
    %v2766 = vpop.f32.mrf.mxu0
    %v2767 = vadd.f32 %v2641, %v2766
    %v2768 = vpop.f32.mrf.mxu0
    %2769 = vmatprep.mubr.bf16.mxu0 %v2704
    %2770 = vmatmul.mubr.bf16.gmra.mxu0 %v2602
    %v2771 = vpop.f32.mrf.mxu0
    %v2772 = vadd.f32 %v2641, %v2771
    %v2773 = vpop.f32.mrf.mxu0
    %v2774 = vpop.f32.mrf.mxu0
    %v2775 = vadd.f32 %v2641, %v2774
    %v2776 = vpop.f32.mrf.mxu0
    %2777 = vmatprep.mubr.bf16.mxu0 %v2707
    %2778 = vmatmul.mubr.bf16.gmra.mxu0 %v2605
    %v2779 = vpop.f32.mrf.mxu0
    %v2780 = vadd.f32 %v2641, %v2779
    %v2781 = vpop.f32.mrf.mxu0
    %v2782 = vpop.f32.mrf.mxu0
    %v2783 = vadd.f32 %v2641, %v2782
    %v2784 = vpop.f32.mrf.mxu0
    %2785 = vmatprep.mubr.bf16.mxu0 %v2710
    %2786 = vmatmul.mubr.bf16.gmra.mxu0 %v2608
    %v2787 = vpop.f32.mrf.mxu0
    %v2788 = vadd.f32 %v2641, %v2787
    %v2789 = vpop.f32.mrf.mxu0
    %v2790 = vpop.f32.mrf.mxu0
    %v2791 = vadd.f32 %v2641, %v2790
    %v2792 = vpop.f32.mrf.mxu0
    %2793 = vmatprep.mubr.bf16.mxu0 %v2713
    %2794 = vmatmul.mubr.bf16.gmra.mxu0 %v2611
    %v2795 = vpop.f32.mrf.mxu0
    %v2796 = vadd.f32 %v2641, %v2795
    %v2797 = vpop.f32.mrf.mxu0
    %v2798 = vpop.f32.mrf.mxu0
    %v2799 = vadd.f32 %v2641, %v2798
    %v2800 = vpop.f32.mrf.mxu0
    %2801 = vmatprep.mubr.bf16.mxu0 %v2716
    %2802 = vmatmul.mubr.bf16.gmra.mxu0 %v2614
    %v2803 = vpop.f32.mrf.mxu0
    %v2804 = vadd.f32 %v2641, %v2803
    %v2805 = vpop.f32.mrf.mxu0
    %v2806 = vpop.f32.mrf.mxu0
    %v2807 = vadd.f32 %v2641, %v2806
    %v2808 = vpop.f32.mrf.mxu0
    %2809 = vmatprep.mubr.bf16.mxu0 %v2719
    %2810 = vmatmul.mubr.bf16.gmra.mxu0 %v2617
    %v2811 = vpop.f32.mrf.mxu0
    %v2812 = vadd.f32 %v2641, %v2811
    %v2813 = vpop.f32.mrf.mxu0
    %v2814 = vpop.f32.mrf.mxu0
    %v2815 = vadd.f32 %v2641, %v2814
    %v2816 = vpop.f32.mrf.mxu0
    %2817 = vdwg.mxu0
    %vm2818 = vcmp.ge.f32.partialorder %v2756, 0.0
    %vm2819 = vcmp.ge.f32.partialorder %v2759, 0.0
    %vm2820 = vcmp.ge.f32.partialorder %v2764, 0.0
    %vm2821 = vcmp.ge.f32.partialorder %v2767, 0.0
    %vm2822 = vcmp.ge.f32.partialorder %v2772, 0.0
    %vm2823 = vcmp.ge.f32.partialorder %v2775, 0.0
    %vm2824 = vcmp.ge.f32.partialorder %v2780, 0.0
    %vm2825 = vcmp.ge.f32.partialorder %v2783, 0.0
    %vm2826 = vcmp.ge.f32.partialorder %v2788, 0.0
    %vm2827 = vcmp.ge.f32.partialorder %v2791, 0.0
    %vm2828 = vcmp.ge.f32.partialorder %v2796, 0.0
    %vm2829 = vcmp.ge.f32.partialorder %v2799, 0.0
    %vm2830 = vcmp.ge.f32.partialorder %v2804, 0.0
    %vm2831 = vcmp.ge.f32.partialorder %v2807, 0.0
    %vm2832 = vcmp.ge.f32.partialorder %v2812, 0.0
    %vm2833 = vcmp.ge.f32.partialorder %v2815, 0.0
    %v2834 = vmul.f32 %v2756, 0.01
    %v2835 = vmul.f32 %v2759, 0.01
    %v2836 = vmul.f32 %v2764, 0.01
    %v2837 = vmul.f32 %v2767, 0.01
    %v2838 = vmul.f32 %v2772, 0.01
    %v2839 = vmul.f32 %v2775, 0.01
    %v2840 = vmul.f32 %v2780, 0.01
    %v2841 = vmul.f32 %v2783, 0.01
    %v2842 = vmul.f32 %v2788, 0.01
    %v2843 = vmul.f32 %v2791, 0.01
    %v2844 = vmul.f32 %v2796, 0.01
    %v2845 = vmul.f32 %v2799, 0.01
    %v2846 = vmul.f32 %v2804, 0.01
    %v2847 = vmul.f32 %v2807, 0.01
    %v2848 = vmul.f32 %v2812, 0.01
    %v2849 = vmul.f32 %v2815, 0.01
    %v2850 = vsel %vm2818, %v2756, %v2834
    %v2851 = vsel %vm2819, %v2759, %v2835
    %v2852 = vsel %vm2820, %v2764, %v2836
    %v2853 = vsel %vm2821, %v2767, %v2837
    %v2854 = vsel %vm2822, %v2772, %v2838
    %v2855 = vsel %vm2823, %v2775, %v2839
    %v2856 = vsel %vm2824, %v2780, %v2840
    %v2857 = vsel %vm2825, %v2783, %v2841
    %v2858 = vsel %vm2826, %v2788, %v2842
    %v2859 = vsel %vm2827, %v2791, %v2843
    %v2860 = vsel %vm2828, %v2796, %v2844
    %v2861 = vsel %vm2829, %v2799, %v2845
    %v2862 = vsel %vm2830, %v2804, %v2846
    %v2863 = vsel %vm2831, %v2807, %v2847
    %v2864 = vsel %vm2832, %v2812, %v2848
    %v2865 = vsel %vm2833, %v2815, %v2849
    %v2866 = vpack.c.bf16 %v2851, %v2850
    %v2867 = vpack.c.bf16 %v2853, %v2852
    %v2868 = vpack.c.bf16 %v2855, %v2854
    %v2869 = vpack.c.bf16 %v2857, %v2856
    %v2870 = vpack.c.bf16 %v2859, %v2858
    %v2871 = vpack.c.bf16 %v2861, %v2860
    %v2872 = vpack.c.bf16 %v2863, %v2862
    %v2873 = vpack.c.bf16 %v2865, %v2864
    %s2874 = sadd.s32 %s1998, 1
    %v2883 = vunpack.c.l.b16 %v2866
    %v2884 = vunpack.c.h.b16 %v2866
    %v2885 = vunpack.c.l.b16 %v2867
    %v2886 = vunpack.c.h.b16 %v2867
    %v2887 = vunpack.c.l.b16 %v2868
    %v2888 = vunpack.c.h.b16 %v2868
    %v2889 = vunpack.c.l.b16 %v2869
    %v2890 = vunpack.c.h.b16 %v2869
    %v2891 = vunpack.c.l.b16 %v2870
    %v2892 = vunpack.c.h.b16 %v2870
    %v2893 = vunpack.c.l.b16 %v2871
    %v2894 = vunpack.c.h.b16 %v2871
    %v2895 = vunpack.c.l.b16 %v2872
    %v2896 = vunpack.c.h.b16 %v2872
    %v2897 = vunpack.c.l.b16 %v2873
    %v2898 = vunpack.c.h.b16 %v2873
    %v2899 = vpack.c.b16 %v2883, %v2883
    %v2900 = vpack.c.b16 %v2884, %v2884
    %v2901 = vpack.c.b16 %v2885, %v2885
    %v2902 = vpack.c.b16 %v2886, %v2886
    %v2903 = vpack.c.b16 %v2887, %v2887
    %v2904 = vpack.c.b16 %v2888, %v2888
    %v2905 = vpack.c.b16 %v2889, %v2889
    %v2906 = vpack.c.b16 %v2890, %v2890
    %v2907 = vpack.c.b16 %v2891, %v2891
    %v2908 = vpack.c.b16 %v2892, %v2892
    %v2909 = vpack.c.b16 %v2893, %v2893
    %v2910 = vpack.c.b16 %v2894, %v2894
    %v2911 = vpack.c.b16 %v2895, %v2895
    %v2912 = vpack.c.b16 %v2896, %v2896
    %v2913 = vpack.c.b16 %v2897, %v2897
    %v2914 = vpack.c.b16 %v2898, %v2898
    %s2931 = smul.u32 %s2874, 20
    %s2932 = sadd.s32 2, %s2931
    %s2933 = smul.addr %s2932, 4
    %s2934 = scalar_lea.vmem [#allocation3], %s2933
    %2935 = vst.msk [vmem:[%s2934] sm:$0xf] %vm1913, %v2899
    %2936 = vst.msk [vmem:[%s2934 + $0x4] sm:$0xf] %vm1913, %v2900
    %2937 = vst.msk [vmem:[%s2934 + $0x8] sm:$0xf] %vm1913, %v2901
    %2938 = vst.msk [vmem:[%s2934 + $0xc] sm:$0xf] %vm1913, %v2902
    %2939 = vst.msk [vmem:[%s2934 + $0x10] sm:$0xf] %vm1913, %v2903
    %2940 = vst.msk [vmem:[%s2934 + $0x14] sm:$0xf] %vm1913, %v2904
    %2941 = vst.msk [vmem:[%s2934 + $0x18] sm:$0xf] %vm1913, %v2905
    %2942 = vst.msk [vmem:[%s2934 + $0x1c] sm:$0xf] %vm1913, %v2906
    %2943 = vst.msk [vmem:[%s2934 + $0x20] sm:$0xf] %vm1913, %v2907
    %2944 = vst.msk [vmem:[%s2934 + $0x24] sm:$0xf] %vm1913, %v2908
    %2945 = vst.msk [vmem:[%s2934 + $0x28] sm:$0xf] %vm1913, %v2909
    %2946 = vst.msk [vmem:[%s2934 + $0x2c] sm:$0xf] %vm1913, %v2910
    %2947 = vst.msk [vmem:[%s2934 + $0x30] sm:$0xf] %vm1913, %v2911
    %2948 = vst.msk [vmem:[%s2934 + $0x34] sm:$0xf] %vm1913, %v2912
    %2949 = vst.msk [vmem:[%s2934 + $0x38] sm:$0xf] %vm1913, %v2913
    %2950 = vst.msk [vmem:[%s2934 + $0x3c] sm:$0xf] %vm1913, %v2914
  $region49: #{simple_discriminator_forward.1} parent=0 // loop_footer
    %s2002 = sadd.s32 1, %s1998
  $region50: #{simple_discriminator_forward.1} parent=0 // loop_footer_branch
    %1997 = sbr.rel target = $region46
  $region51: #{simple_discriminator_forward.1} parent=0 // loop_exit
    _
  %v2951 = vld [vmem:[%s6] sm:$0x1]
  %v2952 = vld [vmem:[#allocation3] sm:$0xf]
  %v2953 = vld [vmem:[#allocation3 + $0x4] sm:$0xf]
  %v2954 = vld [vmem:[#allocation3 + $0x8] sm:$0xf]
  %v2955 = vld [vmem:[#allocation3 + $0xc] sm:$0xf]
  %v2956 = vld [vmem:[#allocation3 + $0x10] sm:$0xf]
  %v2957 = vld [vmem:[#allocation3 + $0x14] sm:$0xf]
  %v2958 = vld [vmem:[#allocation3 + $0x18] sm:$0xf]
  %v2959 = vld [vmem:[#allocation3 + $0x1c] sm:$0xf]
  %v2960 = vld [vmem:[#allocation3 + $0x20] sm:$0xf]
  %v2961 = vld [vmem:[#allocation3 + $0x24] sm:$0xf]
  %v2962 = vld [vmem:[#allocation3 + $0x28] sm:$0xf]
  %v2963 = vld [vmem:[#allocation3 + $0x2c] sm:$0xf]
  %v2964 = vld [vmem:[#allocation3 + $0x30] sm:$0xf]
  %v2965 = vld [vmem:[#allocation3 + $0x34] sm:$0xf]
  %v2966 = vld [vmem:[#allocation3 + $0x38] sm:$0xf]
  %v2967 = vld [vmem:[#allocation3 + $0x3c] sm:$0xf]
  %v2968 = vld [vmem:[#allocation3 + $0x40] sm:$0xf]
  %v2969 = vld [vmem:[#allocation3 + $0x44] sm:$0xf]
  %s2970 = scalar_lea.vmem [#allocation3], 80
  %v2971 = vld [vmem:[%s2970] sm:$0xf]
  %v2972 = vld [vmem:[%s2970 + $0x4] sm:$0xf]
  %v2973 = vld [vmem:[%s2970 + $0x8] sm:$0xf]
  %v2974 = vld [vmem:[%s2970 + $0xc] sm:$0xf]
  %v2975 = vld [vmem:[%s2970 + $0x10] sm:$0xf]
  %v2976 = vld [vmem:[%s2970 + $0x14] sm:$0xf]
  %v2977 = vld [vmem:[%s2970 + $0x18] sm:$0xf]
  %v2978 = vld [vmem:[%s2970 + $0x1c] sm:$0xf]
  %v2979 = vld [vmem:[%s2970 + $0x20] sm:$0xf]
  %v2980 = vld [vmem:[%s2970 + $0x24] sm:$0xf]
  %v2981 = vld [vmem:[%s2970 + $0x28] sm:$0xf]
  %v2982 = vld [vmem:[%s2970 + $0x2c] sm:$0xf]
  %v2983 = vld [vmem:[%s2970 + $0x30] sm:$0xf]
  %v2984 = vld [vmem:[%s2970 + $0x34] sm:$0xf]
  %v2985 = vld [vmem:[%s2970 + $0x38] sm:$0xf]
  %v2986 = vld [vmem:[%s2970 + $0x3c] sm:$0xf]
  %v2987 = vld [vmem:[%s2970 + $0x40] sm:$0xf]
  %v2988 = vld [vmem:[%s2970 + $0x44] sm:$0xf]
  %s2989 = scalar_lea.vmem [#allocation3], 160
  %v2990 = vld [vmem:[%s2989] sm:$0xf]
  %v2991 = vld [vmem:[%s2989 + $0x4] sm:$0xf]
  %v2992 = vld [vmem:[%s2989 + $0x8] sm:$0xf]
  %v2993 = vld [vmem:[%s2989 + $0xc] sm:$0xf]
  %v2994 = vld [vmem:[%s2989 + $0x10] sm:$0xf]
  %v2995 = vld [vmem:[%s2989 + $0x14] sm:$0xf]
  %v2996 = vld [vmem:[%s2989 + $0x18] sm:$0xf]
  %v2997 = vld [vmem:[%s2989 + $0x1c] sm:$0xf]
  %v2998 = vld [vmem:[%s2989 + $0x20] sm:$0xf]
  %v2999 = vld [vmem:[%s2989 + $0x24] sm:$0xf]
  %v3000 = vld [vmem:[%s2989 + $0x28] sm:$0xf]
  %v3001 = vld [vmem:[%s2989 + $0x2c] sm:$0xf]
  %v3002 = vld [vmem:[%s2989 + $0x30] sm:$0xf]
  %v3003 = vld [vmem:[%s2989 + $0x34] sm:$0xf]
  %v3004 = vld [vmem:[%s2989 + $0x38] sm:$0xf]
  %v3005 = vld [vmem:[%s2989 + $0x3c] sm:$0xf]
  %v3006 = vld [vmem:[%s2989 + $0x40] sm:$0xf]
  %v3007 = vld [vmem:[%s2989 + $0x44] sm:$0xf]
  %v3016 = vunpack.c.l.b16 %v2952
  %v3017 = vunpack.c.l.b16 %v2953
  %v3018 = vunpack.c.l.b16 %v2956
  %v3019 = vunpack.c.l.b16 %v2957
  %v3020 = vunpack.c.l.b16 %v2960
  %v3021 = vunpack.c.l.b16 %v2961
  %v3022 = vunpack.c.l.b16 %v2964
  %v3023 = vunpack.c.l.b16 %v2965
  %v3024 = vpack.c.b16 %v3017, %v3016
  %v3025 = vpack.c.b16 %v3019, %v3018
  %v3026 = vpack.c.b16 %v3021, %v3020
  %v3027 = vpack.c.b16 %v3023, %v3022
  %v3036 = vunpack.c.l.b16 %v2954
  %v3037 = vunpack.c.l.b16 %v2955
  %v3038 = vunpack.c.l.b16 %v2958
  %v3039 = vunpack.c.l.b16 %v2959
  %v3040 = vunpack.c.l.b16 %v2962
  %v3041 = vunpack.c.l.b16 %v2963
  %v3042 = vunpack.c.l.b16 %v2966
  %v3043 = vunpack.c.l.b16 %v2967
  %v3044 = vpack.c.b16 %v3037, %v3036
  %v3045 = vpack.c.b16 %v3039, %v3038
  %v3046 = vpack.c.b16 %v3041, %v3040
  %v3047 = vpack.c.b16 %v3043, %v3042
  %3048 = vrot.lane.b32.xlu0 %v3044, 32
  %v3049 = vpop.permute.xlu0 %3048
  %3050 = vrot.lane.b32.xlu0 %v3045, 32
  %v3051 = vpop.permute.xlu0 %3050
  %3052 = vrot.lane.b32.xlu0 %v3046, 32
  %v3053 = vpop.permute.xlu0 %3052
  %3054 = vrot.lane.b32.xlu0 %v3047, 32
  %v3055 = vpop.permute.xlu0 %3054
  %v3058 = vunpack.c.l.b16 %v2968
  %v3059 = vunpack.c.l.b16 %v2969
  %v3060 = vpack.c.b16 %v3059, %v3058
  %3061 = vrot.lane.b32.xlu0 %v3025, 64
  %v3062 = vpop.permute.xlu0 %3061
  %3063 = vrot.lane.b32.xlu0 %v3026, 64
  %v3064 = vpop.permute.xlu0 %3063
  %3065 = vrot.lane.b32.xlu0 %v3027, 64
  %v3066 = vpop.permute.xlu0 %3065
  %3067 = vrot.lane.b32.xlu0 %v3060, 64
  %v3068 = vpop.permute.xlu0 %3067
  %v3077 = vunpack.c.l.b16 %v2971
  %v3078 = vunpack.c.l.b16 %v2972
  %v3079 = vunpack.c.l.b16 %v2975
  %v3080 = vunpack.c.l.b16 %v2976
  %v3081 = vunpack.c.l.b16 %v2979
  %v3082 = vunpack.c.l.b16 %v2980
  %v3083 = vunpack.c.l.b16 %v2983
  %v3084 = vunpack.c.l.b16 %v2984
  %v3085 = vpack.c.b16 %v3078, %v3077
  %v3086 = vpack.c.b16 %v3080, %v3079
  %v3087 = vpack.c.b16 %v3082, %v3081
  %v3088 = vpack.c.b16 %v3084, %v3083
  %3089 = vrot.lane.b32.xlu0 %v3085, 96
  %v3090 = vpop.permute.xlu0 %3089
  %3091 = vrot.lane.b32.xlu0 %v3086, 96
  %v3092 = vpop.permute.xlu0 %3091
  %3093 = vrot.lane.b32.xlu0 %v3087, 96
  %v3094 = vpop.permute.xlu0 %3093
  %3095 = vrot.lane.b32.xlu0 %v3088, 96
  %v3096 = vpop.permute.xlu0 %3095
  %v3105 = vunpack.c.l.b16 %v2973
  %v3106 = vunpack.c.l.b16 %v2974
  %v3107 = vunpack.c.l.b16 %v2977
  %v3108 = vunpack.c.l.b16 %v2978
  %v3109 = vunpack.c.l.b16 %v2981
  %v3110 = vunpack.c.l.b16 %v2982
  %v3111 = vunpack.c.l.b16 %v2985
  %v3112 = vunpack.c.l.b16 %v2986
  %v3113 = vpack.c.b16 %v3106, %v3105
  %v3114 = vpack.c.b16 %v3108, %v3107
  %v3115 = vpack.c.b16 %v3110, %v3109
  %v3116 = vpack.c.b16 %v3112, %v3111
  %v3119 = vunpack.c.l.b16 %v2987
  %v3120 = vunpack.c.l.b16 %v2988
  %v3121 = vpack.c.b16 %v3120, %v3119
  %3122 = vrot.lane.b32.xlu0 %v3086, 32
  %v3123 = vpop.permute.xlu0 %3122
  %3124 = vrot.lane.b32.xlu0 %v3087, 32
  %v3125 = vpop.permute.xlu0 %3124
  %3126 = vrot.lane.b32.xlu0 %v3088, 32
  %v3127 = vpop.permute.xlu0 %3126
  %3128 = vrot.lane.b32.xlu0 %v3121, 32
  %v3129 = vpop.permute.xlu0 %3128
  %v3138 = vunpack.c.l.b16 %v2990
  %v3139 = vunpack.c.l.b16 %v2991
  %v3140 = vunpack.c.l.b16 %v2994
  %v3141 = vunpack.c.l.b16 %v2995
  %v3142 = vunpack.c.l.b16 %v2998
  %v3143 = vunpack.c.l.b16 %v2999
  %v3144 = vunpack.c.l.b16 %v3002
  %v3145 = vunpack.c.l.b16 %v3003
  %v3146 = vpack.c.b16 %v3139, %v3138
  %v3147 = vpack.c.b16 %v3141, %v3140
  %v3148 = vpack.c.b16 %v3143, %v3142
  %v3149 = vpack.c.b16 %v3145, %v3144
  %3150 = vrot.lane.b32.xlu0 %v3146, 64
  %v3151 = vpop.permute.xlu0 %3150
  %3152 = vrot.lane.b32.xlu0 %v3147, 64
  %v3153 = vpop.permute.xlu0 %3152
  %3154 = vrot.lane.b32.xlu0 %v3148, 64
  %v3155 = vpop.permute.xlu0 %3154
  %3156 = vrot.lane.b32.xlu0 %v3149, 64
  %v3157 = vpop.permute.xlu0 %3156
  %v3166 = vunpack.c.l.b16 %v2992
  %v3167 = vunpack.c.l.b16 %v2993
  %v3168 = vunpack.c.l.b16 %v2996
  %v3169 = vunpack.c.l.b16 %v2997
  %v3170 = vunpack.c.l.b16 %v3000
  %v3171 = vunpack.c.l.b16 %v3001
  %v3172 = vunpack.c.l.b16 %v3004
  %v3173 = vunpack.c.l.b16 %v3005
  %v3174 = vpack.c.b16 %v3167, %v3166
  %v3175 = vpack.c.b16 %v3169, %v3168
  %v3176 = vpack.c.b16 %v3171, %v3170
  %v3177 = vpack.c.b16 %v3173, %v3172
  %3178 = vrot.lane.b32.xlu0 %v3174, 96
  %v3179 = vpop.permute.xlu0 %3178
  %3180 = vrot.lane.b32.xlu0 %v3175, 96
  %v3181 = vpop.permute.xlu0 %3180
  %3182 = vrot.lane.b32.xlu0 %v3176, 96
  %v3183 = vpop.permute.xlu0 %3182
  %3184 = vrot.lane.b32.xlu0 %v3177, 96
  %v3185 = vpop.permute.xlu0 %3184
  %v3188 = vunpack.c.l.b16 %v3006
  %v3189 = vunpack.c.l.b16 %v3007
  %v3190 = vpack.c.b16 %v3189, %v3188
  %vm3191 = vcmask 261120
  %v3194 = vsel %vm3191, %v3024, %v3049
  %v3197 = vsel %vm3191, %v3025, %v3051
  %v3200 = vsel %vm3191, %v3026, %v3053
  %v3203 = vsel %vm3191, %v3027, %v3055
  %vm3204 = vcmask 523264
  %v3206 = vsel %vm3204, %v3194, %v3062
  %v3208 = vsel %vm3204, %v3197, %v3064
  %v3210 = vsel %vm3204, %v3200, %v3066
  %v3212 = vsel %vm3204, %v3203, %v3068
  %vm3213 = vcmask 785408
  %v3215 = vsel %vm3213, %v3206, %v3090
  %v3218 = vsel %vm3213, %v3208, %v3092
  %v3221 = vsel %vm3213, %v3210, %v3094
  %v3224 = vsel %vm3213, %v3212, %v3096
  %v3228 = vsel %vm3191, %v3113, %v3123
  %v3231 = vsel %vm3191, %v3114, %v3125
  %v3234 = vsel %vm3191, %v3115, %v3127
  %v3237 = vsel %vm3191, %v3116, %v3129
  %v3239 = vsel %vm3204, %v3228, %v3151
  %v3241 = vsel %vm3204, %v3231, %v3153
  %v3243 = vsel %vm3204, %v3234, %v3155
  %v3245 = vsel %vm3204, %v3237, %v3157
  %v3247 = vsel %vm3213, %v3239, %v3179
  %v3250 = vsel %vm3213, %v3241, %v3181
  %v3253 = vsel %vm3213, %v3243, %v3183
  %v3256 = vsel %vm3213, %v3245, %v3185
  %v3258 = vld [vmem:[%s5] sm:$0xf]
  %v3259 = vld [vmem:[%s5 + $0x4] sm:$0xf]
  %v3260 = vld [vmem:[%s5 + $0x8] sm:$0xf]
  %v3261 = vld [vmem:[%s5 + $0xc] sm:$0xf]
  %v3262 = vld [vmem:[%s5 + $0x10] sm:$0xf]
  %v3263 = vld [vmem:[%s5 + $0x14] sm:$0xf]
  %v3264 = vld [vmem:[%s5 + $0x18] sm:$0xf]
  %v3265 = vld [vmem:[%s5 + $0x1c] sm:$0xf]
  %v3266 = vld [vmem:[%s5 + $0x20] sm:$0xf]
  %v3267 = vld [vmem:[%s5 + $0x24] sm:$0xf]
  %v3268 = vld [vmem:[%s5 + $0x28] sm:$0xf]
  %v3269 = vld [vmem:[%s5 + $0x2c] sm:$0xf]
  %v3270 = vld [vmem:[%s5 + $0x30] sm:$0xf]
  %v3271 = vld [vmem:[%s5 + $0x34] sm:$0xf]
  %v3272 = vld [vmem:[%s5 + $0x38] sm:$0xf]
  %v3273 = vld [vmem:[%s5 + $0x3c] sm:$0xf]
  %v3274 = vld [vmem:[%s5 + $0x40] sm:$0xf]
  %v3275 = vld [vmem:[%s5 + $0x44] sm:$0xf]
  %v3276 = vld [vmem:[%s5 + $0x48] sm:$0xf]
  %v3277 = vld [vmem:[%s5 + $0x4c] sm:$0xf]
  %v3278 = vld [vmem:[%s5 + $0x50] sm:$0xf]
  %v3279 = vld [vmem:[%s5 + $0x54] sm:$0xf]
  %v3280 = vld [vmem:[%s5 + $0x58] sm:$0xf]
  %v3281 = vld [vmem:[%s5 + $0x5c] sm:$0xf]
  %v3282 = vld [vmem:[%s5 + $0x60] sm:$0xf]
  %v3283 = vld [vmem:[%s5 + $0x64] sm:$0xf]
  %v3284 = vld [vmem:[%s5 + $0x68] sm:$0xf]
  %v3285 = vld [vmem:[%s5 + $0x6c] sm:$0xf]
  %v3286 = vld [vmem:[%s5 + $0x70] sm:$0xf]
  %v3287 = vld [vmem:[%s5 + $0x74] sm:$0xf]
  %v3288 = vld [vmem:[%s5 + $0x78] sm:$0xf]
  %v3289 = vld [vmem:[%s5 + $0x7c] sm:$0xf]
  %v3290 = vld [vmem:[%s5 + $0x80] sm:$0xf]
  %v3291 = vld [vmem:[%s5 + $0x84] sm:$0xf]
  %v3292 = vld [vmem:[%s5 + $0x88] sm:$0xf]
  %v3293 = vld [vmem:[%s5 + $0x8c] sm:$0xf]
  %v3295 = vlaneseq
  %v3296 = vshrl.u32 %v3295, 7
  %v3297 = vsub.s32 0, %v3296
  %v3298 = vrot.slane %v2951, %v3297
  %v3336 = vunpack.c.l.b16 %v3258
  %v3337 = vunpack.c.l.b16 %v3259
  %v3338 = vunpack.c.l.b16 %v3260
  %v3339 = vunpack.c.l.b16 %v3261
  %v3340 = vunpack.c.l.b16 %v3262
  %v3341 = vunpack.c.l.b16 %v3263
  %v3342 = vunpack.c.l.b16 %v3264
  %v3343 = vunpack.c.l.b16 %v3265
  %v3344 = vunpack.c.l.b16 %v3266
  %v3345 = vunpack.c.l.b16 %v3267
  %v3346 = vunpack.c.l.b16 %v3268
  %v3347 = vunpack.c.l.b16 %v3269
  %v3348 = vunpack.c.l.b16 %v3270
  %v3349 = vunpack.c.l.b16 %v3271
  %v3350 = vunpack.c.l.b16 %v3272
  %v3351 = vunpack.c.l.b16 %v3273
  %v3352 = vunpack.c.l.b16 %v3274
  %v3353 = vunpack.c.l.b16 %v3275
  %v3354 = vunpack.c.l.b16 %v3276
  %v3355 = vunpack.c.l.b16 %v3277
  %v3356 = vunpack.c.l.b16 %v3278
  %v3357 = vunpack.c.l.b16 %v3279
  %v3358 = vunpack.c.l.b16 %v3280
  %v3359 = vunpack.c.l.b16 %v3281
  %v3360 = vunpack.c.l.b16 %v3282
  %v3361 = vunpack.c.l.b16 %v3283
  %v3362 = vunpack.c.l.b16 %v3284
  %v3363 = vunpack.c.l.b16 %v3285
  %v3364 = vunpack.c.l.b16 %v3286
  %v3365 = vunpack.c.l.b16 %v3287
  %v3366 = vunpack.c.l.b16 %v3288
  %v3367 = vunpack.c.l.b16 %v3289
  %v3368 = vunpack.c.l.b16 %v3290
  %v3369 = vunpack.c.l.b16 %v3291
  %v3370 = vunpack.c.l.b16 %v3292
  %v3371 = vunpack.c.l.b16 %v3293
  %v3372 = vpack.c.b16 %v3337, %v3336
  %v3373 = vpack.c.b16 %v3339, %v3338
  %v3374 = vpack.c.b16 %v3341, %v3340
  %v3375 = vpack.c.b16 %v3343, %v3342
  %v3376 = vpack.c.b16 %v3345, %v3344
  %v3377 = vpack.c.b16 %v3347, %v3346
  %v3378 = vpack.c.b16 %v3349, %v3348
  %v3379 = vpack.c.b16 %v3351, %v3350
  %v3380 = vpack.c.b16 %v3353, %v3352
  %v3381 = vpack.c.b16 %v3355, %v3354
  %v3382 = vpack.c.b16 %v3357, %v3356
  %v3383 = vpack.c.b16 %v3359, %v3358
  %v3384 = vpack.c.b16 %v3361, %v3360
  %v3385 = vpack.c.b16 %v3363, %v3362
  %v3386 = vpack.c.b16 %v3365, %v3364
  %v3387 = vpack.c.b16 %v3367, %v3366
  %v3388 = vpack.c.b16 %v3369, %v3368
  %v3389 = vpack.c.b16 %v3371, %v3370
  %v3409 = vsel %vm3191, %v3147, 0
  %v3412 = vsel %vm3191, %v3148, 0
  %v3415 = vsel %vm3191, %v3149, 0
  %v3418 = vsel %vm3191, %v3190, 0
  %3420 = vmatprep.subr.bf16.mxu0 0
  %3421 = vmatpush1.bf16.msra.mxu0 %v3379
  %3422 = vmatprep.subr.bf16.mxu0 0
  %3423 = vmatpush1.bf16.msra.mxu0 %v3378
  %3424 = vmatprep.subr.bf16.mxu0 0
  %3425 = vmatpush1.bf16.msra.mxu0 %v3377
  %3426 = vmatprep.subr.bf16.mxu0 0
  %3427 = vmatpush1.bf16.msra.mxu0 %v3376
  %3428 = vmatprep.subr.bf16.mxu0 0
  %3429 = vmatpush1.bf16.msra.mxu0 %v3375
  %3430 = vmatprep.subr.bf16.mxu0 0
  %3431 = vmatpush1.bf16.msra.mxu0 %v3374
  %3432 = vmatprep.subr.bf16.mxu0 0
  %3433 = vmatpush1.bf16.msra.mxu0 %v3373
  %3434 = vmatprep.subr.bf16.mxu0 0
  %3435 = vmatpush1.bf16.msra.mxu0 %v3372
  %3436 = vmatprep.subr.bf16.mxu0 0
  %3437 = vmatpush2.bf16.msra.mxu0 %v3387
  %3438 = vmatprep.subr.bf16.mxu0 0
  %3439 = vmatpush2.bf16.msra.mxu0 %v3386
  %3440 = vmatprep.subr.bf16.mxu0 0
  %3441 = vmatpush2.bf16.msra.mxu0 %v3385
  %3442 = vmatprep.subr.bf16.mxu0 0
  %3443 = vmatpush2.bf16.msra.mxu0 %v3384
  %3444 = vmatprep.subr.bf16.mxu0 0
  %3445 = vmatpush2.bf16.msra.mxu0 %v3383
  %3446 = vmatprep.subr.bf16.mxu0 0
  %3447 = vmatpush2.bf16.msra.mxu0 %v3382
  %3448 = vmatprep.subr.bf16.mxu0 0
  %3449 = vmatpush2.bf16.msra.mxu0 %v3381
  %3450 = vmatprep.subr.bf16.mxu0 0
  %3451 = vmatpush2.bf16.msra.mxu0 %v3380
  %3452 = vmatprep.mubr.bf16.mxu0 %v3247
  %3453 = vmatmul.mubr.bf16.gmra.mxu0 %v3215
  %v3454 = vpop.f32.mrf.mxu0
  %v3455 = vadd.f32 %v3298, %v3454
  %v3456 = vpop.f32.mrf.mxu0
  %v3457 = vpop.f32.mrf.mxu0
  %v3458 = vadd.f32 %v3298, %v3457
  %v3459 = vpop.f32.mrf.mxu0
  %3460 = vmatprep.mubr.bf16.mxu0 %v3250
  %3461 = vmatmul.mubr.bf16.gmra.mxu0 %v3218
  %v3462 = vpop.f32.mrf.mxu0
  %v3463 = vadd.f32 %v3298, %v3462
  %v3464 = vpop.f32.mrf.mxu0
  %v3465 = vpop.f32.mrf.mxu0
  %v3466 = vadd.f32 %v3298, %v3465
  %v3467 = vpop.f32.mrf.mxu0
  %3468 = vmatprep.mubr.bf16.mxu0 %v3253
  %3469 = vmatmul.mubr.bf16.gmra.mxu0 %v3221
  %v3470 = vpop.f32.mrf.mxu0
  %v3471 = vadd.f32 %v3298, %v3470
  %v3472 = vpop.f32.mrf.mxu0
  %v3473 = vpop.f32.mrf.mxu0
  %v3474 = vadd.f32 %v3298, %v3473
  %v3475 = vpop.f32.mrf.mxu0
  %3476 = vmatprep.mubr.bf16.mxu0 %v3256
  %3477 = vmatmul.mubr.bf16.gmra.mxu0 %v3224
  %v3478 = vpop.f32.mrf.mxu0
  %v3479 = vadd.f32 %v3298, %v3478
  %v3480 = vpop.f32.mrf.mxu0
  %v3481 = vpop.f32.mrf.mxu0
  %v3482 = vadd.f32 %v3298, %v3481
  %v3483 = vpop.f32.mrf.mxu0
  %3484 = vdwg.mxu0
  %3485 = vmatprep.subr.bf16.mxu0 0
  %3486 = vmatpush1.bf16.msra.mxu0 0
  %3487 = vmatprep.subr.bf16.mxu0 0
  %3488 = vmatpush1.bf16.msra.mxu0 0
  %3489 = vmatprep.subr.bf16.mxu0 0
  %3490 = vmatpush1.bf16.msra.mxu0 0
  %3491 = vmatprep.subr.bf16.mxu0 0
  %3492 = vmatpush1.bf16.msra.mxu0 0
  %3493 = vmatprep.subr.bf16.mxu0 0
  %3494 = vmatpush1.bf16.msra.mxu0 0
  %3495 = vmatprep.subr.bf16.mxu0 0
  %3496 = vmatpush1.bf16.msra.mxu0 0
  %3497 = vmatprep.subr.bf16.mxu0 0
  %3498 = vmatpush1.bf16.msra.mxu0 %v3389
  %3499 = vmatprep.subr.bf16.mxu0 0
  %3500 = vmatpush1.bf16.msra.mxu0 %v3388
  %3501 = vmatprep.subr.bf16.mxu0 0
  %3502 = vmatpush2.bf16.msra.mxu0 0
  %3503 = vmatprep.subr.bf16.mxu0 0
  %3504 = vmatpush2.bf16.msra.mxu0 0
  %3505 = vmatprep.subr.bf16.mxu0 0
  %3506 = vmatpush2.bf16.msra.mxu0 0
  %3507 = vmatprep.subr.bf16.mxu0 0
  %3508 = vmatpush2.bf16.msra.mxu0 0
  %3509 = vmatprep.subr.bf16.mxu0 0
  %3510 = vmatpush2.bf16.msra.mxu0 0
  %3511 = vmatprep.subr.bf16.mxu0 0
  %3512 = vmatpush2.bf16.msra.mxu0 0
  %3513 = vmatprep.subr.bf16.mxu0 0
  %3514 = vmatpush2.bf16.msra.mxu0 0
  %3515 = vmatprep.subr.bf16.mxu0 0
  %3516 = vmatpush2.bf16.msra.mxu0 0
  %3517 = vmatprep.mubr.bf16.mxu0 0
  %3518 = vmatmul.mubr.bf16.gmra.mxu0 %v3409
  %v3519 = vpop.f32.mrf.mxu0
  %v3520 = vadd.f32 %v3455, %v3519
  %v3521 = vpop.f32.mrf.mxu0
  %v3522 = vpop.f32.mrf.mxu0
  %v3523 = vadd.f32 %v3458, %v3522
  %v3524 = vpop.f32.mrf.mxu0
  %3525 = vmatprep.mubr.bf16.mxu0 0
  %3526 = vmatmul.mubr.bf16.gmra.mxu0 %v3412
  %v3527 = vpop.f32.mrf.mxu0
  %v3528 = vadd.f32 %v3463, %v3527
  %v3529 = vpop.f32.mrf.mxu0
  %v3530 = vpop.f32.mrf.mxu0
  %v3531 = vadd.f32 %v3466, %v3530
  %v3532 = vpop.f32.mrf.mxu0
  %3533 = vmatprep.mubr.bf16.mxu0 0
  %3534 = vmatmul.mubr.bf16.gmra.mxu0 %v3415
  %v3535 = vpop.f32.mrf.mxu0
  %v3536 = vadd.f32 %v3471, %v3535
  %v3537 = vpop.f32.mrf.mxu0
  %v3538 = vpop.f32.mrf.mxu0
  %v3539 = vadd.f32 %v3474, %v3538
  %v3540 = vpop.f32.mrf.mxu0
  %3541 = vmatprep.mubr.bf16.mxu0 0
  %3542 = vmatmul.mubr.bf16.gmra.mxu0 %v3418
  %v3543 = vpop.f32.mrf.mxu0
  %v3544 = vadd.f32 %v3479, %v3543
  %v3545 = vpop.f32.mrf.mxu0
  %v3546 = vpop.f32.mrf.mxu0
  %v3547 = vadd.f32 %v3482, %v3546
  %v3548 = vpop.f32.mrf.mxu0
  %3549 = vdwg.mxu0
  %vm3550 = vcmp.ge.f32.partialorder %v3520, 0.0
  %vm3551 = vcmp.ge.f32.partialorder %v3523, 0.0
  %vm3552 = vcmp.ge.f32.partialorder %v3528, 0.0
  %vm3553 = vcmp.ge.f32.partialorder %v3531, 0.0
  %vm3554 = vcmp.ge.f32.partialorder %v3536, 0.0
  %vm3555 = vcmp.ge.f32.partialorder %v3539, 0.0
  %vm3556 = vcmp.ge.f32.partialorder %v3544, 0.0
  %vm3557 = vcmp.ge.f32.partialorder %v3547, 0.0
  %v3558 = vmul.f32 %v3520, 0.01
  %v3559 = vmul.f32 %v3523, 0.01
  %v3560 = vmul.f32 %v3528, 0.01
  %v3561 = vmul.f32 %v3531, 0.01
  %v3562 = vmul.f32 %v3536, 0.01
  %v3563 = vmul.f32 %v3539, 0.01
  %v3564 = vmul.f32 %v3544, 0.01
  %v3565 = vmul.f32 %v3547, 0.01
  %v3566 = vsel %vm3550, %v3520, %v3558
  %v3567 = vsel %vm3551, %v3523, %v3559
  %v3568 = vsel %vm3552, %v3528, %v3560
  %v3569 = vsel %vm3553, %v3531, %v3561
  %v3570 = vsel %vm3554, %v3536, %v3562
  %v3571 = vsel %vm3555, %v3539, %v3563
  %v3572 = vsel %vm3556, %v3544, %v3564
  %v3573 = vsel %vm3557, %v3547, %v3565
  %v3574 = vld [vmem:[%s7] sm:$0x1]
  %v3575 = vld [vmem:[%s7 + $0x1] sm:$0x1]
  %v3576 = vld [vmem:[%s7 + $0x2] sm:$0x1]
  %v3577 = vld [vmem:[%s7 + $0x3] sm:$0x1]
  %v3582 = vlaneseq
  %v3583 = vshrl.u32 %v3582, 7
  %v3584 = vsub.s32 0, %v3583
  %v3585 = vrot.slane %v3574, %v3584
  %v3586 = vlaneseq
  %v3587 = vshrl.u32 %v3586, 7
  %v3588 = vsub.s32 0, %v3587
  %v3589 = vrot.slane %v3575, %v3588
  %v3590 = vlaneseq
  %v3591 = vshrl.u32 %v3590, 7
  %v3592 = vsub.s32 0, %v3591
  %v3593 = vrot.slane %v3576, %v3592
  %v3594 = vlaneseq
  %v3595 = vshrl.u32 %v3594, 7
  %v3596 = vsub.s32 0, %v3595
  %v3597 = vrot.slane %v3577, %v3596
  %v3602 = vmul.f32 %v3566, %v3585
  %v3603 = vmul.f32 %v3567, %v3585
  %v3604 = vmul.f32 %v3568, %v3589
  %v3605 = vmul.f32 %v3569, %v3589
  %v3606 = vmul.f32 %v3570, %v3593
  %v3607 = vmul.f32 %v3571, %v3593
  %v3608 = vmul.f32 %v3572, %v3597
  %v3609 = vmul.f32 %v3573, %v3597
  %v3610 = vsel %vm3204, %v3602, 0.0
  %3611 = vadd.xlane.f32.xlu0 %v3610
  %v3612 = vpop.xlane.xlu0 %3611
  %v3613 = vsel %vm3204, %v3603, 0.0
  %3614 = vadd.xlane.f32.xlu0 %v3613
  %v3615 = vpop.xlane.xlu0 %3614
  %v3616 = vsel %vm3204, %v3604, 0.0
  %3617 = vadd.xlane.f32.xlu0 %v3616
  %v3618 = vpop.xlane.xlu0 %3617
  %v3619 = vsel %vm3204, %v3605, 0.0
  %3620 = vadd.xlane.f32.xlu0 %v3619
  %v3621 = vpop.xlane.xlu0 %3620
  %v3622 = vsel %vm3204, %v3606, 0.0
  %3623 = vadd.xlane.f32.xlu0 %v3622
  %v3624 = vpop.xlane.xlu0 %3623
  %v3625 = vsel %vm3204, %v3607, 0.0
  %3626 = vadd.xlane.f32.xlu0 %v3625
  %v3627 = vpop.xlane.xlu0 %3626
  %v3628 = vsel %vm3204, %v3608, 0.0
  %3629 = vadd.xlane.f32.xlu0 %v3628
  %v3630 = vpop.xlane.xlu0 %3629
  %v3631 = vsel %vm3204, %v3609, 0.0
  %3632 = vadd.xlane.f32.xlu0 %v3631
  %v3633 = vpop.xlane.xlu0 %3632
  %v3634 = vadd.f32 %v3612, %v3618
  %v3635 = vadd.f32 %v3634, %v3624
  %v3636 = vadd.f32 %v3635, %v3630
  %v3637 = vadd.f32 %v3615, %v3621
  %v3638 = vadd.f32 %v3637, %v3627
  %v3639 = vadd.f32 %v3638, %v3633
  %v3640 = vadd.f32 %v3636, 0.0
  %v3641 = vadd.f32 %v3639, 0.0
  %s3642 = scalar_lea.vmem [#allocation3], 240
  %v3643 = vld [vmem:[%s3642] sm:$0xf]
  %v3644 = vld [vmem:[%s3642 + $0x4] sm:$0xf]
  %v3645 = vld [vmem:[%s3642 + $0x8] sm:$0xf]
  %v3646 = vld [vmem:[%s3642 + $0xc] sm:$0xf]
  %v3647 = vld [vmem:[%s3642 + $0x10] sm:$0xf]
  %v3648 = vld [vmem:[%s3642 + $0x14] sm:$0xf]
  %v3649 = vld [vmem:[%s3642 + $0x18] sm:$0xf]
  %v3650 = vld [vmem:[%s3642 + $0x1c] sm:$0xf]
  %v3651 = vld [vmem:[%s3642 + $0x20] sm:$0xf]
  %v3652 = vld [vmem:[%s3642 + $0x24] sm:$0xf]
  %v3653 = vld [vmem:[%s3642 + $0x28] sm:$0xf]
  %v3654 = vld [vmem:[%s3642 + $0x2c] sm:$0xf]
  %v3655 = vld [vmem:[%s3642 + $0x30] sm:$0xf]
  %v3656 = vld [vmem:[%s3642 + $0x34] sm:$0xf]
  %v3657 = vld [vmem:[%s3642 + $0x38] sm:$0xf]
  %v3658 = vld [vmem:[%s3642 + $0x3c] sm:$0xf]
  %v3659 = vld [vmem:[%s3642 + $0x40] sm:$0xf]
  %v3660 = vld [vmem:[%s3642 + $0x44] sm:$0xf]
  %s3661 = scalar_lea.vmem [#allocation3], 320
  %v3662 = vld [vmem:[%s3661] sm:$0xf]
  %v3663 = vld [vmem:[%s3661 + $0x4] sm:$0xf]
  %v3664 = vld [vmem:[%s3661 + $0x8] sm:$0xf]
  %v3665 = vld [vmem:[%s3661 + $0xc] sm:$0xf]
  %v3666 = vld [vmem:[%s3661 + $0x10] sm:$0xf]
  %v3667 = vld [vmem:[%s3661 + $0x14] sm:$0xf]
  %v3668 = vld [vmem:[%s3661 + $0x18] sm:$0xf]
  %v3669 = vld [vmem:[%s3661 + $0x1c] sm:$0xf]
  %v3670 = vld [vmem:[%s3661 + $0x20] sm:$0xf]
  %v3671 = vld [vmem:[%s3661 + $0x24] sm:$0xf]
  %v3672 = vld [vmem:[%s3661 + $0x28] sm:$0xf]
  %v3673 = vld [vmem:[%s3661 + $0x2c] sm:$0xf]
  %v3674 = vld [vmem:[%s3661 + $0x30] sm:$0xf]
  %v3675 = vld [vmem:[%s3661 + $0x34] sm:$0xf]
  %v3676 = vld [vmem:[%s3661 + $0x38] sm:$0xf]
  %v3677 = vld [vmem:[%s3661 + $0x3c] sm:$0xf]
  %v3678 = vld [vmem:[%s3661 + $0x40] sm:$0xf]
  %v3679 = vld [vmem:[%s3661 + $0x44] sm:$0xf]
  %3680 = vrot.lane.b32.xlu0 %v3174, 32
  %v3681 = vpop.permute.xlu0 %3680
  %3682 = vrot.lane.b32.xlu0 %v3175, 32
  %v3683 = vpop.permute.xlu0 %3682
  %3684 = vrot.lane.b32.xlu0 %v3176, 32
  %v3685 = vpop.permute.xlu0 %3684
  %3686 = vrot.lane.b32.xlu0 %v3177, 32
  %v3687 = vpop.permute.xlu0 %3686
  %3688 = vrot.lane.b32.xlu0 %v3190, 64
  %v3689 = vpop.permute.xlu0 %3688
  %v3698 = vunpack.c.l.b16 %v3643
  %v3699 = vunpack.c.l.b16 %v3644
  %v3700 = vunpack.c.l.b16 %v3647
  %v3701 = vunpack.c.l.b16 %v3648
  %v3702 = vunpack.c.l.b16 %v3651
  %v3703 = vunpack.c.l.b16 %v3652
  %v3704 = vunpack.c.l.b16 %v3655
  %v3705 = vunpack.c.l.b16 %v3656
  %v3706 = vpack.c.b16 %v3699, %v3698
  %v3707 = vpack.c.b16 %v3701, %v3700
  %v3708 = vpack.c.b16 %v3703, %v3702
  %v3709 = vpack.c.b16 %v3705, %v3704
  %3710 = vrot.lane.b32.xlu0 %v3706, 96
  %v3711 = vpop.permute.xlu0 %3710
  %3712 = vrot.lane.b32.xlu0 %v3707, 96
  %v3713 = vpop.permute.xlu0 %3712
  %3714 = vrot.lane.b32.xlu0 %v3708, 96
  %v3715 = vpop.permute.xlu0 %3714
  %3716 = vrot.lane.b32.xlu0 %v3709, 96
  %v3717 = vpop.permute.xlu0 %3716
  %v3726 = vunpack.c.l.b16 %v3645
  %v3727 = vunpack.c.l.b16 %v3646
  %v3728 = vunpack.c.l.b16 %v3649
  %v3729 = vunpack.c.l.b16 %v3650
  %v3730 = vunpack.c.l.b16 %v3653
  %v3731 = vunpack.c.l.b16 %v3654
  %v3732 = vunpack.c.l.b16 %v3657
  %v3733 = vunpack.c.l.b16 %v3658
  %v3734 = vpack.c.b16 %v3727, %v3726
  %v3735 = vpack.c.b16 %v3729, %v3728
  %v3736 = vpack.c.b16 %v3731, %v3730
  %v3737 = vpack.c.b16 %v3733, %v3732
  %v3740 = vunpack.c.l.b16 %v3659
  %v3741 = vunpack.c.l.b16 %v3660
  %v3742 = vpack.c.b16 %v3741, %v3740
  %3743 = vrot.lane.b32.xlu0 %v3707, 32
  %v3744 = vpop.permute.xlu0 %3743
  %3745 = vrot.lane.b32.xlu0 %v3708, 32
  %v3746 = vpop.permute.xlu0 %3745
  %3747 = vrot.lane.b32.xlu0 %v3709, 32
  %v3748 = vpop.permute.xlu0 %3747
  %3749 = vrot.lane.b32.xlu0 %v3742, 32
  %v3750 = vpop.permute.xlu0 %3749
  %v3759 = vunpack.c.l.b16 %v3662
  %v3760 = vunpack.c.l.b16 %v3663
  %v3761 = vunpack.c.l.b16 %v3666
  %v3762 = vunpack.c.l.b16 %v3667
  %v3763 = vunpack.c.l.b16 %v3670
  %v3764 = vunpack.c.l.b16 %v3671
  %v3765 = vunpack.c.l.b16 %v3674
  %v3766 = vunpack.c.l.b16 %v3675
  %v3767 = vpack.c.b16 %v3760, %v3759
  %v3768 = vpack.c.b16 %v3762, %v3761
  %v3769 = vpack.c.b16 %v3764, %v3763
  %v3770 = vpack.c.b16 %v3766, %v3765
  %3771 = vrot.lane.b32.xlu0 %v3767, 64
  %v3772 = vpop.permute.xlu0 %3771
  %3773 = vrot.lane.b32.xlu0 %v3768, 64
  %v3774 = vpop.permute.xlu0 %3773
  %3775 = vrot.lane.b32.xlu0 %v3769, 64
  %v3776 = vpop.permute.xlu0 %3775
  %3777 = vrot.lane.b32.xlu0 %v3770, 64
  %v3778 = vpop.permute.xlu0 %3777
  %v3787 = vunpack.c.l.b16 %v3664
  %v3788 = vunpack.c.l.b16 %v3665
  %v3789 = vunpack.c.l.b16 %v3668
  %v3790 = vunpack.c.l.b16 %v3669
  %v3791 = vunpack.c.l.b16 %v3672
  %v3792 = vunpack.c.l.b16 %v3673
  %v3793 = vunpack.c.l.b16 %v3676
  %v3794 = vunpack.c.l.b16 %v3677
  %v3795 = vpack.c.b16 %v3788, %v3787
  %v3796 = vpack.c.b16 %v3790, %v3789
  %v3797 = vpack.c.b16 %v3792, %v3791
  %v3798 = vpack.c.b16 %v3794, %v3793
  %3799 = vrot.lane.b32.xlu0 %v3795, 96
  %v3800 = vpop.permute.xlu0 %3799
  %3801 = vrot.lane.b32.xlu0 %v3796, 96
  %v3802 = vpop.permute.xlu0 %3801
  %3803 = vrot.lane.b32.xlu0 %v3797, 96
  %v3804 = vpop.permute.xlu0 %3803
  %3805 = vrot.lane.b32.xlu0 %v3798, 96
  %v3806 = vpop.permute.xlu0 %3805
  %v3809 = vunpack.c.l.b16 %v3678
  %v3810 = vunpack.c.l.b16 %v3679
  %v3811 = vpack.c.b16 %v3810, %v3809
  %v3814 = vsel %vm3191, %v3146, %v3681
  %v3816 = vsel %vm3191, %v3147, %v3683
  %v3818 = vsel %vm3191, %v3148, %v3685
  %v3820 = vsel %vm3191, %v3149, %v3687
  %v3821 = vsel %vm3204, %v3814, %v3153
  %v3822 = vsel %vm3204, %v3816, %v3155
  %v3823 = vsel %vm3204, %v3818, %v3157
  %v3825 = vsel %vm3204, %v3820, %v3689
  %v3827 = vsel %vm3213, %v3821, %v3711
  %v3830 = vsel %vm3213, %v3822, %v3713
  %v3833 = vsel %vm3213, %v3823, %v3715
  %v3836 = vsel %vm3213, %v3825, %v3717
  %v3840 = vsel %vm3191, %v3734, %v3744
  %v3843 = vsel %vm3191, %v3735, %v3746
  %v3846 = vsel %vm3191, %v3736, %v3748
  %v3849 = vsel %vm3191, %v3737, %v3750
  %v3851 = vsel %vm3204, %v3840, %v3772
  %v3853 = vsel %vm3204, %v3843, %v3774
  %v3855 = vsel %vm3204, %v3846, %v3776
  %v3857 = vsel %vm3204, %v3849, %v3778
  %v3859 = vsel %vm3213, %v3851, %v3800
  %v3862 = vsel %vm3213, %v3853, %v3802
  %v3865 = vsel %vm3213, %v3855, %v3804
  %v3868 = vsel %vm3213, %v3857, %v3806
  %v3871 = vsel %vm3191, %v3768, 0
  %v3874 = vsel %vm3191, %v3769, 0
  %v3877 = vsel %vm3191, %v3770, 0
  %v3880 = vsel %vm3191, %v3811, 0
  %3882 = vmatprep.subr.bf16.mxu0 0
  %3883 = vmatpush1.bf16.msra.mxu0 %v3379
  %3884 = vmatprep.subr.bf16.mxu0 0
  %3885 = vmatpush1.bf16.msra.mxu0 %v3378
  %3886 = vmatprep.subr.bf16.mxu0 0
  %3887 = vmatpush1.bf16.msra.mxu0 %v3377
  %3888 = vmatprep.subr.bf16.mxu0 0
  %3889 = vmatpush1.bf16.msra.mxu0 %v3376
  %3890 = vmatprep.subr.bf16.mxu0 0
  %3891 = vmatpush1.bf16.msra.mxu0 %v3375
  %3892 = vmatprep.subr.bf16.mxu0 0
  %3893 = vmatpush1.bf16.msra.mxu0 %v3374
  %3894 = vmatprep.subr.bf16.mxu0 0
  %3895 = vmatpush1.bf16.msra.mxu0 %v3373
  %3896 = vmatprep.subr.bf16.mxu0 0
  %3897 = vmatpush1.bf16.msra.mxu0 %v3372
  %3898 = vmatprep.subr.bf16.mxu0 0
  %3899 = vmatpush2.bf16.msra.mxu0 %v3387
  %3900 = vmatprep.subr.bf16.mxu0 0
  %3901 = vmatpush2.bf16.msra.mxu0 %v3386
  %3902 = vmatprep.subr.bf16.mxu0 0
  %3903 = vmatpush2.bf16.msra.mxu0 %v3385
  %3904 = vmatprep.subr.bf16.mxu0 0
  %3905 = vmatpush2.bf16.msra.mxu0 %v3384
  %3906 = vmatprep.subr.bf16.mxu0 0
  %3907 = vmatpush2.bf16.msra.mxu0 %v3383
  %3908 = vmatprep.subr.bf16.mxu0 0
  %3909 = vmatpush2.bf16.msra.mxu0 %v3382
  %3910 = vmatprep.subr.bf16.mxu0 0
  %3911 = vmatpush2.bf16.msra.mxu0 %v3381
  %3912 = vmatprep.subr.bf16.mxu0 0
  %3913 = vmatpush2.bf16.msra.mxu0 %v3380
  %3914 = vmatprep.mubr.bf16.mxu0 %v3859
  %3915 = vmatmul.mubr.bf16.gmra.mxu0 %v3827
  %v3916 = vpop.f32.mrf.mxu0
  %v3917 = vadd.f32 %v3298, %v3916
  %v3918 = vpop.f32.mrf.mxu0
  %v3919 = vpop.f32.mrf.mxu0
  %v3920 = vadd.f32 %v3298, %v3919
  %v3921 = vpop.f32.mrf.mxu0
  %3922 = vmatprep.mubr.bf16.mxu0 %v3862
  %3923 = vmatmul.mubr.bf16.gmra.mxu0 %v3830
  %v3924 = vpop.f32.mrf.mxu0
  %v3925 = vadd.f32 %v3298, %v3924
  %v3926 = vpop.f32.mrf.mxu0
  %v3927 = vpop.f32.mrf.mxu0
  %v3928 = vadd.f32 %v3298, %v3927
  %v3929 = vpop.f32.mrf.mxu0
  %3930 = vmatprep.mubr.bf16.mxu0 %v3865
  %3931 = vmatmul.mubr.bf16.gmra.mxu0 %v3833
  %v3932 = vpop.f32.mrf.mxu0
  %v3933 = vadd.f32 %v3298, %v3932
  %v3934 = vpop.f32.mrf.mxu0
  %v3935 = vpop.f32.mrf.mxu0
  %v3936 = vadd.f32 %v3298, %v3935
  %v3937 = vpop.f32.mrf.mxu0
  %3938 = vmatprep.mubr.bf16.mxu0 %v3868
  %3939 = vmatmul.mubr.bf16.gmra.mxu0 %v3836
  %v3940 = vpop.f32.mrf.mxu0
  %v3941 = vadd.f32 %v3298, %v3940
  %v3942 = vpop.f32.mrf.mxu0
  %v3943 = vpop.f32.mrf.mxu0
  %v3944 = vadd.f32 %v3298, %v3943
  %v3945 = vpop.f32.mrf.mxu0
  %3946 = vdwg.mxu0
  %3947 = vmatprep.subr.bf16.mxu0 0
  %3948 = vmatpush1.bf16.msra.mxu0 0
  %3949 = vmatprep.subr.bf16.mxu0 0
  %3950 = vmatpush1.bf16.msra.mxu0 0
  %3951 = vmatprep.subr.bf16.mxu0 0
  %3952 = vmatpush1.bf16.msra.mxu0 0
  %3953 = vmatprep.subr.bf16.mxu0 0
  %3954 = vmatpush1.bf16.msra.mxu0 0
  %3955 = vmatprep.subr.bf16.mxu0 0
  %3956 = vmatpush1.bf16.msra.mxu0 0
  %3957 = vmatprep.subr.bf16.mxu0 0
  %3958 = vmatpush1.bf16.msra.mxu0 0
  %3959 = vmatprep.subr.bf16.mxu0 0
  %3960 = vmatpush1.bf16.msra.mxu0 %v3389
  %3961 = vmatprep.subr.bf16.mxu0 0
  %3962 = vmatpush1.bf16.msra.mxu0 %v3388
  %3963 = vmatprep.subr.bf16.mxu0 0
  %3964 = vmatpush2.bf16.msra.mxu0 0
  %3965 = vmatprep.subr.bf16.mxu0 0
  %3966 = vmatpush2.bf16.msra.mxu0 0
  %3967 = vmatprep.subr.bf16.mxu0 0
  %3968 = vmatpush2.bf16.msra.mxu0 0
  %3969 = vmatprep.subr.bf16.mxu0 0
  %3970 = vmatpush2.bf16.msra.mxu0 0
  %3971 = vmatprep.subr.bf16.mxu0 0
  %3972 = vmatpush2.bf16.msra.mxu0 0
  %3973 = vmatprep.subr.bf16.mxu0 0
  %3974 = vmatpush2.bf16.msra.mxu0 0
  %3975 = vmatprep.subr.bf16.mxu0 0
  %3976 = vmatpush2.bf16.msra.mxu0 0
  %3977 = vmatprep.subr.bf16.mxu0 0
  %3978 = vmatpush2.bf16.msra.mxu0 0
  %3979 = vmatprep.mubr.bf16.mxu0 0
  %3980 = vmatmul.mubr.bf16.gmra.mxu0 %v3871
  %v3981 = vpop.f32.mrf.mxu0
  %v3982 = vadd.f32 %v3917, %v3981
  %v3983 = vpop.f32.mrf.mxu0
  %v3984 = vpop.f32.mrf.mxu0
  %v3985 = vadd.f32 %v3920, %v3984
  %v3986 = vpop.f32.mrf.mxu0
  %3987 = vmatprep.mubr.bf16.mxu0 0
  %3988 = vmatmul.mubr.bf16.gmra.mxu0 %v3874
  %v3989 = vpop.f32.mrf.mxu0
  %v3990 = vadd.f32 %v3925, %v3989
  %v3991 = vpop.f32.mrf.mxu0
  %v3992 = vpop.f32.mrf.mxu0
  %v3993 = vadd.f32 %v3928, %v3992
  %v3994 = vpop.f32.mrf.mxu0
  %3995 = vmatprep.mubr.bf16.mxu0 0
  %3996 = vmatmul.mubr.bf16.gmra.mxu0 %v3877
  %v3997 = vpop.f32.mrf.mxu0
  %v3998 = vadd.f32 %v3933, %v3997
  %v3999 = vpop.f32.mrf.mxu0
  %v4000 = vpop.f32.mrf.mxu0
  %v4001 = vadd.f32 %v3936, %v4000
  %v4002 = vpop.f32.mrf.mxu0
  %4003 = vmatprep.mubr.bf16.mxu0 0
  %4004 = vmatmul.mubr.bf16.gmra.mxu0 %v3880
  %v4005 = vpop.f32.mrf.mxu0
  %v4006 = vadd.f32 %v3941, %v4005
  %v4007 = vpop.f32.mrf.mxu0
  %v4008 = vpop.f32.mrf.mxu0
  %v4009 = vadd.f32 %v3944, %v4008
  %v4010 = vpop.f32.mrf.mxu0
  %4011 = vdwg.mxu0
  %vm4012 = vcmp.ge.f32.partialorder %v3982, 0.0
  %vm4013 = vcmp.ge.f32.partialorder %v3985, 0.0
  %vm4014 = vcmp.ge.f32.partialorder %v3990, 0.0
  %vm4015 = vcmp.ge.f32.partialorder %v3993, 0.0
  %vm4016 = vcmp.ge.f32.partialorder %v3998, 0.0
  %vm4017 = vcmp.ge.f32.partialorder %v4001, 0.0
  %vm4018 = vcmp.ge.f32.partialorder %v4006, 0.0
  %vm4019 = vcmp.ge.f32.partialorder %v4009, 0.0
  %v4020 = vmul.f32 %v3982, 0.01
  %v4021 = vmul.f32 %v3985, 0.01
  %v4022 = vmul.f32 %v3990, 0.01
  %v4023 = vmul.f32 %v3993, 0.01
  %v4024 = vmul.f32 %v3998, 0.01
  %v4025 = vmul.f32 %v4001, 0.01
  %v4026 = vmul.f32 %v4006, 0.01
  %v4027 = vmul.f32 %v4009, 0.01
  %v4028 = vsel %vm4012, %v3982, %v4020
  %v4029 = vsel %vm4013, %v3985, %v4021
  %v4030 = vsel %vm4014, %v3990, %v4022
  %v4031 = vsel %vm4015, %v3993, %v4023
  %v4032 = vsel %vm4016, %v3998, %v4024
  %v4033 = vsel %vm4017, %v4001, %v4025
  %v4034 = vsel %vm4018, %v4006, %v4026
  %v4035 = vsel %vm4019, %v4009, %v4027
  %s4036 = scalar_lea.vmem %s7, 4
  %v4037 = vld [vmem:[%s4036] sm:$0x1]
  %v4038 = vld [vmem:[%s4036 + $0x1] sm:$0x1]
  %v4039 = vld [vmem:[%s4036 + $0x2] sm:$0x1]
  %v4040 = vld [vmem:[%s4036 + $0x3] sm:$0x1]
  %v4045 = vlaneseq
  %v4046 = vshrl.u32 %v4045, 7
  %v4047 = vsub.s32 0, %v4046
  %v4048 = vrot.slane %v4037, %v4047
  %v4049 = vlaneseq
  %v4050 = vshrl.u32 %v4049, 7
  %v4051 = vsub.s32 0, %v4050
  %v4052 = vrot.slane %v4038, %v4051
  %v4053 = vlaneseq
  %v4054 = vshrl.u32 %v4053, 7
  %v4055 = vsub.s32 0, %v4054
  %v4056 = vrot.slane %v4039, %v4055
  %v4057 = vlaneseq
  %v4058 = vshrl.u32 %v4057, 7
  %v4059 = vsub.s32 0, %v4058
  %v4060 = vrot.slane %v4040, %v4059
  %v4065 = vmul.f32 %v4028, %v4048
  %v4066 = vmul.f32 %v4029, %v4048
  %v4067 = vmul.f32 %v4030, %v4052
  %v4068 = vmul.f32 %v4031, %v4052
  %v4069 = vmul.f32 %v4032, %v4056
  %v4070 = vmul.f32 %v4033, %v4056
  %v4071 = vmul.f32 %v4034, %v4060
  %v4072 = vmul.f32 %v4035, %v4060
  %v4073 = vsel %vm3204, %v4065, 0.0
  %4074 = vadd.xlane.f32.xlu0 %v4073
  %v4075 = vpop.xlane.xlu0 %4074
  %v4076 = vsel %vm3204, %v4066, 0.0
  %4077 = vadd.xlane.f32.xlu0 %v4076
  %v4078 = vpop.xlane.xlu0 %4077
  %v4079 = vsel %vm3204, %v4067, 0.0
  %4080 = vadd.xlane.f32.xlu0 %v4079
  %v4081 = vpop.xlane.xlu0 %4080
  %v4082 = vsel %vm3204, %v4068, 0.0
  %4083 = vadd.xlane.f32.xlu0 %v4082
  %v4084 = vpop.xlane.xlu0 %4083
  %v4085 = vsel %vm3204, %v4069, 0.0
  %4086 = vadd.xlane.f32.xlu0 %v4085
  %v4087 = vpop.xlane.xlu0 %4086
  %v4088 = vsel %vm3204, %v4070, 0.0
  %4089 = vadd.xlane.f32.xlu0 %v4088
  %v4090 = vpop.xlane.xlu0 %4089
  %v4091 = vsel %vm3204, %v4071, 0.0
  %4092 = vadd.xlane.f32.xlu0 %v4091
  %v4093 = vpop.xlane.xlu0 %4092
  %v4094 = vsel %vm3204, %v4072, 0.0
  %4095 = vadd.xlane.f32.xlu0 %v4094
  %v4096 = vpop.xlane.xlu0 %4095
  %v4097 = vadd.f32 %v4075, %v4081
  %v4098 = vadd.f32 %v4097, %v4087
  %v4099 = vadd.f32 %v4098, %v4093
  %v4100 = vadd.f32 %v4078, %v4084
  %v4101 = vadd.f32 %v4100, %v4090
  %v4102 = vadd.f32 %v4101, %v4096
  %v4103 = vadd.f32 %v3640, %v4099
  %v4104 = vadd.f32 %v3641, %v4102
  %s4105 = scalar_lea.vmem [#allocation3], 400
  %v4106 = vld [vmem:[%s4105] sm:$0xf]
  %v4107 = vld [vmem:[%s4105 + $0x4] sm:$0xf]
  %v4108 = vld [vmem:[%s4105 + $0x8] sm:$0xf]
  %v4109 = vld [vmem:[%s4105 + $0xc] sm:$0xf]
  %v4110 = vld [vmem:[%s4105 + $0x10] sm:$0xf]
  %v4111 = vld [vmem:[%s4105 + $0x14] sm:$0xf]
  %v4112 = vld [vmem:[%s4105 + $0x18] sm:$0xf]
  %v4113 = vld [vmem:[%s4105 + $0x1c] sm:$0xf]
  %v4114 = vld [vmem:[%s4105 + $0x20] sm:$0xf]
  %v4115 = vld [vmem:[%s4105 + $0x24] sm:$0xf]
  %v4116 = vld [vmem:[%s4105 + $0x28] sm:$0xf]
  %v4117 = vld [vmem:[%s4105 + $0x2c] sm:$0xf]
  %v4118 = vld [vmem:[%s4105 + $0x30] sm:$0xf]
  %v4119 = vld [vmem:[%s4105 + $0x34] sm:$0xf]
  %v4120 = vld [vmem:[%s4105 + $0x38] sm:$0xf]
  %v4121 = vld [vmem:[%s4105 + $0x3c] sm:$0xf]
  %v4122 = vld [vmem:[%s4105 + $0x40] sm:$0xf]
  %v4123 = vld [vmem:[%s4105 + $0x44] sm:$0xf]
  %s4124 = scalar_lea.vmem [#allocation3], 480
  %v4125 = vld [vmem:[%s4124] sm:$0xf]
  %v4126 = vld [vmem:[%s4124 + $0x4] sm:$0xf]
  %v4127 = vld [vmem:[%s4124 + $0x8] sm:$0xf]
  %v4128 = vld [vmem:[%s4124 + $0xc] sm:$0xf]
  %v4129 = vld [vmem:[%s4124 + $0x10] sm:$0xf]
  %v4130 = vld [vmem:[%s4124 + $0x14] sm:$0xf]
  %v4131 = vld [vmem:[%s4124 + $0x18] sm:$0xf]
  %v4132 = vld [vmem:[%s4124 + $0x1c] sm:$0xf]
  %v4133 = vld [vmem:[%s4124 + $0x20] sm:$0xf]
  %v4134 = vld [vmem:[%s4124 + $0x24] sm:$0xf]
  %v4135 = vld [vmem:[%s4124 + $0x28] sm:$0xf]
  %v4136 = vld [vmem:[%s4124 + $0x2c] sm:$0xf]
  %v4137 = vld [vmem:[%s4124 + $0x30] sm:$0xf]
  %v4138 = vld [vmem:[%s4124 + $0x34] sm:$0xf]
  %v4139 = vld [vmem:[%s4124 + $0x38] sm:$0xf]
  %v4140 = vld [vmem:[%s4124 + $0x3c] sm:$0xf]
  %v4141 = vld [vmem:[%s4124 + $0x40] sm:$0xf]
  %v4142 = vld [vmem:[%s4124 + $0x44] sm:$0xf]
  %4143 = vrot.lane.b32.xlu0 %v3795, 32
  %v4144 = vpop.permute.xlu0 %4143
  %4145 = vrot.lane.b32.xlu0 %v3796, 32
  %v4146 = vpop.permute.xlu0 %4145
  %4147 = vrot.lane.b32.xlu0 %v3797, 32
  %v4148 = vpop.permute.xlu0 %4147
  %4149 = vrot.lane.b32.xlu0 %v3798, 32
  %v4150 = vpop.permute.xlu0 %4149
  %4151 = vrot.lane.b32.xlu0 %v3811, 64
  %v4152 = vpop.permute.xlu0 %4151
  %v4161 = vunpack.c.l.b16 %v4106
  %v4162 = vunpack.c.l.b16 %v4107
  %v4163 = vunpack.c.l.b16 %v4110
  %v4164 = vunpack.c.l.b16 %v4111
  %v4165 = vunpack.c.l.b16 %v4114
  %v4166 = vunpack.c.l.b16 %v4115
  %v4167 = vunpack.c.l.b16 %v4118
  %v4168 = vunpack.c.l.b16 %v4119
  %v4169 = vpack.c.b16 %v4162, %v4161
  %v4170 = vpack.c.b16 %v4164, %v4163
  %v4171 = vpack.c.b16 %v4166, %v4165
  %v4172 = vpack.c.b16 %v4168, %v4167
  %4173 = vrot.lane.b32.xlu0 %v4169, 96
  %v4174 = vpop.permute.xlu0 %4173
  %4175 = vrot.lane.b32.xlu0 %v4170, 96
  %v4176 = vpop.permute.xlu0 %4175
  %4177 = vrot.lane.b32.xlu0 %v4171, 96
  %v4178 = vpop.permute.xlu0 %4177
  %4179 = vrot.lane.b32.xlu0 %v4172, 96
  %v4180 = vpop.permute.xlu0 %4179
  %v4189 = vunpack.c.l.b16 %v4108
  %v4190 = vunpack.c.l.b16 %v4109
  %v4191 = vunpack.c.l.b16 %v4112
  %v4192 = vunpack.c.l.b16 %v4113
  %v4193 = vunpack.c.l.b16 %v4116
  %v4194 = vunpack.c.l.b16 %v4117
  %v4195 = vunpack.c.l.b16 %v4120
  %v4196 = vunpack.c.l.b16 %v4121
  %v4197 = vpack.c.b16 %v4190, %v4189
  %v4198 = vpack.c.b16 %v4192, %v4191
  %v4199 = vpack.c.b16 %v4194, %v4193
  %v4200 = vpack.c.b16 %v4196, %v4195
  %v4203 = vunpack.c.l.b16 %v4122
  %v4204 = vunpack.c.l.b16 %v4123
  %v4205 = vpack.c.b16 %v4204, %v4203
  %4206 = vrot.lane.b32.xlu0 %v4170, 32
  %v4207 = vpop.permute.xlu0 %4206
  %4208 = vrot.lane.b32.xlu0 %v4171, 32
  %v4209 = vpop.permute.xlu0 %4208
  %4210 = vrot.lane.b32.xlu0 %v4172, 32
  %v4211 = vpop.permute.xlu0 %4210
  %4212 = vrot.lane.b32.xlu0 %v4205, 32
  %v4213 = vpop.permute.xlu0 %4212
  %v4222 = vunpack.c.l.b16 %v4125
  %v4223 = vunpack.c.l.b16 %v4126
  %v4224 = vunpack.c.l.b16 %v4129
  %v4225 = vunpack.c.l.b16 %v4130
  %v4226 = vunpack.c.l.b16 %v4133
  %v4227 = vunpack.c.l.b16 %v4134
  %v4228 = vunpack.c.l.b16 %v4137
  %v4229 = vunpack.c.l.b16 %v4138
  %v4230 = vpack.c.b16 %v4223, %v4222
  %v4231 = vpack.c.b16 %v4225, %v4224
  %v4232 = vpack.c.b16 %v4227, %v4226
  %v4233 = vpack.c.b16 %v4229, %v4228
  %4234 = vrot.lane.b32.xlu0 %v4230, 64
  %v4235 = vpop.permute.xlu0 %4234
  %4236 = vrot.lane.b32.xlu0 %v4231, 64
  %v4237 = vpop.permute.xlu0 %4236
  %4238 = vrot.lane.b32.xlu0 %v4232, 64
  %v4239 = vpop.permute.xlu0 %4238
  %4240 = vrot.lane.b32.xlu0 %v4233, 64
  %v4241 = vpop.permute.xlu0 %4240
  %v4250 = vunpack.c.l.b16 %v4127
  %v4251 = vunpack.c.l.b16 %v4128
  %v4252 = vunpack.c.l.b16 %v4131
  %v4253 = vunpack.c.l.b16 %v4132
  %v4254 = vunpack.c.l.b16 %v4135
  %v4255 = vunpack.c.l.b16 %v4136
  %v4256 = vunpack.c.l.b16 %v4139
  %v4257 = vunpack.c.l.b16 %v4140
  %v4258 = vpack.c.b16 %v4251, %v4250
  %v4259 = vpack.c.b16 %v4253, %v4252
  %v4260 = vpack.c.b16 %v4255, %v4254
  %v4261 = vpack.c.b16 %v4257, %v4256
  %4262 = vrot.lane.b32.xlu0 %v4258, 96
  %v4263 = vpop.permute.xlu0 %4262
  %4264 = vrot.lane.b32.xlu0 %v4259, 96
  %v4265 = vpop.permute.xlu0 %4264
  %4266 = vrot.lane.b32.xlu0 %v4260, 96
  %v4267 = vpop.permute.xlu0 %4266
  %4268 = vrot.lane.b32.xlu0 %v4261, 96
  %v4269 = vpop.permute.xlu0 %4268
  %v4272 = vunpack.c.l.b16 %v4141
  %v4273 = vunpack.c.l.b16 %v4142
  %v4274 = vpack.c.b16 %v4273, %v4272
  %v4277 = vsel %vm3191, %v3767, %v4144
  %v4279 = vsel %vm3191, %v3768, %v4146
  %v4281 = vsel %vm3191, %v3769, %v4148
  %v4283 = vsel %vm3191, %v3770, %v4150
  %v4284 = vsel %vm3204, %v4277, %v3774
  %v4285 = vsel %vm3204, %v4279, %v3776
  %v4286 = vsel %vm3204, %v4281, %v3778
  %v4288 = vsel %vm3204, %v4283, %v4152
  %v4290 = vsel %vm3213, %v4284, %v4174
  %v4293 = vsel %vm3213, %v4285, %v4176
  %v4296 = vsel %vm3213, %v4286, %v4178
  %v4299 = vsel %vm3213, %v4288, %v4180
  %v4303 = vsel %vm3191, %v4197, %v4207
  %v4306 = vsel %vm3191, %v4198, %v4209
  %v4309 = vsel %vm3191, %v4199, %v4211
  %v4312 = vsel %vm3191, %v4200, %v4213
  %v4314 = vsel %vm3204, %v4303, %v4235
  %v4316 = vsel %vm3204, %v4306, %v4237
  %v4318 = vsel %vm3204, %v4309, %v4239
  %v4320 = vsel %vm3204, %v4312, %v4241
  %v4322 = vsel %vm3213, %v4314, %v4263
  %v4325 = vsel %vm3213, %v4316, %v4265
  %v4328 = vsel %vm3213, %v4318, %v4267
  %v4331 = vsel %vm3213, %v4320, %v4269
  %v4334 = vsel %vm3191, %v4231, 0
  %v4337 = vsel %vm3191, %v4232, 0
  %v4340 = vsel %vm3191, %v4233, 0
  %v4343 = vsel %vm3191, %v4274, 0
  %4345 = vmatprep.subr.bf16.mxu0 0
  %4346 = vmatpush1.bf16.msra.mxu0 %v3379
  %4347 = vmatprep.subr.bf16.mxu0 0
  %4348 = vmatpush1.bf16.msra.mxu0 %v3378
  %4349 = vmatprep.subr.bf16.mxu0 0
  %4350 = vmatpush1.bf16.msra.mxu0 %v3377
  %4351 = vmatprep.subr.bf16.mxu0 0
  %4352 = vmatpush1.bf16.msra.mxu0 %v3376
  %4353 = vmatprep.subr.bf16.mxu0 0
  %4354 = vmatpush1.bf16.msra.mxu0 %v3375
  %4355 = vmatprep.subr.bf16.mxu0 0
  %4356 = vmatpush1.bf16.msra.mxu0 %v3374
  %4357 = vmatprep.subr.bf16.mxu0 0
  %4358 = vmatpush1.bf16.msra.mxu0 %v3373
  %4359 = vmatprep.subr.bf16.mxu0 0
  %4360 = vmatpush1.bf16.msra.mxu0 %v3372
  %4361 = vmatprep.subr.bf16.mxu0 0
  %4362 = vmatpush2.bf16.msra.mxu0 %v3387
  %4363 = vmatprep.subr.bf16.mxu0 0
  %4364 = vmatpush2.bf16.msra.mxu0 %v3386
  %4365 = vmatprep.subr.bf16.mxu0 0
  %4366 = vmatpush2.bf16.msra.mxu0 %v3385
  %4367 = vmatprep.subr.bf16.mxu0 0
  %4368 = vmatpush2.bf16.msra.mxu0 %v3384
  %4369 = vmatprep.subr.bf16.mxu0 0
  %4370 = vmatpush2.bf16.msra.mxu0 %v3383
  %4371 = vmatprep.subr.bf16.mxu0 0
  %4372 = vmatpush2.bf16.msra.mxu0 %v3382
  %4373 = vmatprep.subr.bf16.mxu0 0
  %4374 = vmatpush2.bf16.msra.mxu0 %v3381
  %4375 = vmatprep.subr.bf16.mxu0 0
  %4376 = vmatpush2.bf16.msra.mxu0 %v3380
  %4377 = vmatprep.mubr.bf16.mxu0 %v4322
  %4378 = vmatmul.mubr.bf16.gmra.mxu0 %v4290
  %v4379 = vpop.f32.mrf.mxu0
  %v4380 = vadd.f32 %v3298, %v4379
  %v4381 = vpop.f32.mrf.mxu0
  %v4382 = vpop.f32.mrf.mxu0
  %v4383 = vadd.f32 %v3298, %v4382
  %v4384 = vpop.f32.mrf.mxu0
  %4385 = vmatprep.mubr.bf16.mxu0 %v4325
  %4386 = vmatmul.mubr.bf16.gmra.mxu0 %v4293
  %v4387 = vpop.f32.mrf.mxu0
  %v4388 = vadd.f32 %v3298, %v4387
  %v4389 = vpop.f32.mrf.mxu0
  %v4390 = vpop.f32.mrf.mxu0
  %v4391 = vadd.f32 %v3298, %v4390
  %v4392 = vpop.f32.mrf.mxu0
  %4393 = vmatprep.mubr.bf16.mxu0 %v4328
  %4394 = vmatmul.mubr.bf16.gmra.mxu0 %v4296
  %v4395 = vpop.f32.mrf.mxu0
  %v4396 = vadd.f32 %v3298, %v4395
  %v4397 = vpop.f32.mrf.mxu0
  %v4398 = vpop.f32.mrf.mxu0
  %v4399 = vadd.f32 %v3298, %v4398
  %v4400 = vpop.f32.mrf.mxu0
  %4401 = vmatprep.mubr.bf16.mxu0 %v4331
  %4402 = vmatmul.mubr.bf16.gmra.mxu0 %v4299
  %v4403 = vpop.f32.mrf.mxu0
  %v4404 = vadd.f32 %v3298, %v4403
  %v4405 = vpop.f32.mrf.mxu0
  %v4406 = vpop.f32.mrf.mxu0
  %v4407 = vadd.f32 %v3298, %v4406
  %v4408 = vpop.f32.mrf.mxu0
  %4409 = vdwg.mxu0
  %4410 = vmatprep.subr.bf16.mxu0 0
  %4411 = vmatpush1.bf16.msra.mxu0 0
  %4412 = vmatprep.subr.bf16.mxu0 0
  %4413 = vmatpush1.bf16.msra.mxu0 0
  %4414 = vmatprep.subr.bf16.mxu0 0
  %4415 = vmatpush1.bf16.msra.mxu0 0
  %4416 = vmatprep.subr.bf16.mxu0 0
  %4417 = vmatpush1.bf16.msra.mxu0 0
  %4418 = vmatprep.subr.bf16.mxu0 0
  %4419 = vmatpush1.bf16.msra.mxu0 0
  %4420 = vmatprep.subr.bf16.mxu0 0
  %4421 = vmatpush1.bf16.msra.mxu0 0
  %4422 = vmatprep.subr.bf16.mxu0 0
  %4423 = vmatpush1.bf16.msra.mxu0 %v3389
  %4424 = vmatprep.subr.bf16.mxu0 0
  %4425 = vmatpush1.bf16.msra.mxu0 %v3388
  %4426 = vmatprep.subr.bf16.mxu0 0
  %4427 = vmatpush2.bf16.msra.mxu0 0
  %4428 = vmatprep.subr.bf16.mxu0 0
  %4429 = vmatpush2.bf16.msra.mxu0 0
  %4430 = vmatprep.subr.bf16.mxu0 0
  %4431 = vmatpush2.bf16.msra.mxu0 0
  %4432 = vmatprep.subr.bf16.mxu0 0
  %4433 = vmatpush2.bf16.msra.mxu0 0
  %4434 = vmatprep.subr.bf16.mxu0 0
  %4435 = vmatpush2.bf16.msra.mxu0 0
  %4436 = vmatprep.subr.bf16.mxu0 0
  %4437 = vmatpush2.bf16.msra.mxu0 0
  %4438 = vmatprep.subr.bf16.mxu0 0
  %4439 = vmatpush2.bf16.msra.mxu0 0
  %4440 = vmatprep.subr.bf16.mxu0 0
  %4441 = vmatpush2.bf16.msra.mxu0 0
  %4442 = vmatprep.mubr.bf16.mxu0 0
  %4443 = vmatmul.mubr.bf16.gmra.mxu0 %v4334
  %v4444 = vpop.f32.mrf.mxu0
  %v4445 = vadd.f32 %v4380, %v4444
  %v4446 = vpop.f32.mrf.mxu0
  %v4447 = vpop.f32.mrf.mxu0
  %v4448 = vadd.f32 %v4383, %v4447
  %v4449 = vpop.f32.mrf.mxu0
  %4450 = vmatprep.mubr.bf16.mxu0 0
  %4451 = vmatmul.mubr.bf16.gmra.mxu0 %v4337
  %v4452 = vpop.f32.mrf.mxu0
  %v4453 = vadd.f32 %v4388, %v4452
  %v4454 = vpop.f32.mrf.mxu0
  %v4455 = vpop.f32.mrf.mxu0
  %v4456 = vadd.f32 %v4391, %v4455
  %v4457 = vpop.f32.mrf.mxu0
  %4458 = vmatprep.mubr.bf16.mxu0 0
  %4459 = vmatmul.mubr.bf16.gmra.mxu0 %v4340
  %v4460 = vpop.f32.mrf.mxu0
  %v4461 = vadd.f32 %v4396, %v4460
  %v4462 = vpop.f32.mrf.mxu0
  %v4463 = vpop.f32.mrf.mxu0
  %v4464 = vadd.f32 %v4399, %v4463
  %v4465 = vpop.f32.mrf.mxu0
  %4466 = vmatprep.mubr.bf16.mxu0 0
  %4467 = vmatmul.mubr.bf16.gmra.mxu0 %v4343
  %v4468 = vpop.f32.mrf.mxu0
  %v4469 = vadd.f32 %v4404, %v4468
  %v4470 = vpop.f32.mrf.mxu0
  %v4471 = vpop.f32.mrf.mxu0
  %v4472 = vadd.f32 %v4407, %v4471
  %v4473 = vpop.f32.mrf.mxu0
  %4474 = vdwg.mxu0
  %vm4475 = vcmp.ge.f32.partialorder %v4445, 0.0
  %vm4476 = vcmp.ge.f32.partialorder %v4448, 0.0
  %vm4477 = vcmp.ge.f32.partialorder %v4453, 0.0
  %vm4478 = vcmp.ge.f32.partialorder %v4456, 0.0
  %vm4479 = vcmp.ge.f32.partialorder %v4461, 0.0
  %vm4480 = vcmp.ge.f32.partialorder %v4464, 0.0
  %vm4481 = vcmp.ge.f32.partialorder %v4469, 0.0
  %vm4482 = vcmp.ge.f32.partialorder %v4472, 0.0
  %v4483 = vmul.f32 %v4445, 0.01
  %v4484 = vmul.f32 %v4448, 0.01
  %v4485 = vmul.f32 %v4453, 0.01
  %v4486 = vmul.f32 %v4456, 0.01
  %v4487 = vmul.f32 %v4461, 0.01
  %v4488 = vmul.f32 %v4464, 0.01
  %v4489 = vmul.f32 %v4469, 0.01
  %v4490 = vmul.f32 %v4472, 0.01
  %v4491 = vsel %vm4475, %v4445, %v4483
  %v4492 = vsel %vm4476, %v4448, %v4484
  %v4493 = vsel %vm4477, %v4453, %v4485
  %v4494 = vsel %vm4478, %v4456, %v4486
  %v4495 = vsel %vm4479, %v4461, %v4487
  %v4496 = vsel %vm4480, %v4464, %v4488
  %v4497 = vsel %vm4481, %v4469, %v4489
  %v4498 = vsel %vm4482, %v4472, %v4490
  %s4499 = scalar_lea.vmem %s7, 8
  %v4500 = vld [vmem:[%s4499] sm:$0x1]
  %v4501 = vld [vmem:[%s4499 + $0x1] sm:$0x1]
  %v4502 = vld [vmem:[%s4499 + $0x2] sm:$0x1]
  %v4503 = vld [vmem:[%s4499 + $0x3] sm:$0x1]
  %v4508 = vlaneseq
  %v4509 = vshrl.u32 %v4508, 7
  %v4510 = vsub.s32 0, %v4509
  %v4511 = vrot.slane %v4500, %v4510
  %v4512 = vlaneseq
  %v4513 = vshrl.u32 %v4512, 7
  %v4514 = vsub.s32 0, %v4513
  %v4515 = vrot.slane %v4501, %v4514
  %v4516 = vlaneseq
  %v4517 = vshrl.u32 %v4516, 7
  %v4518 = vsub.s32 0, %v4517
  %v4519 = vrot.slane %v4502, %v4518
  %v4520 = vlaneseq
  %v4521 = vshrl.u32 %v4520, 7
  %v4522 = vsub.s32 0, %v4521
  %v4523 = vrot.slane %v4503, %v4522
  %v4528 = vmul.f32 %v4491, %v4511
  %v4529 = vmul.f32 %v4492, %v4511
  %v4530 = vmul.f32 %v4493, %v4515
  %v4531 = vmul.f32 %v4494, %v4515
  %v4532 = vmul.f32 %v4495, %v4519
  %v4533 = vmul.f32 %v4496, %v4519
  %v4534 = vmul.f32 %v4497, %v4523
  %v4535 = vmul.f32 %v4498, %v4523
  %v4536 = vsel %vm3204, %v4528, 0.0
  %4537 = vadd.xlane.f32.xlu0 %v4536
  %v4538 = vpop.xlane.xlu0 %4537
  %v4539 = vsel %vm3204, %v4529, 0.0
  %4540 = vadd.xlane.f32.xlu0 %v4539
  %v4541 = vpop.xlane.xlu0 %4540
  %v4542 = vsel %vm3204, %v4530, 0.0
  %4543 = vadd.xlane.f32.xlu0 %v4542
  %v4544 = vpop.xlane.xlu0 %4543
  %v4545 = vsel %vm3204, %v4531, 0.0
  %4546 = vadd.xlane.f32.xlu0 %v4545
  %v4547 = vpop.xlane.xlu0 %4546
  %v4548 = vsel %vm3204, %v4532, 0.0
  %4549 = vadd.xlane.f32.xlu0 %v4548
  %v4550 = vpop.xlane.xlu0 %4549
  %v4551 = vsel %vm3204, %v4533, 0.0
  %4552 = vadd.xlane.f32.xlu0 %v4551
  %v4553 = vpop.xlane.xlu0 %4552
  %v4554 = vsel %vm3204, %v4534, 0.0
  %4555 = vadd.xlane.f32.xlu0 %v4554
  %v4556 = vpop.xlane.xlu0 %4555
  %v4557 = vsel %vm3204, %v4535, 0.0
  %4558 = vadd.xlane.f32.xlu0 %v4557
  %v4559 = vpop.xlane.xlu0 %4558
  %v4560 = vadd.f32 %v4538, %v4544
  %v4561 = vadd.f32 %v4560, %v4550
  %v4562 = vadd.f32 %v4561, %v4556
  %v4563 = vadd.f32 %v4541, %v4547
  %v4564 = vadd.f32 %v4563, %v4553
  %v4565 = vadd.f32 %v4564, %v4559
  %v4566 = vadd.f32 %v4103, %v4562
  %v4567 = vadd.f32 %v4104, %v4565
  %s4568 = scalar_lea.vmem [#allocation3], 560
  %v4569 = vld [vmem:[%s4568] sm:$0xf]
  %v4570 = vld [vmem:[%s4568 + $0x4] sm:$0xf]
  %v4571 = vld [vmem:[%s4568 + $0x8] sm:$0xf]
  %v4572 = vld [vmem:[%s4568 + $0xc] sm:$0xf]
  %v4573 = vld [vmem:[%s4568 + $0x10] sm:$0xf]
  %v4574 = vld [vmem:[%s4568 + $0x14] sm:$0xf]
  %v4575 = vld [vmem:[%s4568 + $0x18] sm:$0xf]
  %v4576 = vld [vmem:[%s4568 + $0x1c] sm:$0xf]
  %v4577 = vld [vmem:[%s4568 + $0x20] sm:$0xf]
  %v4578 = vld [vmem:[%s4568 + $0x24] sm:$0xf]
  %v4579 = vld [vmem:[%s4568 + $0x28] sm:$0xf]
  %v4580 = vld [vmem:[%s4568 + $0x2c] sm:$0xf]
  %v4581 = vld [vmem:[%s4568 + $0x30] sm:$0xf]
  %v4582 = vld [vmem:[%s4568 + $0x34] sm:$0xf]
  %v4583 = vld [vmem:[%s4568 + $0x38] sm:$0xf]
  %v4584 = vld [vmem:[%s4568 + $0x3c] sm:$0xf]
  %v4585 = vld [vmem:[%s4568 + $0x40] sm:$0xf]
  %v4586 = vld [vmem:[%s4568 + $0x44] sm:$0xf]
  %s4587 = scalar_lea.vmem [#allocation3], 640
  %v4588 = vld [vmem:[%s4587] sm:$0xf]
  %v4589 = vld [vmem:[%s4587 + $0x4] sm:$0xf]
  %v4590 = vld [vmem:[%s4587 + $0x8] sm:$0xf]
  %v4591 = vld [vmem:[%s4587 + $0xc] sm:$0xf]
  %v4592 = vld [vmem:[%s4587 + $0x10] sm:$0xf]
  %v4593 = vld [vmem:[%s4587 + $0x14] sm:$0xf]
  %v4594 = vld [vmem:[%s4587 + $0x18] sm:$0xf]
  %v4595 = vld [vmem:[%s4587 + $0x1c] sm:$0xf]
  %v4596 = vld [vmem:[%s4587 + $0x20] sm:$0xf]
  %v4597 = vld [vmem:[%s4587 + $0x24] sm:$0xf]
  %v4598 = vld [vmem:[%s4587 + $0x28] sm:$0xf]
  %v4599 = vld [vmem:[%s4587 + $0x2c] sm:$0xf]
  %v4600 = vld [vmem:[%s4587 + $0x30] sm:$0xf]
  %v4601 = vld [vmem:[%s4587 + $0x34] sm:$0xf]
  %v4602 = vld [vmem:[%s4587 + $0x38] sm:$0xf]
  %v4603 = vld [vmem:[%s4587 + $0x3c] sm:$0xf]
  %v4604 = vld [vmem:[%s4587 + $0x40] sm:$0xf]
  %v4605 = vld [vmem:[%s4587 + $0x44] sm:$0xf]
  %4606 = vrot.lane.b32.xlu0 %v4258, 32
  %v4607 = vpop.permute.xlu0 %4606
  %4608 = vrot.lane.b32.xlu0 %v4259, 32
  %v4609 = vpop.permute.xlu0 %4608
  %4610 = vrot.lane.b32.xlu0 %v4260, 32
  %v4611 = vpop.permute.xlu0 %4610
  %4612 = vrot.lane.b32.xlu0 %v4261, 32
  %v4613 = vpop.permute.xlu0 %4612
  %4614 = vrot.lane.b32.xlu0 %v4274, 64
  %v4615 = vpop.permute.xlu0 %4614
  %v4624 = vunpack.c.l.b16 %v4569
  %v4625 = vunpack.c.l.b16 %v4570
  %v4626 = vunpack.c.l.b16 %v4573
  %v4627 = vunpack.c.l.b16 %v4574
  %v4628 = vunpack.c.l.b16 %v4577
  %v4629 = vunpack.c.l.b16 %v4578
  %v4630 = vunpack.c.l.b16 %v4581
  %v4631 = vunpack.c.l.b16 %v4582
  %v4632 = vpack.c.b16 %v4625, %v4624
  %v4633 = vpack.c.b16 %v4627, %v4626
  %v4634 = vpack.c.b16 %v4629, %v4628
  %v4635 = vpack.c.b16 %v4631, %v4630
  %4636 = vrot.lane.b32.xlu0 %v4632, 96
  %v4637 = vpop.permute.xlu0 %4636
  %4638 = vrot.lane.b32.xlu0 %v4633, 96
  %v4639 = vpop.permute.xlu0 %4638
  %4640 = vrot.lane.b32.xlu0 %v4634, 96
  %v4641 = vpop.permute.xlu0 %4640
  %4642 = vrot.lane.b32.xlu0 %v4635, 96
  %v4643 = vpop.permute.xlu0 %4642
  %v4652 = vunpack.c.l.b16 %v4571
  %v4653 = vunpack.c.l.b16 %v4572
  %v4654 = vunpack.c.l.b16 %v4575
  %v4655 = vunpack.c.l.b16 %v4576
  %v4656 = vunpack.c.l.b16 %v4579
  %v4657 = vunpack.c.l.b16 %v4580
  %v4658 = vunpack.c.l.b16 %v4583
  %v4659 = vunpack.c.l.b16 %v4584
  %v4660 = vpack.c.b16 %v4653, %v4652
  %v4661 = vpack.c.b16 %v4655, %v4654
  %v4662 = vpack.c.b16 %v4657, %v4656
  %v4663 = vpack.c.b16 %v4659, %v4658
  %v4666 = vunpack.c.l.b16 %v4585
  %v4667 = vunpack.c.l.b16 %v4586
  %v4668 = vpack.c.b16 %v4667, %v4666
  %4669 = vrot.lane.b32.xlu0 %v4633, 32
  %v4670 = vpop.permute.xlu0 %4669
  %4671 = vrot.lane.b32.xlu0 %v4634, 32
  %v4672 = vpop.permute.xlu0 %4671
  %4673 = vrot.lane.b32.xlu0 %v4635, 32
  %v4674 = vpop.permute.xlu0 %4673
  %4675 = vrot.lane.b32.xlu0 %v4668, 32
  %v4676 = vpop.permute.xlu0 %4675
  %v4685 = vunpack.c.l.b16 %v4588
  %v4686 = vunpack.c.l.b16 %v4589
  %v4687 = vunpack.c.l.b16 %v4592
  %v4688 = vunpack.c.l.b16 %v4593
  %v4689 = vunpack.c.l.b16 %v4596
  %v4690 = vunpack.c.l.b16 %v4597
  %v4691 = vunpack.c.l.b16 %v4600
  %v4692 = vunpack.c.l.b16 %v4601
  %v4693 = vpack.c.b16 %v4686, %v4685
  %v4694 = vpack.c.b16 %v4688, %v4687
  %v4695 = vpack.c.b16 %v4690, %v4689
  %v4696 = vpack.c.b16 %v4692, %v4691
  %4697 = vrot.lane.b32.xlu0 %v4693, 64
  %v4698 = vpop.permute.xlu0 %4697
  %4699 = vrot.lane.b32.xlu0 %v4694, 64
  %v4700 = vpop.permute.xlu0 %4699
  %4701 = vrot.lane.b32.xlu0 %v4695, 64
  %v4702 = vpop.permute.xlu0 %4701
  %4703 = vrot.lane.b32.xlu0 %v4696, 64
  %v4704 = vpop.permute.xlu0 %4703
  %v4713 = vunpack.c.l.b16 %v4590
  %v4714 = vunpack.c.l.b16 %v4591
  %v4715 = vunpack.c.l.b16 %v4594
  %v4716 = vunpack.c.l.b16 %v4595
  %v4717 = vunpack.c.l.b16 %v4598
  %v4718 = vunpack.c.l.b16 %v4599
  %v4719 = vunpack.c.l.b16 %v4602
  %v4720 = vunpack.c.l.b16 %v4603
  %v4721 = vpack.c.b16 %v4714, %v4713
  %v4722 = vpack.c.b16 %v4716, %v4715
  %v4723 = vpack.c.b16 %v4718, %v4717
  %v4724 = vpack.c.b16 %v4720, %v4719
  %4725 = vrot.lane.b32.xlu0 %v4721, 96
  %v4726 = vpop.permute.xlu0 %4725
  %4727 = vrot.lane.b32.xlu0 %v4722, 96
  %v4728 = vpop.permute.xlu0 %4727
  %4729 = vrot.lane.b32.xlu0 %v4723, 96
  %v4730 = vpop.permute.xlu0 %4729
  %4731 = vrot.lane.b32.xlu0 %v4724, 96
  %v4732 = vpop.permute.xlu0 %4731
  %v4735 = vunpack.c.l.b16 %v4604
  %v4736 = vunpack.c.l.b16 %v4605
  %v4737 = vpack.c.b16 %v4736, %v4735
  %v4740 = vsel %vm3191, %v4230, %v4607
  %v4742 = vsel %vm3191, %v4231, %v4609
  %v4744 = vsel %vm3191, %v4232, %v4611
  %v4746 = vsel %vm3191, %v4233, %v4613
  %v4747 = vsel %vm3204, %v4740, %v4237
  %v4748 = vsel %vm3204, %v4742, %v4239
  %v4749 = vsel %vm3204, %v4744, %v4241
  %v4751 = vsel %vm3204, %v4746, %v4615
  %v4753 = vsel %vm3213, %v4747, %v4637
  %v4756 = vsel %vm3213, %v4748, %v4639
  %v4759 = vsel %vm3213, %v4749, %v4641
  %v4762 = vsel %vm3213, %v4751, %v4643
  %v4766 = vsel %vm3191, %v4660, %v4670
  %v4769 = vsel %vm3191, %v4661, %v4672
  %v4772 = vsel %vm3191, %v4662, %v4674
  %v4775 = vsel %vm3191, %v4663, %v4676
  %v4777 = vsel %vm3204, %v4766, %v4698
  %v4779 = vsel %vm3204, %v4769, %v4700
  %v4781 = vsel %vm3204, %v4772, %v4702
  %v4783 = vsel %vm3204, %v4775, %v4704
  %v4785 = vsel %vm3213, %v4777, %v4726
  %v4788 = vsel %vm3213, %v4779, %v4728
  %v4791 = vsel %vm3213, %v4781, %v4730
  %v4794 = vsel %vm3213, %v4783, %v4732
  %v4797 = vsel %vm3191, %v4694, 0
  %v4800 = vsel %vm3191, %v4695, 0
  %v4803 = vsel %vm3191, %v4696, 0
  %v4806 = vsel %vm3191, %v4737, 0
  %4808 = vmatprep.subr.bf16.mxu0 0
  %4809 = vmatpush1.bf16.msra.mxu0 %v3379
  %4810 = vmatprep.subr.bf16.mxu0 0
  %4811 = vmatpush1.bf16.msra.mxu0 %v3378
  %4812 = vmatprep.subr.bf16.mxu0 0
  %4813 = vmatpush1.bf16.msra.mxu0 %v3377
  %4814 = vmatprep.subr.bf16.mxu0 0
  %4815 = vmatpush1.bf16.msra.mxu0 %v3376
  %4816 = vmatprep.subr.bf16.mxu0 0
  %4817 = vmatpush1.bf16.msra.mxu0 %v3375
  %4818 = vmatprep.subr.bf16.mxu0 0
  %4819 = vmatpush1.bf16.msra.mxu0 %v3374
  %4820 = vmatprep.subr.bf16.mxu0 0
  %4821 = vmatpush1.bf16.msra.mxu0 %v3373
  %4822 = vmatprep.subr.bf16.mxu0 0
  %4823 = vmatpush1.bf16.msra.mxu0 %v3372
  %4824 = vmatprep.subr.bf16.mxu0 0
  %4825 = vmatpush2.bf16.msra.mxu0 %v3387
  %4826 = vmatprep.subr.bf16.mxu0 0
  %4827 = vmatpush2.bf16.msra.mxu0 %v3386
  %4828 = vmatprep.subr.bf16.mxu0 0
  %4829 = vmatpush2.bf16.msra.mxu0 %v3385
  %4830 = vmatprep.subr.bf16.mxu0 0
  %4831 = vmatpush2.bf16.msra.mxu0 %v3384
  %4832 = vmatprep.subr.bf16.mxu0 0
  %4833 = vmatpush2.bf16.msra.mxu0 %v3383
  %4834 = vmatprep.subr.bf16.mxu0 0
  %4835 = vmatpush2.bf16.msra.mxu0 %v3382
  %4836 = vmatprep.subr.bf16.mxu0 0
  %4837 = vmatpush2.bf16.msra.mxu0 %v3381
  %4838 = vmatprep.subr.bf16.mxu0 0
  %4839 = vmatpush2.bf16.msra.mxu0 %v3380
  %4840 = vmatprep.mubr.bf16.mxu0 %v4785
  %4841 = vmatmul.mubr.bf16.gmra.mxu0 %v4753
  %v4842 = vpop.f32.mrf.mxu0
  %v4843 = vadd.f32 %v3298, %v4842
  %v4844 = vpop.f32.mrf.mxu0
  %v4845 = vpop.f32.mrf.mxu0
  %v4846 = vadd.f32 %v3298, %v4845
  %v4847 = vpop.f32.mrf.mxu0
  %4848 = vmatprep.mubr.bf16.mxu0 %v4788
  %4849 = vmatmul.mubr.bf16.gmra.mxu0 %v4756
  %v4850 = vpop.f32.mrf.mxu0
  %v4851 = vadd.f32 %v3298, %v4850
  %v4852 = vpop.f32.mrf.mxu0
  %v4853 = vpop.f32.mrf.mxu0
  %v4854 = vadd.f32 %v3298, %v4853
  %v4855 = vpop.f32.mrf.mxu0
  %4856 = vmatprep.mubr.bf16.mxu0 %v4791
  %4857 = vmatmul.mubr.bf16.gmra.mxu0 %v4759
  %v4858 = vpop.f32.mrf.mxu0
  %v4859 = vadd.f32 %v3298, %v4858
  %v4860 = vpop.f32.mrf.mxu0
  %v4861 = vpop.f32.mrf.mxu0
  %v4862 = vadd.f32 %v3298, %v4861
  %v4863 = vpop.f32.mrf.mxu0
  %4864 = vmatprep.mubr.bf16.mxu0 %v4794
  %4865 = vmatmul.mubr.bf16.gmra.mxu0 %v4762
  %v4866 = vpop.f32.mrf.mxu0
  %v4867 = vadd.f32 %v3298, %v4866
  %v4868 = vpop.f32.mrf.mxu0
  %v4869 = vpop.f32.mrf.mxu0
  %v4870 = vadd.f32 %v3298, %v4869
  %v4871 = vpop.f32.mrf.mxu0
  %4872 = vdwg.mxu0
  %4873 = vmatprep.subr.bf16.mxu0 0
  %4874 = vmatpush1.bf16.msra.mxu0 0
  %4875 = vmatprep.subr.bf16.mxu0 0
  %4876 = vmatpush1.bf16.msra.mxu0 0
  %4877 = vmatprep.subr.bf16.mxu0 0
  %4878 = vmatpush1.bf16.msra.mxu0 0
  %4879 = vmatprep.subr.bf16.mxu0 0
  %4880 = vmatpush1.bf16.msra.mxu0 0
  %4881 = vmatprep.subr.bf16.mxu0 0
  %4882 = vmatpush1.bf16.msra.mxu0 0
  %4883 = vmatprep.subr.bf16.mxu0 0
  %4884 = vmatpush1.bf16.msra.mxu0 0
  %4885 = vmatprep.subr.bf16.mxu0 0
  %4886 = vmatpush1.bf16.msra.mxu0 %v3389
  %4887 = vmatprep.subr.bf16.mxu0 0
  %4888 = vmatpush1.bf16.msra.mxu0 %v3388
  %4889 = vmatprep.subr.bf16.mxu0 0
  %4890 = vmatpush2.bf16.msra.mxu0 0
  %4891 = vmatprep.subr.bf16.mxu0 0
  %4892 = vmatpush2.bf16.msra.mxu0 0
  %4893 = vmatprep.subr.bf16.mxu0 0
  %4894 = vmatpush2.bf16.msra.mxu0 0
  %4895 = vmatprep.subr.bf16.mxu0 0
  %4896 = vmatpush2.bf16.msra.mxu0 0
  %4897 = vmatprep.subr.bf16.mxu0 0
  %4898 = vmatpush2.bf16.msra.mxu0 0
  %4899 = vmatprep.subr.bf16.mxu0 0
  %4900 = vmatpush2.bf16.msra.mxu0 0
  %4901 = vmatprep.subr.bf16.mxu0 0
  %4902 = vmatpush2.bf16.msra.mxu0 0
  %4903 = vmatprep.subr.bf16.mxu0 0
  %4904 = vmatpush2.bf16.msra.mxu0 0
  %4905 = vmatprep.mubr.bf16.mxu0 0
  %4906 = vmatmul.mubr.bf16.gmra.mxu0 %v4797
  %v4907 = vpop.f32.mrf.mxu0
  %v4908 = vadd.f32 %v4843, %v4907
  %v4909 = vpop.f32.mrf.mxu0
  %v4910 = vpop.f32.mrf.mxu0
  %v4911 = vadd.f32 %v4846, %v4910
  %v4912 = vpop.f32.mrf.mxu0
  %4913 = vmatprep.mubr.bf16.mxu0 0
  %4914 = vmatmul.mubr.bf16.gmra.mxu0 %v4800
  %v4915 = vpop.f32.mrf.mxu0
  %v4916 = vadd.f32 %v4851, %v4915
  %v4917 = vpop.f32.mrf.mxu0
  %v4918 = vpop.f32.mrf.mxu0
  %v4919 = vadd.f32 %v4854, %v4918
  %v4920 = vpop.f32.mrf.mxu0
  %4921 = vmatprep.mubr.bf16.mxu0 0
  %4922 = vmatmul.mubr.bf16.gmra.mxu0 %v4803
  %v4923 = vpop.f32.mrf.mxu0
  %v4924 = vadd.f32 %v4859, %v4923
  %v4925 = vpop.f32.mrf.mxu0
  %v4926 = vpop.f32.mrf.mxu0
  %v4927 = vadd.f32 %v4862, %v4926
  %v4928 = vpop.f32.mrf.mxu0
  %4929 = vmatprep.mubr.bf16.mxu0 0
  %4930 = vmatmul.mubr.bf16.gmra.mxu0 %v4806
  %v4931 = vpop.f32.mrf.mxu0
  %v4932 = vadd.f32 %v4867, %v4931
  %v4933 = vpop.f32.mrf.mxu0
  %v4934 = vpop.f32.mrf.mxu0
  %v4935 = vadd.f32 %v4870, %v4934
  %v4936 = vpop.f32.mrf.mxu0
  %4937 = vdwg.mxu0
  %vm4938 = vcmp.ge.f32.partialorder %v4908, 0.0
  %vm4939 = vcmp.ge.f32.partialorder %v4911, 0.0
  %vm4940 = vcmp.ge.f32.partialorder %v4916, 0.0
  %vm4941 = vcmp.ge.f32.partialorder %v4919, 0.0
  %vm4942 = vcmp.ge.f32.partialorder %v4924, 0.0
  %vm4943 = vcmp.ge.f32.partialorder %v4927, 0.0
  %vm4944 = vcmp.ge.f32.partialorder %v4932, 0.0
  %vm4945 = vcmp.ge.f32.partialorder %v4935, 0.0
  %v4946 = vmul.f32 %v4908, 0.01
  %v4947 = vmul.f32 %v4911, 0.01
  %v4948 = vmul.f32 %v4916, 0.01
  %v4949 = vmul.f32 %v4919, 0.01
  %v4950 = vmul.f32 %v4924, 0.01
  %v4951 = vmul.f32 %v4927, 0.01
  %v4952 = vmul.f32 %v4932, 0.01
  %v4953 = vmul.f32 %v4935, 0.01
  %v4954 = vsel %vm4938, %v4908, %v4946
  %v4955 = vsel %vm4939, %v4911, %v4947
  %v4956 = vsel %vm4940, %v4916, %v4948
  %v4957 = vsel %vm4941, %v4919, %v4949
  %v4958 = vsel %vm4942, %v4924, %v4950
  %v4959 = vsel %vm4943, %v4927, %v4951
  %v4960 = vsel %vm4944, %v4932, %v4952
  %v4961 = vsel %vm4945, %v4935, %v4953
  %s4962 = scalar_lea.vmem %s7, 12
  %v4963 = vld [vmem:[%s4962] sm:$0x1]
  %v4964 = vld [vmem:[%s4962 + $0x1] sm:$0x1]
  %v4965 = vld [vmem:[%s4962 + $0x2] sm:$0x1]
  %v4966 = vld [vmem:[%s4962 + $0x3] sm:$0x1]
  %v4971 = vlaneseq
  %v4972 = vshrl.u32 %v4971, 7
  %v4973 = vsub.s32 0, %v4972
  %v4974 = vrot.slane %v4963, %v4973
  %v4975 = vlaneseq
  %v4976 = vshrl.u32 %v4975, 7
  %v4977 = vsub.s32 0, %v4976
  %v4978 = vrot.slane %v4964, %v4977
  %v4979 = vlaneseq
  %v4980 = vshrl.u32 %v4979, 7
  %v4981 = vsub.s32 0, %v4980
  %v4982 = vrot.slane %v4965, %v4981
  %v4983 = vlaneseq
  %v4984 = vshrl.u32 %v4983, 7
  %v4985 = vsub.s32 0, %v4984
  %v4986 = vrot.slane %v4966, %v4985
  %v4991 = vmul.f32 %v4954, %v4974
  %v4992 = vmul.f32 %v4955, %v4974
  %v4993 = vmul.f32 %v4956, %v4978
  %v4994 = vmul.f32 %v4957, %v4978
  %v4995 = vmul.f32 %v4958, %v4982
  %v4996 = vmul.f32 %v4959, %v4982
  %v4997 = vmul.f32 %v4960, %v4986
  %v4998 = vmul.f32 %v4961, %v4986
  %v4999 = vsel %vm3204, %v4991, 0.0
  %5000 = vadd.xlane.f32.xlu0 %v4999
  %v5001 = vpop.xlane.xlu0 %5000
  %v5002 = vsel %vm3204, %v4992, 0.0
  %5003 = vadd.xlane.f32.xlu0 %v5002
  %v5004 = vpop.xlane.xlu0 %5003
  %v5005 = vsel %vm3204, %v4993, 0.0
  %5006 = vadd.xlane.f32.xlu0 %v5005
  %v5007 = vpop.xlane.xlu0 %5006
  %v5008 = vsel %vm3204, %v4994, 0.0
  %5009 = vadd.xlane.f32.xlu0 %v5008
  %v5010 = vpop.xlane.xlu0 %5009
  %v5011 = vsel %vm3204, %v4995, 0.0
  %5012 = vadd.xlane.f32.xlu0 %v5011
  %v5013 = vpop.xlane.xlu0 %5012
  %v5014 = vsel %vm3204, %v4996, 0.0
  %5015 = vadd.xlane.f32.xlu0 %v5014
  %v5016 = vpop.xlane.xlu0 %5015
  %v5017 = vsel %vm3204, %v4997, 0.0
  %5018 = vadd.xlane.f32.xlu0 %v5017
  %v5019 = vpop.xlane.xlu0 %5018
  %v5020 = vsel %vm3204, %v4998, 0.0
  %5021 = vadd.xlane.f32.xlu0 %v5020
  %v5022 = vpop.xlane.xlu0 %5021
  %v5023 = vadd.f32 %v5001, %v5007
  %v5024 = vadd.f32 %v5023, %v5013
  %v5025 = vadd.f32 %v5024, %v5019
  %v5026 = vadd.f32 %v5004, %v5010
  %v5027 = vadd.f32 %v5026, %v5016
  %v5028 = vadd.f32 %v5027, %v5022
  %v5029 = vadd.f32 %v4566, %v5025
  %v5030 = vadd.f32 %v4567, %v5028
  %v5031 = vld [vmem:[#allocation4] sm:$0x1]
  %v5033 = vlaneseq
  %v5034 = vshrl.u32 %v5033, 7
  %v5035 = vsub.s32 0, %v5034
  %v5036 = vrot.slane %v5031, %v5035
  %v5038 = vadd.f32 %v5029, %v5036
  %v5039 = vadd.f32 %v5030, %v5036
  %vm5040 = vcmask 7168
  %5041 = vst.msk [vmem:[%s9] sm:$0xff] %vm5040, %v5038
  %5042 = vst.msk [vmem:[%s9 + $0x8] sm:$0xff] %vm5040, %v5039
  // Predicated region
  $region52: #{simple_discriminator_forward.1} parent=0 // pred_check
    _
  $region53: #{simple_discriminator_forward.1} parent=0 // pred_check_branch
    %5044 = sbr.rel (0) target = $region55
  $region54: #{simple_discriminator_forward.1} parent=0 // pred_region
    _
  $region55: #{simple_discriminator_forward.1} parent=0 // pred_fallthru
    _
  // Predicated region
  $region56: #{simple_discriminator_forward.1} parent=0 // pred_check
    _
  $region57: #{simple_discriminator_forward.1} parent=0 // pred_check_branch
    %5046 = sbr.rel (0) target = $region59
  $region58: #{simple_discriminator_forward.1} parent=0 // pred_region
    _
  $region59: #{simple_discriminator_forward.1} parent=0 // pred_fallthru
    _

</llo_original>
